<compile_context>
chip_gen: v7x
topology: tpu7x:2x2x1
jax: 0.10.0
libtpu: 0.0.40
codegen_flags: <defaults>
</compile_context>

<pallas_src>
import functools

import jax
import jax.numpy as jnp
from jax.experimental import pallas as pl
from jax.experimental.pallas import tpu as pltpu

# Match MXU f32 precision between the Pallas kernels and the lax.conv reference.
jax.config.update("jax_default_matmul_precision", "highest")


# ----------------------------------------------------------------------------
# In-kernel helpers
# ----------------------------------------------------------------------------
def _relu(x):
    return jnp.maximum(x, 0.0)


def _im2col_3x3(rows_hwc, W, TH):
    """rows_hwc: (TH+2, W, C) feature rows incl. top/bottom halo rows.

    Returns im2col patches (TH*W, 9*C) whose column order matches an HWIO
    (3, 3, C, Cout) weight reshaped to (9*C, Cout).
    """
    C = rows_hwc.shape[-1]
    zcol = jnp.zeros((TH + 2, 1, C), rows_hwc.dtype)
    left = jnp.concatenate([zcol, rows_hwc[:, :W - 1, :]], axis=1)   # x-1 tap
    right = jnp.concatenate([rows_hwc[:, 1:, :], zcol], axis=1)      # x+1 tap
    taps = (left, rows_hwc, right)                                   # j = 0,1,2
    cols = [taps[j][i:i + TH].reshape(TH * W, C)
            for i in range(3) for j in range(3)]
    return jnp.concatenate(cols, axis=-1)                            # (TH*W, 9C)


# ----------------------------------------------------------------------------
# Kernel bodies
# ----------------------------------------------------------------------------
def _init_kernel(xc_ref, xt_ref, xb_ref, w3_ref, b3_ref, w1_ref, b1_ref,
                 o_ref, *, TH, W):
    # Fused init: [relu(conv3x3(x)), relu(conv1x1(x))] -> 32 channels.
    r = pl.program_id(1)
    last = pl.num_programs(1) - 1
    f32 = jnp.float32

    xc = xc_ref[0]                                             # (TH*W, 3)
    # halo rows outside the image are zero (conv padding on the input itself)
    xt = xt_ref[0] * (r > 0).astype(f32)                       # (W, 3)
    xb = xb_ref[0] * (r < last).astype(f32)                    # (W, 3)
    rows = jnp.concatenate([xt, xc, xb], axis=0).reshape(TH + 2, W, -1)

    patches = _im2col_3x3(rows, W, TH)                         # (TH*W, 27)
    f3 = _relu(jnp.dot(patches, w3_ref[...],
                       preferred_element_type=f32) + b3_ref[...])   # (TH*W, 16)
    f1 = _relu(jnp.dot(xc, w1_ref[...],
                       preferred_element_type=f32) + b1_ref[...])   # (TH*W, 16)
    o_ref[0] = jnp.concatenate([f3, f1], axis=-1).astype(o_ref.dtype)


def _dense_block_kernel(xc_ref, xt_ref, xb_ref,
                        wc_ref, bc_ref, w3_ref, b3_ref, w1_ref, b1_ref,
                        wfx_ref, wf3_ref, wf1_ref, bf_ref,
                        o_ref, *, TH, W):
    # Whole DenseBlock fused: compress -> (3x3 a,b | 1x1 a,b) -> fuse 1x1.
    r = pl.program_id(1)
    last = pl.num_programs(1) - 1
    f32 = jnp.float32

    xc = xc_ref[0]                                             # (TH*W, Cin)
    wc = wc_ref[...]
    bc = bc_ref[...]

    # compression 1x1 + ReLU for the tile rows and the two halo rows
    comp_c = _relu(jnp.dot(xc, wc, preferred_element_type=f32) + bc)         # (TH*W, 64)
    comp_t = _relu(jnp.dot(xt_ref[0], wc, preferred_element_type=f32) + bc)  # (W, 64)
    comp_b = _relu(jnp.dot(xb_ref[0], wc, preferred_element_type=f32) + bc)  # (W, 64)
    # 'same' padding of the 3x3 applies to `comp`: it is zero outside the image
    comp_t = comp_t * (r > 0).astype(f32)
    comp_b = comp_b * (r < last).astype(f32)
    comp_rows = jnp.concatenate([comp_t, comp_c, comp_b],
                                axis=0).reshape(TH + 2, W, 64)

    # merged 3x3 branches (a,b) as ONE im2col matmul: (TH*W,576) @ (576,32)
    patches = _im2col_3x3(comp_rows, W, TH)
    o3 = _relu(jnp.dot(patches, w3_ref[...],
                       preferred_element_type=f32) + b3_ref[...])   # (TH*W, 32)
    # merged 1x1 branches (a,b)
    o1 = _relu(jnp.dot(comp_c, w1_ref[...],
                       preferred_element_type=f32) + b1_ref[...])   # (TH*W, 16)

    # fuse conv relu([x | o3 | o1] @ wf + bf) with wf split into row blocks:
    # no channel concat, no HBM round trip.
    acc = jnp.dot(xc, wfx_ref[...], preferred_element_type=f32)
    acc = acc + jnp.dot(o3, wf3_ref[...], preferred_element_type=f32)
    acc = acc + jnp.dot(o1, wf1_ref[...], preferred_element_type=f32)
    acc = acc + bf_ref[...]
    o_ref[0] = _relu(acc).astype(o_ref.dtype)


def _pointwise_kernel(x_ref, w_ref, b_ref, o_ref, *, apply_relu):
    acc = jnp.dot(x_ref[...], w_ref[...], preferred_element_type=jnp.float32)
    acc = acc + b_ref[...]
    if apply_relu:
        acc = jnp.maximum(acc, 0.0)
    o_ref[...] = acc.astype(o_ref.dtype)


# ----------------------------------------------------------------------------
# pallas_call wrappers
# ----------------------------------------------------------------------------
def _row_tile(H, W, target_pixels=512):
    """Rows per spatial tile: ~target_pixels pixels, dividing H."""
    th = max(1, min(H, max(1, target_pixels // W)))
    while H % th:
        th -= 1
    return th


def _bcast(shape):
    """Whole-array BlockSpec (weights/biases) for a 2-D grid."""
    zero = (0,) * len(shape)
    return pl.BlockSpec(shape, lambda n, r: zero)


def init_features(x_rows, p, H, W):
    """x_rows: (N, H*W, 3) -> (N, H*W, 32) = [relu(conv3x3), relu(conv1x1)]."""
    N, HW, Cin = x_rows.shape
    TH = _row_tile(H, W)
    R = H // TH
    w3 = p["w3"].reshape(9 * Cin, 16)
    kern = functools.partial(_init_kernel, TH=TH, W=W)
    return pl.pallas_call(
        kern,
        out_shape=jax.ShapeDtypeStruct((N, HW, 32), x_rows.dtype),
        grid_spec=pltpu.PrefetchScalarGridSpec(
            num_scalar_prefetch=0,
            grid=(N, R),
            in_specs=[
                pl.BlockSpec((1, TH * W, Cin), lambda n, r: (n, r, 0)),
                pl.BlockSpec((1, W, Cin),
                             lambda n, r: (n, jnp.maximum(r * TH - 1, 0), 0)),
                pl.BlockSpec((1, W, Cin),
                             lambda n, r: (n, jnp.minimum(r * TH + TH, H - 1), 0)),
                _bcast(w3.shape), _bcast(p["b3"].shape),
                _bcast(p["w1"].shape), _bcast(p["b1"].shape),
            ],
            out_specs=pl.BlockSpec((1, TH * W, 32), lambda n, r: (n, r, 0)),
        ),
        compiler_params=pltpu.CompilerParams(
            dimension_semantics=("parallel", "parallel")),
    )(x_rows, x_rows, x_rows, w3, p["b3"], p["w1"], p["b1"])


def dense_block_apply(feats, p, H, W):
    """feats: (N, H*W, Cin) -> new features (N, H*W, 16). Whole block fused."""
    N, HW, Cin = feats.shape
    TH = _row_tile(H, W)
    R = H // TH
    w3 = p["w3"].reshape(9 * 64, 32)                 # merged conv3x3_{a,b}
    wf = p["wf"]                                     # (Cin+48, 16)
    wf_x, wf_3, wf_1 = wf[:Cin], wf[Cin:Cin + 32], wf[Cin + 32:]
    kern = functools.partial(_dense_block_kernel, TH=TH, W=W)
    return pl.pallas_call(
        kern,
        out_shape=jax.ShapeDtypeStruct((N, HW, 16), feats.dtype),
        grid_spec=pltpu.PrefetchScalarGridSpec(
            num_scalar_prefetch=0,
            grid=(N, R),
            in_specs=[
                pl.BlockSpec((1, TH * W, Cin), lambda n, r: (n, r, 0)),
                pl.BlockSpec((1, W, Cin),
                             lambda n, r: (n, jnp.maximum(r * TH - 1, 0), 0)),
                pl.BlockSpec((1, W, Cin),
                             lambda n, r: (n, jnp.minimum(r * TH + TH, H - 1), 0)),
                _bcast(p["wc"].shape), _bcast(p["bc"].shape),
                _bcast(w3.shape), _bcast(p["b3"].shape),
                _bcast(p["w1"].shape), _bcast(p["b1"].shape),
                _bcast(wf_x.shape), _bcast(wf_3.shape), _bcast(wf_1.shape),
                _bcast(p["bf"].shape),
            ],
            out_specs=pl.BlockSpec((1, TH * W, 16), lambda n, r: (n, r, 0)),
        ),
        compiler_params=pltpu.CompilerParams(
            dimension_semantics=("parallel", "parallel")),
    )(feats, feats, feats,
      p["wc"], p["bc"], w3, p["b3"], p["w1"], p["b1"],
      wf_x, wf_3, wf_1, p["bf"])


def conv1x1(x2d, w, b, *, apply_relu, tm=512):
    M, Cin = x2d.shape
    Cout = w.shape[1]
    tm = min(tm, M)
    kern = functools.partial(_pointwise_kernel, apply_relu=apply_relu)
    return pl.pallas_call(
        kern,
        out_shape=jax.ShapeDtypeStruct((M, Cout), x2d.dtype),
        grid_spec=pltpu.PrefetchScalarGridSpec(
            num_scalar_prefetch=0,
            grid=(pl.cdiv(M, tm),),
            in_specs=[
                pl.BlockSpec((tm, Cin), lambda i: (i, 0)),
                pl.BlockSpec((Cin, Cout), lambda i: (0, 0)),
                pl.BlockSpec((1, Cout), lambda i: (0, 0)),
            ],
            out_specs=pl.BlockSpec((tm, Cout), lambda i: (i, 0)),
        ),
        compiler_params=pltpu.CompilerParams(
            dimension_semantics=("parallel",)),
    )(x2d, w, b)


# ----------------------------------------------------------------------------
# HSCNN_D_NIR forward (NCHW in / NCHW out, like the PyTorch module)
# ----------------------------------------------------------------------------
def hscnn_forward(x_nchw, params):
    N, Cin, H, W = x_nchw.shape
    assert Cin == 3 and W % 8 == 0, "expects RGB input with W a multiple of 8"
    x_rows = jnp.transpose(x_nchw, (0, 2, 3, 1)).reshape(N, H * W, Cin)

    feats = init_features(x_rows, params["init"], H, W)          # (N, H*W, 32)
    for bp in params["blocks"]:
        new = dense_block_apply(feats, bp, H, W)                 # (N, H*W, 16)
        feats = jnp.concatenate([feats, new], axis=-1)           # dense connectivity

    Cf = feats.shape[-1]
    out2d = conv1x1(feats.reshape(N * H * W, Cf),
                    params["final"]["w"], params["final"]["b"],
                    apply_relu=False)                            # (M, num_out)
    out = out2d.reshape(N, H, W, -1)
    return jnp.transpose(out, (0, 3, 1, 2))                      # NCHW


# ----------------------------------------------------------------------------
# Deterministic synthetic parameters (shapes from HSCNN_D_NIR.__init__)
# ----------------------------------------------------------------------------
def init_model_params(key, num_blocks=6, num_out_channels=1):
    n_keys = 4 + 8 * num_blocks + 2
    keys = iter(jax.random.split(key, n_keys))

    def w_(shape, fan_in):
        return (jax.random.normal(next(keys), shape, jnp.float32)
                / jnp.sqrt(float(fan_in)))

    def b_(cout):
        return 0.1 * jax.random.normal(next(keys), (1, cout), jnp.float32)

    params = {
        "init": {
            "w3": w_((3, 3, 3, 16), 27), "b3": b_(16),
            "w1": w_((3, 16), 3), "b1": b_(16),
        },
        "blocks": [],
    }
    cin = 32
    for _ in range(num_blocks):
        params["blocks"].append({
            "wc": w_((cin, 64), cin), "bc": b_(64),
            "w3": w_((3, 3, 64, 32), 9 * 64), "b3": b_(32),   # conv3x3 a|b merged
            "w1": w_((64, 16), 64), "b1": b_(16),             # conv1x1 a|b merged
            "wf": w_((cin + 48, 16), cin + 48), "bf": b_(16), # fuse conv
        })
        cin += 16
    params["final"] = {"w": w_((cin, num_out_channels), cin),
                       "b": b_(num_out_channels)}
    return params


# ----------------------------------------------------------------------------
# Pure-JAX reference (for correctness check)
# ----------------------------------------------------------------------------
def ref_forward(x_nchw, params):
    x = jnp.transpose(x_nchw, (0, 2, 3, 1))                      # NHWC
    relu = jax.nn.relu

    def conv(xx, w_hwio, b, padding):
        y = jax.lax.conv_general_dilated(
            xx, w_hwio, (1, 1), padding,
            dimension_numbers=("NHWC", "HWIO", "NHWC"))
        return y + b.reshape(1, 1, 1, -1)

    pi = params["init"]
    f3 = relu(conv(x, pi["w3"], pi["b3"], "SAME"))
    f1 = relu(conv(x, pi["w1"][None, None], pi["b1"], "VALID"))
    feats = jnp.concatenate([f3, f1], axis=-1)

    for bp in params["blocks"]:
        comp = relu(conv(feats, bp["wc"][None, None], bp["bc"], "VALID"))
        o3 = relu(conv(comp, bp["w3"], bp["b3"], "SAME"))
        o1 = relu(conv(comp, bp["w1"][None, None], bp["b1"], "VALID"))
        cat = jnp.concatenate([feats, o3, o1], axis=-1)
        new = relu(conv(cat, bp["wf"][None, None], bp["bf"], "VALID"))
        feats = jnp.concatenate([feats, new], axis=-1)

    pf = params["final"]
    out = conv(feats, pf["w"][None, None], pf["b"], "VALID")     # no ReLU
    return jnp.transpose(out, (0, 3, 1, 2))


if __name__ == "__main__":
    key = jax.random.PRNGKey(0)
    k_x, k_p = jax.random.split(key)
    N, H, W = 2, 16, 16
    num_blocks = 6   # module default is 38; kept small for a fast self-test
    x = jax.random.normal(k_x, (N, 3, H, W), jnp.float32)        # NCHW RGB
    params = init_model_params(k_p, num_blocks=num_blocks, num_out_channels=1)

    out = jax.block_until_ready(hscnn_forward(x, params))
    ref = jax.block_until_ready(ref_forward(x, params))

    assert out.shape == (N, 1, H, W), out.shape
    err = float(jnp.max(jnp.abs(out - ref)))
    assert jnp.allclose(out, ref, rtol=2e-2, atol=2e-2), f"mismatch, max err {err}"
    print("KERNEL_OK")
</pallas_src>

<mosaic_0001>
module attributes {stable_mosaic.version = 11 : i64} {
  func.func @_init_kernel(%arg0: i32, %arg1: i32, %arg2: memref<1x256x3xf32, #tpu.memory_space<vmem>>, %arg3: memref<1x16x3xf32, #tpu.memory_space<vmem>>, %arg4: memref<1x16x3xf32, #tpu.memory_space<vmem>>, %arg5: memref<27x16xf32, #tpu.memory_space<vmem>>, %arg6: memref<1x16xf32, #tpu.memory_space<vmem>>, %arg7: memref<3x16xf32, #tpu.memory_space<vmem>>, %arg8: memref<1x16xf32, #tpu.memory_space<vmem>>, %arg9: memref<1x256x32xf32, #tpu.memory_space<vmem>>) attributes {dimension_semantics = [#tpu.dimension_semantics<parallel>, #tpu.dimension_semantics<parallel>], iteration_bounds = array<i64: 2, 1>, scalar_prefetch = 0 : i64, scratch_operands = 0 : i64, tpu.core_type = #tpu.core_type<tc>, window_params = [{transform_indices = @transform_0, window_bounds = array<i64: 1, 256, 3>}, {transform_indices = @transform_1, window_bounds = array<i64: 1, 16, 3>}, {transform_indices = @transform_2, window_bounds = array<i64: 1, 16, 3>}, {pipeline_mode = #tpu.pipeline_mode<synchronous>, transform_indices = @transform_3, window_bounds = array<i64: 27, 16>}, {pipeline_mode = #tpu.pipeline_mode<synchronous>, transform_indices = @transform_4, window_bounds = array<i64: 1, 16>}, {pipeline_mode = #tpu.pipeline_mode<synchronous>, transform_indices = @transform_5, window_bounds = array<i64: 3, 16>}, {pipeline_mode = #tpu.pipeline_mode<synchronous>, transform_indices = @transform_6, window_bounds = array<i64: 1, 16>}, {transform_indices = @transform_7, window_bounds = array<i64: 1, 256, 32>}]} {
    %c0 = arith.constant 0 : index
    %c0_0 = arith.constant 0 : index
    %c0_1 = arith.constant 0 : index
    %0 = vector.load %arg2[%c0, %c0_0, %c0_1] : memref<1x256x3xf32, #tpu.memory_space<vmem>>, vector<1x256x3xf32>
    %1 = vector.shape_cast %0 : vector<1x256x3xf32> to vector<256x3xf32>
    %c0_2 = arith.constant 0 : index
    %c0_3 = arith.constant 0 : index
    %c0_4 = arith.constant 0 : index
    %2 = vector.load %arg3[%c0_2, %c0_3, %c0_4] : memref<1x16x3xf32, #tpu.memory_space<vmem>>, vector<1x16x3xf32>
    %3 = vector.shape_cast %2 : vector<1x16x3xf32> to vector<16x3xf32>
    %c0_i32 = arith.constant 0 : i32
    %4 = arith.cmpi sgt, %arg1, %c0_i32 : i32
    %5 = arith.extui %4 : i1 to i32
    %6 = arith.sitofp %5 : i32 to f32
    %7 = vector.broadcast %6 : f32 to vector<16x3xf32>
    %8 = arith.mulf %3, %7 : vector<16x3xf32>
    %c0_5 = arith.constant 0 : index
    %c0_6 = arith.constant 0 : index
    %c0_7 = arith.constant 0 : index
    %9 = vector.load %arg4[%c0_5, %c0_6, %c0_7] : memref<1x16x3xf32, #tpu.memory_space<vmem>>, vector<1x16x3xf32>
    %10 = vector.shape_cast %9 : vector<1x16x3xf32> to vector<16x3xf32>
    %c0_i32_8 = arith.constant 0 : i32
    %11 = arith.cmpi slt, %arg1, %c0_i32_8 : i32
    %12 = arith.extui %11 : i1 to i32
    %13 = arith.sitofp %12 : i32 to f32
    %14 = vector.broadcast %13 : f32 to vector<16x3xf32>
    %15 = arith.mulf %10, %14 : vector<16x3xf32>
    %16 = tpu.concatenate %8, %1, %15 in 0 : vector<16x3xf32>, vector<256x3xf32>, vector<16x3xf32> -> vector<288x3xf32>
    %17 = vector.shape_cast %16 : vector<288x3xf32> to vector<18x16x3xf32>
    %cst = arith.constant 0.000000e+00 : f32
    %18 = vector.broadcast %cst : f32 to vector<18x1x3xf32>
    %19 = vector.extract_strided_slice %17 {offsets = [0, 0, 0], sizes = [18, 15, 3], strides = [1, 1, 1]} : vector<18x16x3xf32> to vector<18x15x3xf32>
    %20 = tpu.concatenate %18, %19 in 1 : vector<18x1x3xf32>, vector<18x15x3xf32> -> vector<18x16x3xf32>
    %21 = vector.extract_strided_slice %17 {offsets = [0, 1, 0], sizes = [18, 15, 3], strides = [1, 1, 1]} : vector<18x16x3xf32> to vector<18x15x3xf32>
    %22 = tpu.concatenate %21, %18 in 1 : vector<18x15x3xf32>, vector<18x1x3xf32> -> vector<18x16x3xf32>
    %23 = vector.extract_strided_slice %20 {offsets = [0, 0, 0], sizes = [16, 16, 3], strides = [1, 1, 1]} : vector<18x16x3xf32> to vector<16x16x3xf32>
    %24 = vector.shape_cast %23 : vector<16x16x3xf32> to vector<256x3xf32>
    %25 = vector.extract_strided_slice %17 {offsets = [0, 0, 0], sizes = [16, 16, 3], strides = [1, 1, 1]} : vector<18x16x3xf32> to vector<16x16x3xf32>
    %26 = vector.shape_cast %25 : vector<16x16x3xf32> to vector<256x3xf32>
    %27 = vector.extract_strided_slice %22 {offsets = [0, 0, 0], sizes = [16, 16, 3], strides = [1, 1, 1]} : vector<18x16x3xf32> to vector<16x16x3xf32>
    %28 = vector.shape_cast %27 : vector<16x16x3xf32> to vector<256x3xf32>
    %29 = vector.extract_strided_slice %20 {offsets = [1, 0, 0], sizes = [16, 16, 3], strides = [1, 1, 1]} : vector<18x16x3xf32> to vector<16x16x3xf32>
    %30 = vector.shape_cast %29 : vector<16x16x3xf32> to vector<256x3xf32>
    %31 = vector.extract_strided_slice %17 {offsets = [1, 0, 0], sizes = [16, 16, 3], strides = [1, 1, 1]} : vector<18x16x3xf32> to vector<16x16x3xf32>
    %32 = vector.shape_cast %31 : vector<16x16x3xf32> to vector<256x3xf32>
    %33 = vector.extract_strided_slice %22 {offsets = [1, 0, 0], sizes = [16, 16, 3], strides = [1, 1, 1]} : vector<18x16x3xf32> to vector<16x16x3xf32>
    %34 = vector.shape_cast %33 : vector<16x16x3xf32> to vector<256x3xf32>
    %35 = vector.extract_strided_slice %20 {offsets = [2, 0, 0], sizes = [16, 16, 3], strides = [1, 1, 1]} : vector<18x16x3xf32> to vector<16x16x3xf32>
    %36 = vector.shape_cast %35 : vector<16x16x3xf32> to vector<256x3xf32>
    %37 = vector.extract_strided_slice %17 {offsets = [2, 0, 0], sizes = [16, 16, 3], strides = [1, 1, 1]} : vector<18x16x3xf32> to vector<16x16x3xf32>
    %38 = vector.shape_cast %37 : vector<16x16x3xf32> to vector<256x3xf32>
    %39 = vector.extract_strided_slice %22 {offsets = [2, 0, 0], sizes = [16, 16, 3], strides = [1, 1, 1]} : vector<18x16x3xf32> to vector<16x16x3xf32>
    %40 = vector.shape_cast %39 : vector<16x16x3xf32> to vector<256x3xf32>
    %41 = tpu.concatenate %24, %26, %28, %30, %32, %34, %36, %38, %40 in 1 : vector<256x3xf32>, vector<256x3xf32>, vector<256x3xf32>, vector<256x3xf32>, vector<256x3xf32>, vector<256x3xf32>, vector<256x3xf32>, vector<256x3xf32>, vector<256x3xf32> -> vector<256x27xf32>
    %c0_9 = arith.constant 0 : index
    %c0_10 = arith.constant 0 : index
    %42 = vector.load %arg5[%c0_9, %c0_10] : memref<27x16xf32, #tpu.memory_space<vmem>>, vector<27x16xf32>
    %cst_11 = arith.constant dense<0.000000e+00> : vector<256x16xf32>
    %43 = tpu.matmul %41, %42, %cst_11 {dimension_numbers = #tpu.dot_dimension_numbers<[1], [0], [0], [1], [0, 0, 1, 1], [], []>, precision = #tpu.contract_precision<fp32>} : vector<256x27xf32>, vector<27x16xf32>, vector<256x16xf32> -> vector<256x16xf32>
    %c0_12 = arith.constant 0 : index
    %c0_13 = arith.constant 0 : index
    %44 = vector.load %arg6[%c0_12, %c0_13] : memref<1x16xf32, #tpu.memory_space<vmem>>, vector<1x16xf32>
    %45 = vector.broadcast %44 : vector<1x16xf32> to vector<256x16xf32>
    %46 = arith.addf %43, %45 : vector<256x16xf32>
    %cst_14 = arith.constant 0.000000e+00 : f32
    %47 = vector.broadcast %cst_14 : f32 to vector<256x16xf32>
    %48 = arith.maximumf %46, %47 : vector<256x16xf32>
    %c0_15 = arith.constant 0 : index
    %c0_16 = arith.constant 0 : index
    %49 = vector.load %arg7[%c0_15, %c0_16] : memref<3x16xf32, #tpu.memory_space<vmem>>, vector<3x16xf32>
    %cst_17 = arith.constant dense<0.000000e+00> : vector<256x16xf32>
    %50 = tpu.matmul %1, %49, %cst_17 {dimension_numbers = #tpu.dot_dimension_numbers<[1], [0], [0], [1], [0, 0, 1, 1], [], []>, precision = #tpu.contract_precision<fp32>} : vector<256x3xf32>, vector<3x16xf32>, vector<256x16xf32> -> vector<256x16xf32>
    %c0_18 = arith.constant 0 : index
    %c0_19 = arith.constant 0 : index
    %51 = vector.load %arg8[%c0_18, %c0_19] : memref<1x16xf32, #tpu.memory_space<vmem>>, vector<1x16xf32>
    %52 = vector.broadcast %51 : vector<1x16xf32> to vector<256x16xf32>
    %53 = arith.addf %50, %52 : vector<256x16xf32>
    %cst_20 = arith.constant 0.000000e+00 : f32
    %54 = vector.broadcast %cst_20 : f32 to vector<256x16xf32>
    %55 = arith.maximumf %53, %54 : vector<256x16xf32>
    %56 = tpu.concatenate %48, %55 in 1 : vector<256x16xf32>, vector<256x16xf32> -> vector<256x32xf32>
    %c0_21 = arith.constant 0 : index
    %c0_22 = arith.constant 0 : index
    %c0_23 = arith.constant 0 : index
    %57 = vector.load %arg9[%c0_21, %c0_22, %c0_23] : memref<1x256x32xf32, #tpu.memory_space<vmem>>, vector<1x256x32xf32>
    %58 = vector.shape_cast %57 : vector<1x256x32xf32> to vector<256x32xf32>
    %59 = vector.shape_cast %56 : vector<256x32xf32> to vector<1x256x32xf32>
    tpu.vector_store %arg9[%c0_21, %c0_22, %c0_23], %59 {strides = array<i32>} : memref<1x256x32xf32, #tpu.memory_space<vmem>>, vector<1x256x32xf32>,
    return
  }
  func.func @transform_0(%arg0: i32, %arg1: i32) -> (i32, i32, i32) {
    %c0_i32 = arith.constant 0 : i32
    %c0_i32_0 = arith.constant 0 : i32
    return %arg0, %arg1, %c0_i32 : i32, i32, i32
  }
  func.func @transform_1(%arg0: i32, %arg1: i32) -> (i32, i32, i32) {
    %c16_i32 = arith.constant 16 : i32
    %0 = arith.muli %arg1, %c16_i32 : i32
    %c1_i32 = arith.constant 1 : i32
    %1 = arith.subi %0, %c1_i32 : i32
    %c0_i32 = arith.constant 0 : i32
    %2 = arith.maxsi %1, %c0_i32 : i32
    %c0_i32_0 = arith.constant 0 : i32
    %c0_i32_1 = arith.constant 0 : i32
    return %arg0, %2, %c0_i32_0 : i32, i32, i32
  }
  func.func @transform_2(%arg0: i32, %arg1: i32) -> (i32, i32, i32) {
    %c16_i32 = arith.constant 16 : i32
    %0 = arith.muli %arg1, %c16_i32 : i32
    %c16_i32_0 = arith.constant 16 : i32
    %1 = arith.addi %0, %c16_i32_0 : i32
    %c15_i32 = arith.constant 15 : i32
    %2 = arith.minsi %1, %c15_i32 : i32
    %c0_i32 = arith.constant 0 : i32
    %c0_i32_1 = arith.constant 0 : i32
    return %arg0, %2, %c0_i32 : i32, i32, i32
  }
  func.func @transform_3(%arg0: i32, %arg1: i32) -> (i32, i32) {
    %c0_i32 = arith.constant 0 : i32
    %c0_i32_0 = arith.constant 0 : i32
    %c0_i32_1 = arith.constant 0 : i32
    return %c0_i32, %c0_i32_0 : i32, i32
  }
  func.func @transform_4(%arg0: i32, %arg1: i32) -> (i32, i32) {
    %c0_i32 = arith.constant 0 : i32
    %c0_i32_0 = arith.constant 0 : i32
    %c0_i32_1 = arith.constant 0 : i32
    return %c0_i32, %c0_i32_0 : i32, i32
  }
  func.func @transform_5(%arg0: i32, %arg1: i32) -> (i32, i32) {
    %c0_i32 = arith.constant 0 : i32
    %c0_i32_0 = arith.constant 0 : i32
    %c0_i32_1 = arith.constant 0 : i32
    return %c0_i32, %c0_i32_0 : i32, i32
  }
  func.func @transform_6(%arg0: i32, %arg1: i32) -> (i32, i32) {
    %c0_i32 = arith.constant 0 : i32
    %c0_i32_0 = arith.constant 0 : i32
    %c0_i32_1 = arith.constant 0 : i32
    return %c0_i32, %c0_i32_0 : i32, i32
  }
  func.func @transform_7(%arg0: i32, %arg1: i32) -> (i32, i32, i32) {
    %c0_i32 = arith.constant 0 : i32
    %c0_i32_0 = arith.constant 0 : i32
    return %arg0, %arg1, %c0_i32 : i32, i32, i32
  }
}

</mosaic_0001>

<llo_original>
// kernel: tpu_custom_call.1
$region0: #{tpu_custom_call.1}
  #allocation0 [shape = 'u32[]', space=smem, size = 0x4, offset = 0x4, fixed_abs, tag = 'smem constant byte address 0x4 - core index']
  #allocation1 [shape = 'u32[144,128]{1,0:T(1,128)}', space=vmem, size = 0x12000, scoped, tag = 'internal scratch']
  %s0 = inlined_call_operand.vmem [shape: f32[2,256,3], index: 0, kind: input, shape index: {}]
  %s1 = inlined_call_operand.vmem [shape: f32[2,256,3], index: 1, kind: input, shape index: {}]
  %s2 = inlined_call_operand.vmem [shape: f32[2,256,3], index: 2, kind: input, shape index: {}]
  %s3 = inlined_call_operand.vmem [shape: f32[27,16], index: 3, kind: input, shape index: {}]
  %s4 = inlined_call_operand.vmem [shape: f32[1,16], index: 4, kind: input, shape index: {}]
  %s5 = inlined_call_operand.vmem [shape: f32[3,16], index: 5, kind: input, shape index: {}]
  %s6 = inlined_call_operand.vmem [shape: f32[1,16], index: 6, kind: input, shape index: {}]
  %s7 = inlined_call_operand.vmem [shape: f32[2,256,32], index: 7, kind: output, shape index: {}]
  %s8 = sld [smem:[#allocation0]]
  $region61: #{tpu_custom_call.1} parent=0
    _
  %s10 = ssub.s32 1, %s8
  %s11 = scalar_select 0, %s10, %s8
  loop: start=0, step=1, limit=4
  $region2: #{tpu_custom_call.1} parent=0 // loop_pre_header
    _
  $region3: #{tpu_custom_call.1} parent=0 // loop_header
    %s13 = sphi 0, %s17
    %p14 = scmp.ge.s32.totalorder %s13, 4
    %s20 = sphi 0, %s32
    %s21 = sphi 0, %s28
    %s22 = sphi 0, %s20
    %s23 = sphi 0, %s21
    %s24 = sphi 0, %s22
    %s25 = sphi 0, %s23
    %s37 = sphi 0, %s39
    %s40 = sphi 0, %s37
    %s41 = sphi 0, %s40
    %s57 = sphi 0, %s41
    %s73 = sphi 0, %s75
    %s76 = sphi 0, %s73
    %s77 = sphi 0, %s76
    %s93 = sphi 0, %s77
    %s109 = sphi 0, %s111
    %s112 = sphi 0, %s109
    %s113 = sphi 0, %s112
    %s129 = sphi 0, %s113
    %s133 = sphi 0, %s133
    %s135 = sphi 0, %s133
    %s136 = sphi 0, %s135
    %s150 = sphi 0, %s136
    %s154 = sphi 0, %s154
    %s156 = sphi 0, %s154
    %s157 = sphi 0, %s156
    %s171 = sphi 0, %s157
    %s175 = sphi 0, %s175
    %s177 = sphi 0, %s175
    %s178 = sphi 0, %s177
    %s192 = sphi 0, %s178
    %s196 = sphi 0, %s196
    %s198 = sphi 0, %s196
    %s199 = sphi 0, %s198
    %s213 = sphi 0, %s199
    %s221 = sphi 0, %s223
    %s224 = sphi 0, %s221
    %s225 = sphi 0, %s224
    %s241 = sphi 0, %s225
  $region4: #{tpu_custom_call.1} parent=0 // loop_header_branch
    %16 = sbr.rel (%p14) target = $region8
  $region5: #{tpu_custom_call.1} parent=0 // loop_body
    %s18 = ssub.s32 %s13, 1
    %s19 = ssub.s32 %s13, 2
    %s26 = sadd.s32 1, %s21
    %p27 = scmp.ge.s32.totalorder %s26, 1
    %s28 = scalar_select %p27, 0, %s26
    %s29 = sadd.s32 1, %s20
    %s30 = scalar_select %p27, %s29, %s20
    %p31 = scmp.ge.s32.totalorder %s30, 2
    %s32 = scalar_select %p31, 0, %s30
    %s33 = ssub.s32 %s20, %s32
    %s34 = ssub.s32 %s21, %s28
    %s35 = sor.u32 %s33, %s34
    %p36 = scmp.eq.s32.totalorder %s35, 0
    %s38 = sadd.s32 %s37, 1
    %s39 = scalar_select %p36, %s37, %s38
    %p42 = pneg %p36
    %p43 = scmp.eq.s32.totalorder %s13, 1
    %p44 = por %p42, %p43
    %p45 = scmp.ne.s32.totalorder %s37, %s40
    %p46 = scmp.eq.s32.totalorder %s13, 0
    %p47 = por %p45, %p46
    %p48 = scmp.ne.s32.totalorder %s37, %s40
    %p49 = scmp.eq.s32.totalorder %s18, 1
    %p50 = por %p48, %p49
    %p51 = scmp.ne.s32.totalorder %s40, %s41
    %p52 = scmp.eq.s32.totalorder %s18, 0
    %p53 = por %p51, %p52
    %p54 = scmp.ne.s32.totalorder %s40, %s41
    %p55 = scmp.eq.s32.totalorder %s19, 1
    %p56 = por %p54, %p55
    %p58 = scmp.ne.s32.totalorder %s41, %s57
    %p59 = scmp.eq.s32.totalorder %s19, 0
    %p60 = por %p58, %p59
    %s61 = smul.u32 %s21, 16
    %s62 = ssub.s32 %s61, 1
    %p63 = scmp.gt.s32.totalorder %s62, 0
    %s64 = scalar_select %p63, %s62, 0
    %s65 = smul.u32 %s28, 16
    %s66 = ssub.s32 %s65, 1
    %p67 = scmp.gt.s32.totalorder %s66, 0
    %s68 = scalar_select %p67, %s66, 0
    %s69 = ssub.s32 %s20, %s32
    %s70 = ssub.s32 %s64, %s68
    %s71 = sor.u32 %s69, %s70
    %p72 = scmp.eq.s32.totalorder %s71, 0
    %s74 = sadd.s32 %s73, 1
    %s75 = scalar_select %p72, %s73, %s74
    %p78 = pneg %p72
    %p79 = scmp.eq.s32.totalorder %s13, 1
    %p80 = por %p78, %p79
    %p81 = scmp.ne.s32.totalorder %s73, %s76
    %p82 = scmp.eq.s32.totalorder %s13, 0
    %p83 = por %p81, %p82
    %p84 = scmp.ne.s32.totalorder %s73, %s76
    %p85 = scmp.eq.s32.totalorder %s18, 1
    %p86 = por %p84, %p85
    %p87 = scmp.ne.s32.totalorder %s76, %s77
    %p88 = scmp.eq.s32.totalorder %s18, 0
    %p89 = por %p87, %p88
    %p90 = scmp.ne.s32.totalorder %s76, %s77
    %p91 = scmp.eq.s32.totalorder %s19, 1
    %p92 = por %p90, %p91
    %p94 = scmp.ne.s32.totalorder %s77, %s93
    %p95 = scmp.eq.s32.totalorder %s19, 0
    %p96 = por %p94, %p95
    %s97 = smul.u32 %s21, 16
    %s98 = sadd.s32 %s97, 16
    %p99 = scmp.lt.s32.totalorder %s98, 15
    %s100 = scalar_select %p99, %s98, 15
    %s101 = smul.u32 %s28, 16
    %s102 = sadd.s32 %s101, 16
    %p103 = scmp.lt.s32.totalorder %s102, 15
    %s104 = scalar_select %p103, %s102, 15
    %s105 = ssub.s32 %s20, %s32
    %s106 = ssub.s32 %s100, %s104
    %s107 = sor.u32 %s105, %s106
    %p108 = scmp.eq.s32.totalorder %s107, 0
    %s110 = sadd.s32 %s109, 1
    %s111 = scalar_select %p108, %s109, %s110
    %p114 = pneg %p108
    %p115 = scmp.eq.s32.totalorder %s13, 1
    %p116 = por %p114, %p115
    %p117 = scmp.ne.s32.totalorder %s109, %s112
    %p118 = scmp.eq.s32.totalorder %s13, 0
    %p119 = por %p117, %p118
    %p120 = scmp.ne.s32.totalorder %s109, %s112
    %p121 = scmp.eq.s32.totalorder %s18, 1
    %p122 = por %p120, %p121
    %p123 = scmp.ne.s32.totalorder %s112, %s113
    %p124 = scmp.eq.s32.totalorder %s18, 0
    %p125 = por %p123, %p124
    %p126 = scmp.ne.s32.totalorder %s112, %s113
    %p127 = scmp.eq.s32.totalorder %s19, 1
    %p128 = por %p126, %p127
    %p130 = scmp.ne.s32.totalorder %s113, %s129
    %p131 = scmp.eq.s32.totalorder %s19, 0
    %p132 = por %p130, %p131
    %s134 = sadd.s32 %s133, 1
    %p137 = scmp.eq.s32.totalorder %s13, 1
    %p138 = scmp.ne.s32.totalorder %s133, %s135
    %p139 = scmp.eq.s32.totalorder %s13, 0
    %p140 = por %p138, %p139
    %p141 = scmp.ne.s32.totalorder %s133, %s135
    %p142 = scmp.eq.s32.totalorder %s18, 1
    %p143 = por %p141, %p142
    %p144 = scmp.ne.s32.totalorder %s135, %s136
    %p145 = scmp.eq.s32.totalorder %s18, 0
    %p146 = por %p144, %p145
    %p147 = scmp.ne.s32.totalorder %s135, %s136
    %p148 = scmp.eq.s32.totalorder %s19, 1
    %p149 = por %p147, %p148
    %p151 = scmp.ne.s32.totalorder %s136, %s150
    %p152 = scmp.eq.s32.totalorder %s19, 0
    %p153 = por %p151, %p152
    %s155 = sadd.s32 %s154, 1
    %p158 = scmp.eq.s32.totalorder %s13, 1
    %p159 = scmp.ne.s32.totalorder %s154, %s156
    %p160 = scmp.eq.s32.totalorder %s13, 0
    %p161 = por %p159, %p160
    %p162 = scmp.ne.s32.totalorder %s154, %s156
    %p163 = scmp.eq.s32.totalorder %s18, 1
    %p164 = por %p162, %p163
    %p165 = scmp.ne.s32.totalorder %s156, %s157
    %p166 = scmp.eq.s32.totalorder %s18, 0
    %p167 = por %p165, %p166
    %p168 = scmp.ne.s32.totalorder %s156, %s157
    %p169 = scmp.eq.s32.totalorder %s19, 1
    %p170 = por %p168, %p169
    %p172 = scmp.ne.s32.totalorder %s157, %s171
    %p173 = scmp.eq.s32.totalorder %s19, 0
    %p174 = por %p172, %p173
    %s176 = sadd.s32 %s175, 1
    %p179 = scmp.eq.s32.totalorder %s13, 1
    %p180 = scmp.ne.s32.totalorder %s175, %s177
    %p181 = scmp.eq.s32.totalorder %s13, 0
    %p182 = por %p180, %p181
    %p183 = scmp.ne.s32.totalorder %s175, %s177
    %p184 = scmp.eq.s32.totalorder %s18, 1
    %p185 = por %p183, %p184
    %p186 = scmp.ne.s32.totalorder %s177, %s178
    %p187 = scmp.eq.s32.totalorder %s18, 0
    %p188 = por %p186, %p187
    %p189 = scmp.ne.s32.totalorder %s177, %s178
    %p190 = scmp.eq.s32.totalorder %s19, 1
    %p191 = por %p189, %p190
    %p193 = scmp.ne.s32.totalorder %s178, %s192
    %p194 = scmp.eq.s32.totalorder %s19, 0
    %p195 = por %p193, %p194
    %s197 = sadd.s32 %s196, 1
    %p200 = scmp.eq.s32.totalorder %s13, 1
    %p201 = scmp.ne.s32.totalorder %s196, %s198
    %p202 = scmp.eq.s32.totalorder %s13, 0
    %p203 = por %p201, %p202
    %p204 = scmp.ne.s32.totalorder %s196, %s198
    %p205 = scmp.eq.s32.totalorder %s18, 1
    %p206 = por %p204, %p205
    %p207 = scmp.ne.s32.totalorder %s198, %s199
    %p208 = scmp.eq.s32.totalorder %s18, 0
    %p209 = por %p207, %p208
    %p210 = scmp.ne.s32.totalorder %s198, %s199
    %p211 = scmp.eq.s32.totalorder %s19, 1
    %p212 = por %p210, %p211
    %p214 = scmp.ne.s32.totalorder %s199, %s213
    %p215 = scmp.eq.s32.totalorder %s19, 0
    %p216 = por %p214, %p215
    %s217 = ssub.s32 %s20, %s32
    %s218 = ssub.s32 %s21, %s28
    %s219 = sor.u32 %s217, %s218
    %p220 = scmp.eq.s32.totalorder %s219, 0
    %s222 = sadd.s32 %s221, 1
    %s223 = scalar_select %p220, %s221, %s222
    %p226 = pneg %p220
    %p227 = scmp.eq.s32.totalorder %s13, 1
    %p228 = por %p226, %p227
    %p229 = scmp.ne.s32.totalorder %s221, %s224
    %p230 = scmp.eq.s32.totalorder %s13, 0
    %p231 = por %p229, %p230
    %p232 = scmp.ne.s32.totalorder %s221, %s224
    %p233 = scmp.eq.s32.totalorder %s18, 1
    %p234 = por %p232, %p233
    %p235 = scmp.ne.s32.totalorder %s224, %s225
    %p236 = scmp.eq.s32.totalorder %s18, 0
    %p237 = por %p235, %p236
    %p238 = scmp.ne.s32.totalorder %s224, %s225
    %p239 = scmp.eq.s32.totalorder %s19, 1
    %p240 = por %p238, %p239
    %p242 = scmp.ne.s32.totalorder %s225, %s241
    %p243 = scmp.eq.s32.totalorder %s19, 0
    %p244 = por %p242, %p243
    %p245 = scmp.le.s32.totalorder 1, %s13
    %p246 = scmp.lt.s32.totalorder %s13, 3
    %p247 = pnand %p245, %p246
    %p248 = pneg %p247
    // Predicated region
    $region9: #{tpu_custom_call.1} parent=5 // pred_check
      _
    $region10: #{tpu_custom_call.1} parent=5 // pred_check_branch
      %250 = sbr.rel (%p247) target = $region12
    $region11: #{tpu_custom_call.1} parent=5 // pred_region
      %s251 = ssub.s32 %s13, 1
      // Predicated region
      $region13: #{tpu_custom_call.1} parent=11 // pred_check
        %p252 = pneg %p146
      $region14: #{tpu_custom_call.1} parent=11 // pred_check_branch
        %254 = sbr.rel (%p252) target = $region16
      $region15: #{tpu_custom_call.1} parent=11 // pred_region
        _
      $region16: #{tpu_custom_call.1} parent=11 // pred_fallthru
        _
      // Predicated region
      $region17: #{tpu_custom_call.1} parent=11 // pred_check
        %p255 = pneg %p167
      $region18: #{tpu_custom_call.1} parent=11 // pred_check_branch
        %257 = sbr.rel (%p255) target = $region20
      $region19: #{tpu_custom_call.1} parent=11 // pred_region
        _
      $region20: #{tpu_custom_call.1} parent=11 // pred_fallthru
        _
      // Predicated region
      $region21: #{tpu_custom_call.1} parent=11 // pred_check
        %p258 = pneg %p188
      $region22: #{tpu_custom_call.1} parent=11 // pred_check_branch
        %260 = sbr.rel (%p258) target = $region24
      $region23: #{tpu_custom_call.1} parent=11 // pred_region
        _
      $region24: #{tpu_custom_call.1} parent=11 // pred_fallthru
        _
      // Predicated region
      $region25: #{tpu_custom_call.1} parent=11 // pred_check
        %p261 = pneg %p209
      $region26: #{tpu_custom_call.1} parent=11 // pred_check_branch
        %263 = sbr.rel (%p261) target = $region28
      $region27: #{tpu_custom_call.1} parent=11 // pred_region
        _
      $region28: #{tpu_custom_call.1} parent=11 // pred_fallthru
        _
    $region12: #{tpu_custom_call.1} parent=5 // pred_fallthru
      _
    %p264 = scmp.lt.s32.totalorder %s13, 2
    // Predicated region
    $region29: #{tpu_custom_call.1} parent=5 // pred_check
      %p265 = pneg %p264
    $region30: #{tpu_custom_call.1} parent=5 // pred_check_branch
      %267 = sbr.rel (%p265) target = $region32
    $region31: #{tpu_custom_call.1} parent=5 // pred_region
      // Predicated region
      $region33: #{tpu_custom_call.1} parent=31 // pred_check
        %p268 = pneg %p47
      $region34: #{tpu_custom_call.1} parent=31 // pred_check_branch
        %270 = sbr.rel (%p268) target = $region36
      $region35: #{tpu_custom_call.1} parent=31 // pred_region
        %s271 = smul.u32 32, %s21
        %p272 = scmp.lt.s32.totalorder %s20, 1
        %s273 = scalar_select %p272, %s20, 1
        %p274 = scmp.lt.s32.totalorder %s271, 31
        %s275 = scalar_select %p274, %s271, 31
        %s276 = smul.addr %s273, 32
        %s277 = sadd.s32 %s275, %s276
        %s278 = smul.addr %s277, 8
        %s279 = scalar_lea.vmem %s0, %s278
        %s280 = smul.u32 32, %s21
      $region36: #{tpu_custom_call.1} parent=31 // pred_fallthru
        _
      // Predicated region
      $region37: #{tpu_custom_call.1} parent=31 // pred_check
        %p281 = pneg %p83
      $region38: #{tpu_custom_call.1} parent=31 // pred_check_branch
        %283 = sbr.rel (%p281) target = $region40
      $region39: #{tpu_custom_call.1} parent=31 // pred_region
        %s284 = smul.u32 %s21, 16
        %s285 = ssub.s32 %s284, 1
        %p286 = scmp.gt.s32.totalorder %s285, 0
        %s287 = scalar_select %p286, %s285, 0
        %s288 = smul.u32 2, %s287
        %p289 = scmp.lt.s32.totalorder %s20, 1
        %s290 = scalar_select %p289, %s20, 1
        %p291 = scmp.lt.s32.totalorder %s288, 31
        %s292 = scalar_select %p291, %s288, 31
        %s293 = smul.addr %s290, 32
        %s294 = sadd.s32 %s292, %s293
        %s295 = smul.addr %s294, 8
        %s296 = scalar_lea.vmem %s1, %s295
        %s297 = smul.u32 %s21, 16
        %s298 = ssub.s32 %s297, 1
        %p299 = scmp.gt.s32.totalorder %s298, 0
        %s300 = scalar_select %p299, %s298, 0
        %s301 = smul.u32 2, %s300
      $region40: #{tpu_custom_call.1} parent=31 // pred_fallthru
        _
      // Predicated region
      $region41: #{tpu_custom_call.1} parent=31 // pred_check
        %p302 = pneg %p119
      $region42: #{tpu_custom_call.1} parent=31 // pred_check_branch
        %304 = sbr.rel (%p302) target = $region44
      $region43: #{tpu_custom_call.1} parent=31 // pred_region
        %s305 = smul.u32 %s21, 16
        %s306 = sadd.s32 %s305, 16
        %p307 = scmp.lt.s32.totalorder %s306, 15
        %s308 = scalar_select %p307, %s306, 15
        %s309 = smul.u32 2, %s308
        %p310 = scmp.lt.s32.totalorder %s20, 1
        %s311 = scalar_select %p310, %s20, 1
        %p312 = scmp.lt.s32.totalorder %s309, 31
        %s313 = scalar_select %p312, %s309, 31
        %s314 = smul.addr %s311, 32
        %s315 = sadd.s32 %s313, %s314
        %s316 = smul.addr %s315, 8
        %s317 = scalar_lea.vmem %s2, %s316
        %s318 = smul.u32 %s21, 16
        %s319 = sadd.s32 %s318, 16
        %p320 = scmp.lt.s32.totalorder %s319, 15
        %s321 = scalar_select %p320, %s319, 15
        %s322 = smul.u32 2, %s321
      $region44: #{tpu_custom_call.1} parent=31 // pred_fallthru
        _
    $region32: #{tpu_custom_call.1} parent=5 // pred_fallthru
      _
    %p323 = scmp.le.s32.totalorder 1, %s13
    %p324 = scmp.lt.s32.totalorder %s13, 3
    %p325 = pnand %p323, %p324
    %p326 = pneg %p325
    // Predicated region
    $region45: #{tpu_custom_call.1} parent=5 // pred_check
      _
    $region46: #{tpu_custom_call.1} parent=5 // pred_check_branch
      %328 = sbr.rel (%p325) target = $region48
    $region47: #{tpu_custom_call.1} parent=5 // pred_region
      %s329 = ssub.s32 %s13, 1
      %s330 = smul.u32 32, %s23
      %p331 = scmp.lt.s32.totalorder %s22, 1
      %s332 = scalar_select %p331, %s22, 1
      %p333 = scmp.lt.s32.totalorder %s330, 31
      %s334 = scalar_select %p333, %s330, 31
      %s335 = smul.addr %s332, 32
      %s336 = sadd.s32 %s334, %s335
      %s337 = smul.addr %s336, 8
      %s338 = scalar_lea.vmem %s0, %s337
      %p339 = pneg %p53
      %p340 = pneg %p50
      %s341 = smul.u32 %s23, 16
      %s342 = ssub.s32 %s341, 1
      %p343 = scmp.gt.s32.totalorder %s342, 0
      %s344 = scalar_select %p343, %s342, 0
      %s345 = smul.u32 2, %s344
      %p346 = scmp.lt.s32.totalorder %s22, 1
      %s347 = scalar_select %p346, %s22, 1
      %p348 = scmp.lt.s32.totalorder %s345, 31
      %s349 = scalar_select %p348, %s345, 31
      %s350 = smul.addr %s347, 32
      %s351 = sadd.s32 %s349, %s350
      %s352 = smul.addr %s351, 8
      %s353 = scalar_lea.vmem %s1, %s352
      %p354 = pneg %p89
      %p355 = pneg %p86
      %s356 = smul.u32 %s23, 16
      %s357 = sadd.s32 %s356, 16
      %p358 = scmp.lt.s32.totalorder %s357, 15
      %s359 = scalar_select %p358, %s357, 15
      %s360 = smul.u32 2, %s359
      %p361 = scmp.lt.s32.totalorder %s22, 1
      %s362 = scalar_select %p361, %s22, 1
      %p363 = scmp.lt.s32.totalorder %s360, 31
      %s364 = scalar_select %p363, %s360, 31
      %s365 = smul.addr %s362, 32
      %s366 = sadd.s32 %s364, %s365
      %s367 = smul.addr %s366, 8
      %s368 = scalar_lea.vmem %s2, %s367
      %p369 = pneg %p125
      %p370 = pneg %p122
      %p371 = pneg %p146
      %p372 = pneg %p143
      %p373 = pneg %p167
      %p374 = pneg %p164
      %p375 = pneg %p188
      %p376 = pneg %p185
      %p377 = pneg %p209
      %p378 = pneg %p206
      %p379 = pneg %p237
      %p380 = pneg %p234
      %s381 = smul.u32 32, %s23
      %p382 = scmp.lt.s32.totalorder %s22, 1
      %s383 = scalar_select %p382, %s22, 1
      %p384 = scmp.lt.s32.totalorder %s381, 31
      %s385 = scalar_select %p384, %s381, 31
      %s386 = smul.addr %s383, 32
      %s387 = sadd.s32 %s385, %s386
      %s388 = smul.addr %s387, 8
      %s389 = scalar_lea.vmem %s7, %s388
      %s390 = smul.u32 32, %s23
      %p391 = scmp.lt.s32.totalorder %s22, 1
      %s392 = scalar_select %p391, %s22, 1
      %p393 = scmp.lt.s32.totalorder %s390, 31
      %s394 = scalar_select %p393, %s390, 31
      %s395 = smul.addr %s392, 32
      %s396 = sadd.s32 %s394, %s395
      %s397 = smul.addr %s396, 8
      %s398 = scalar_lea.vmem %s0, %s397
      %s399 = smul.u32 32, %s23
      %s400 = smul.u32 %s23, 16
      %s401 = ssub.s32 %s400, 1
      %p402 = scmp.gt.s32.totalorder %s401, 0
      %s403 = scalar_select %p402, %s401, 0
      %s404 = smul.u32 2, %s403
      %p405 = scmp.lt.s32.totalorder %s22, 1
      %s406 = scalar_select %p405, %s22, 1
      %p407 = scmp.lt.s32.totalorder %s404, 31
      %s408 = scalar_select %p407, %s404, 31
      %s409 = smul.addr %s406, 32
      %s410 = sadd.s32 %s408, %s409
      %s411 = smul.addr %s410, 8
      %s412 = scalar_lea.vmem %s1, %s411
      %s413 = smul.u32 %s23, 16
      %s414 = ssub.s32 %s413, 1
      %p415 = scmp.gt.s32.totalorder %s414, 0
      %s416 = scalar_select %p415, %s414, 0
      %s417 = smul.u32 2, %s416
      %s418 = smul.u32 %s23, 16
      %s419 = sadd.s32 %s418, 16
      %p420 = scmp.lt.s32.totalorder %s419, 15
      %s421 = scalar_select %p420, %s419, 15
      %s422 = smul.u32 2, %s421
      %p423 = scmp.lt.s32.totalorder %s22, 1
      %s424 = scalar_select %p423, %s22, 1
      %p425 = scmp.lt.s32.totalorder %s422, 31
      %s426 = scalar_select %p425, %s422, 31
      %s427 = smul.addr %s424, 32
      %s428 = sadd.s32 %s426, %s427
      %s429 = smul.addr %s428, 8
      %s430 = scalar_lea.vmem %s2, %s429
      %s431 = smul.u32 %s23, 16
      %s432 = sadd.s32 %s431, 16
      %p433 = scmp.lt.s32.totalorder %s432, 15
      %s434 = scalar_select %p433, %s432, 15
      %s435 = smul.u32 2, %s434
      %s436 = smul.u32 32, %s23
      %p437 = scmp.lt.s32.totalorder %s22, 1
      %s438 = scalar_select %p437, %s22, 1
      %p439 = scmp.lt.s32.totalorder %s436, 31
      %s440 = scalar_select %p439, %s436, 31
      %s441 = smul.addr %s438, 32
      %s442 = sadd.s32 %s440, %s441
      %s443 = smul.addr %s442, 8
      %s444 = scalar_lea.vmem %s7, %s443
      %s445 = smul.u32 32, %s23
      %v446 = vld [vmem:[%s398] sm:$0xff]
      %v447 = vld [vmem:[%s398 + $0x8] sm:$0xff]
      %v448 = vld [vmem:[%s398 + $0x10] sm:$0xff]
      %v449 = vld [vmem:[%s398 + $0x18] sm:$0xff]
      %v450 = vld [vmem:[%s398 + $0x20] sm:$0xff]
      %v451 = vld [vmem:[%s398 + $0x28] sm:$0xff]
      %v452 = vld [vmem:[%s398 + $0x30] sm:$0xff]
      %v453 = vld [vmem:[%s398 + $0x38] sm:$0xff]
      %v454 = vld [vmem:[%s398 + $0x40] sm:$0xff]
      %v455 = vld [vmem:[%s398 + $0x48] sm:$0xff]
      %v456 = vld [vmem:[%s398 + $0x50] sm:$0xff]
      %v457 = vld [vmem:[%s398 + $0x58] sm:$0xff]
      %v458 = vld [vmem:[%s398 + $0x60] sm:$0xff]
      %v459 = vld [vmem:[%s398 + $0x68] sm:$0xff]
      %v460 = vld [vmem:[%s398 + $0x70] sm:$0xff]
      %v461 = vld [vmem:[%s398 + $0x78] sm:$0xff]
      %v462 = vld [vmem:[%s398 + $0x80] sm:$0xff]
      %v463 = vld [vmem:[%s398 + $0x88] sm:$0xff]
      %v464 = vld [vmem:[%s398 + $0x90] sm:$0xff]
      %v465 = vld [vmem:[%s398 + $0x98] sm:$0xff]
      %v466 = vld [vmem:[%s398 + $0xa0] sm:$0xff]
      %v467 = vld [vmem:[%s398 + $0xa8] sm:$0xff]
      %v468 = vld [vmem:[%s398 + $0xb0] sm:$0xff]
      %v469 = vld [vmem:[%s398 + $0xb8] sm:$0xff]
      %v470 = vld [vmem:[%s398 + $0xc0] sm:$0xff]
      %v471 = vld [vmem:[%s398 + $0xc8] sm:$0xff]
      %v472 = vld [vmem:[%s398 + $0xd0] sm:$0xff]
      %v473 = vld [vmem:[%s398 + $0xd8] sm:$0xff]
      %v474 = vld [vmem:[%s398 + $0xe0] sm:$0xff]
      %v475 = vld [vmem:[%s398 + $0xe8] sm:$0xff]
      %v476 = vld [vmem:[%s398 + $0xf0] sm:$0xff]
      %v477 = vld [vmem:[%s398 + $0xf8] sm:$0xff]
      %v478 = vld [vmem:[%s412] sm:$0xff]
      %v479 = vld [vmem:[%s412 + $0x8] sm:$0xff]
      %p480 = scmp.gt.s32.totalorder %s23, 0
      %s481 = scalar_select %p480, 1, 0
      %s482 = scvt.s32.f32 %s481
      %v483 = vstv %s482
      %v484 = vmul.f32 %v478, %v483
      %v485 = vmul.f32 %v479, %v483
      %v486 = vld [vmem:[%s430] sm:$0xff]
      %v487 = vld [vmem:[%s430 + $0x8] sm:$0xff]
      %p488 = scmp.lt.s32.totalorder %s23, 0
      %s489 = scalar_select %p488, 1, 0
      %s490 = scvt.s32.f32 %s489
      %v491 = vstv %s490
      %v492 = vmul.f32 %v486, %v491
      %v493 = vmul.f32 %v487, %v491
      %vm530 = vcmask 1040384
      %v531 = vrot.slane %v484, 7
      %v532 = vrot.slane %v485, 7
      %v533 = vsel %vm530, %v531, %v532
      %v534 = vrot.slane %v446, 7
      %v535 = vrot.slane %v447, 7
      %v536 = vsel %vm530, %v534, %v535
      %v537 = vrot.slane %v448, 7
      %v538 = vrot.slane %v449, 7
      %v539 = vsel %vm530, %v537, %v538
      %v540 = vrot.slane %v450, 7
      %v541 = vrot.slane %v451, 7
      %v542 = vsel %vm530, %v540, %v541
      %v543 = vrot.slane %v452, 7
      %v544 = vrot.slane %v453, 7
      %v545 = vsel %vm530, %v543, %v544
      %v546 = vrot.slane %v454, 7
      %v547 = vrot.slane %v455, 7
      %v548 = vsel %vm530, %v546, %v547
      %v549 = vrot.slane %v456, 7
      %v550 = vrot.slane %v457, 7
      %v551 = vsel %vm530, %v549, %v550
      %v552 = vrot.slane %v458, 7
      %v553 = vrot.slane %v459, 7
      %v554 = vsel %vm530, %v552, %v553
      %v555 = vrot.slane %v460, 7
      %v556 = vrot.slane %v461, 7
      %v557 = vsel %vm530, %v555, %v556
      %v558 = vrot.slane %v462, 7
      %v559 = vrot.slane %v463, 7
      %v560 = vsel %vm530, %v558, %v559
      %v561 = vrot.slane %v464, 7
      %v562 = vrot.slane %v465, 7
      %v563 = vsel %vm530, %v561, %v562
      %v564 = vrot.slane %v466, 7
      %v565 = vrot.slane %v467, 7
      %v566 = vsel %vm530, %v564, %v565
      %v567 = vrot.slane %v468, 7
      %v568 = vrot.slane %v469, 7
      %v569 = vsel %vm530, %v567, %v568
      %v570 = vrot.slane %v470, 7
      %v571 = vrot.slane %v471, 7
      %v572 = vsel %vm530, %v570, %v571
      %v573 = vrot.slane %v472, 7
      %v574 = vrot.slane %v473, 7
      %v575 = vsel %vm530, %v573, %v574
      %v576 = vrot.slane %v474, 7
      %v577 = vrot.slane %v475, 7
      %v578 = vsel %vm530, %v576, %v577
      %v579 = vrot.slane %v476, 7
      %v580 = vrot.slane %v477, 7
      %v581 = vsel %vm530, %v579, %v580
      %v582 = vrot.slane %v492, 7
      %v583 = vrot.slane %v493, 7
      %v584 = vsel %vm530, %v582, %v583
      %v619 = vsel %vm530, 0.0, %v531
      %v620 = vsel %vm530, 0.0, %v534
      %v621 = vsel %vm530, 0.0, %v537
      %v622 = vsel %vm530, 0.0, %v540
      %v623 = vsel %vm530, 0.0, %v543
      %v624 = vsel %vm530, 0.0, %v546
      %v625 = vsel %vm530, 0.0, %v549
      %v626 = vsel %vm530, 0.0, %v552
      %v627 = vsel %vm530, 0.0, %v555
      %v628 = vsel %vm530, 0.0, %v558
      %v629 = vsel %vm530, 0.0, %v561
      %v630 = vsel %vm530, 0.0, %v564
      %v631 = vsel %vm530, 0.0, %v567
      %v632 = vsel %vm530, 0.0, %v570
      %v633 = vsel %vm530, 0.0, %v573
      %v634 = vsel %vm530, 0.0, %v576
      %v635 = vsel %vm530, 0.0, %v579
      %v636 = vsel %vm530, 0.0, %v582
      %vm637 = vcmask 1046528
      %v638 = vrot.slane %v484, 1
      %v639 = vrot.slane %v485, 1
      %v640 = vsel %vm637, %v638, %v639
      %v641 = vrot.slane %v446, 1
      %v642 = vrot.slane %v447, 1
      %v643 = vsel %vm637, %v641, %v642
      %v644 = vrot.slane %v448, 1
      %v645 = vrot.slane %v449, 1
      %v646 = vsel %vm637, %v644, %v645
      %v647 = vrot.slane %v450, 1
      %v648 = vrot.slane %v451, 1
      %v649 = vsel %vm637, %v647, %v648
      %v650 = vrot.slane %v452, 1
      %v651 = vrot.slane %v453, 1
      %v652 = vsel %vm637, %v650, %v651
      %v653 = vrot.slane %v454, 1
      %v654 = vrot.slane %v455, 1
      %v655 = vsel %vm637, %v653, %v654
      %v656 = vrot.slane %v456, 1
      %v657 = vrot.slane %v457, 1
      %v658 = vsel %vm637, %v656, %v657
      %v659 = vrot.slane %v458, 1
      %v660 = vrot.slane %v459, 1
      %v661 = vsel %vm637, %v659, %v660
      %v662 = vrot.slane %v460, 1
      %v663 = vrot.slane %v461, 1
      %v664 = vsel %vm637, %v662, %v663
      %v665 = vrot.slane %v462, 1
      %v666 = vrot.slane %v463, 1
      %v667 = vsel %vm637, %v665, %v666
      %v668 = vrot.slane %v464, 1
      %v669 = vrot.slane %v465, 1
      %v670 = vsel %vm637, %v668, %v669
      %v671 = vrot.slane %v466, 1
      %v672 = vrot.slane %v467, 1
      %v673 = vsel %vm637, %v671, %v672
      %v674 = vrot.slane %v468, 1
      %v675 = vrot.slane %v469, 1
      %v676 = vsel %vm637, %v674, %v675
      %v677 = vrot.slane %v470, 1
      %v678 = vrot.slane %v471, 1
      %v679 = vsel %vm637, %v677, %v678
      %v680 = vrot.slane %v472, 1
      %v681 = vrot.slane %v473, 1
      %v682 = vsel %vm637, %v680, %v681
      %v683 = vrot.slane %v474, 1
      %v684 = vrot.slane %v475, 1
      %v685 = vsel %vm637, %v683, %v684
      %v686 = vrot.slane %v476, 1
      %v687 = vrot.slane %v477, 1
      %v688 = vsel %vm637, %v686, %v687
      %v689 = vrot.slane %v492, 1
      %v690 = vrot.slane %v493, 1
      %v691 = vsel %vm637, %v689, %v690
      %v710 = vsel %vm637, %v639, 0.0
      %v711 = vsel %vm637, %v642, 0.0
      %v712 = vsel %vm637, %v645, 0.0
      %v713 = vsel %vm637, %v648, 0.0
      %v714 = vsel %vm637, %v651, 0.0
      %v715 = vsel %vm637, %v654, 0.0
      %v716 = vsel %vm637, %v657, 0.0
      %v717 = vsel %vm637, %v660, 0.0
      %v718 = vsel %vm637, %v663, 0.0
      %v719 = vsel %vm637, %v666, 0.0
      %v720 = vsel %vm637, %v669, 0.0
      %v721 = vsel %vm637, %v672, 0.0
      %v722 = vsel %vm637, %v675, 0.0
      %v723 = vsel %vm637, %v678, 0.0
      %v724 = vsel %vm637, %v681, 0.0
      %v725 = vsel %vm637, %v684, 0.0
      %v726 = vsel %vm637, %v687, 0.0
      %v727 = vsel %vm637, %v690, 0.0
      %728 = vrot.lane.b32.xlu0 %v484, 3
      %v729 = vpop.permute.xlu0 %728
      %730 = vrot.lane.b32.xlu0 %v485, 3
      %v731 = vpop.permute.xlu0 %730
      %732 = vrot.lane.b32.xlu0 %v446, 3
      %v733 = vpop.permute.xlu0 %732
      %734 = vrot.lane.b32.xlu0 %v447, 3
      %v735 = vpop.permute.xlu0 %734
      %736 = vrot.lane.b32.xlu0 %v448, 3
      %v737 = vpop.permute.xlu0 %736
      %738 = vrot.lane.b32.xlu0 %v449, 3
      %v739 = vpop.permute.xlu0 %738
      %740 = vrot.lane.b32.xlu0 %v450, 3
      %v741 = vpop.permute.xlu0 %740
      %742 = vrot.lane.b32.xlu0 %v451, 3
      %v743 = vpop.permute.xlu0 %742
      %744 = vrot.lane.b32.xlu0 %v452, 3
      %v745 = vpop.permute.xlu0 %744
      %746 = vrot.lane.b32.xlu0 %v453, 3
      %v747 = vpop.permute.xlu0 %746
      %748 = vrot.lane.b32.xlu0 %v454, 3
      %v749 = vpop.permute.xlu0 %748
      %750 = vrot.lane.b32.xlu0 %v455, 3
      %v751 = vpop.permute.xlu0 %750
      %752 = vrot.lane.b32.xlu0 %v456, 3
      %v753 = vpop.permute.xlu0 %752
      %754 = vrot.lane.b32.xlu0 %v457, 3
      %v755 = vpop.permute.xlu0 %754
      %756 = vrot.lane.b32.xlu0 %v458, 3
      %v757 = vpop.permute.xlu0 %756
      %758 = vrot.lane.b32.xlu0 %v459, 3
      %v759 = vpop.permute.xlu0 %758
      %760 = vrot.lane.b32.xlu0 %v460, 3
      %v761 = vpop.permute.xlu0 %760
      %762 = vrot.lane.b32.xlu0 %v461, 3
      %v763 = vpop.permute.xlu0 %762
      %764 = vrot.lane.b32.xlu0 %v462, 3
      %v765 = vpop.permute.xlu0 %764
      %766 = vrot.lane.b32.xlu0 %v463, 3
      %v767 = vpop.permute.xlu0 %766
      %768 = vrot.lane.b32.xlu0 %v464, 3
      %v769 = vpop.permute.xlu0 %768
      %770 = vrot.lane.b32.xlu0 %v465, 3
      %v771 = vpop.permute.xlu0 %770
      %772 = vrot.lane.b32.xlu0 %v466, 3
      %v773 = vpop.permute.xlu0 %772
      %774 = vrot.lane.b32.xlu0 %v467, 3
      %v775 = vpop.permute.xlu0 %774
      %776 = vrot.lane.b32.xlu0 %v468, 3
      %v777 = vpop.permute.xlu0 %776
      %778 = vrot.lane.b32.xlu0 %v469, 3
      %v779 = vpop.permute.xlu0 %778
      %780 = vrot.lane.b32.xlu0 %v470, 3
      %v781 = vpop.permute.xlu0 %780
      %782 = vrot.lane.b32.xlu0 %v471, 3
      %v783 = vpop.permute.xlu0 %782
      %784 = vrot.lane.b32.xlu0 %v472, 3
      %v785 = vpop.permute.xlu0 %784
      %786 = vrot.lane.b32.xlu0 %v473, 3
      %v787 = vpop.permute.xlu0 %786
      %788 = vrot.lane.b32.xlu0 %v474, 3
      %v789 = vpop.permute.xlu0 %788
      %790 = vrot.lane.b32.xlu0 %v475, 3
      %v791 = vpop.permute.xlu0 %790
      %840 = vrot.lane.b32.xlu0 %v640, 6
      %v841 = vpop.permute.xlu0 %840
      %842 = vrot.lane.b32.xlu0 %v710, 6
      %v843 = vpop.permute.xlu0 %842
      %844 = vrot.lane.b32.xlu0 %v643, 6
      %v845 = vpop.permute.xlu0 %844
      %846 = vrot.lane.b32.xlu0 %v711, 6
      %v847 = vpop.permute.xlu0 %846
      %848 = vrot.lane.b32.xlu0 %v646, 6
      %v849 = vpop.permute.xlu0 %848
      %850 = vrot.lane.b32.xlu0 %v712, 6
      %v851 = vpop.permute.xlu0 %850
      %852 = vrot.lane.b32.xlu0 %v649, 6
      %v853 = vpop.permute.xlu0 %852
      %854 = vrot.lane.b32.xlu0 %v713, 6
      %v855 = vpop.permute.xlu0 %854
      %856 = vrot.lane.b32.xlu0 %v652, 6
      %v857 = vpop.permute.xlu0 %856
      %858 = vrot.lane.b32.xlu0 %v714, 6
      %v859 = vpop.permute.xlu0 %858
      %860 = vrot.lane.b32.xlu0 %v655, 6
      %v861 = vpop.permute.xlu0 %860
      %862 = vrot.lane.b32.xlu0 %v715, 6
      %v863 = vpop.permute.xlu0 %862
      %864 = vrot.lane.b32.xlu0 %v658, 6
      %v865 = vpop.permute.xlu0 %864
      %866 = vrot.lane.b32.xlu0 %v716, 6
      %v867 = vpop.permute.xlu0 %866
      %868 = vrot.lane.b32.xlu0 %v661, 6
      %v869 = vpop.permute.xlu0 %868
      %870 = vrot.lane.b32.xlu0 %v717, 6
      %v871 = vpop.permute.xlu0 %870
      %872 = vrot.lane.b32.xlu0 %v664, 6
      %v873 = vpop.permute.xlu0 %872
      %874 = vrot.lane.b32.xlu0 %v718, 6
      %v875 = vpop.permute.xlu0 %874
      %876 = vrot.lane.b32.xlu0 %v667, 6
      %v877 = vpop.permute.xlu0 %876
      %878 = vrot.lane.b32.xlu0 %v719, 6
      %v879 = vpop.permute.xlu0 %878
      %880 = vrot.lane.b32.xlu0 %v670, 6
      %v881 = vpop.permute.xlu0 %880
      %882 = vrot.lane.b32.xlu0 %v720, 6
      %v883 = vpop.permute.xlu0 %882
      %884 = vrot.lane.b32.xlu0 %v673, 6
      %v885 = vpop.permute.xlu0 %884
      %886 = vrot.lane.b32.xlu0 %v721, 6
      %v887 = vpop.permute.xlu0 %886
      %888 = vrot.lane.b32.xlu0 %v676, 6
      %v889 = vpop.permute.xlu0 %888
      %890 = vrot.lane.b32.xlu0 %v722, 6
      %v891 = vpop.permute.xlu0 %890
      %892 = vrot.lane.b32.xlu0 %v679, 6
      %v893 = vpop.permute.xlu0 %892
      %894 = vrot.lane.b32.xlu0 %v723, 6
      %v895 = vpop.permute.xlu0 %894
      %896 = vrot.lane.b32.xlu0 %v682, 6
      %v897 = vpop.permute.xlu0 %896
      %898 = vrot.lane.b32.xlu0 %v724, 6
      %v899 = vpop.permute.xlu0 %898
      %900 = vrot.lane.b32.xlu0 %v685, 6
      %v901 = vpop.permute.xlu0 %900
      %902 = vrot.lane.b32.xlu0 %v725, 6
      %v903 = vpop.permute.xlu0 %902
      %952 = vrot.lane.b32.xlu0 %v620, 9
      %v953 = vpop.permute.xlu0 %952
      %954 = vrot.lane.b32.xlu0 %v536, 9
      %v955 = vpop.permute.xlu0 %954
      %956 = vrot.lane.b32.xlu0 %v621, 9
      %v957 = vpop.permute.xlu0 %956
      %958 = vrot.lane.b32.xlu0 %v539, 9
      %v959 = vpop.permute.xlu0 %958
      %960 = vrot.lane.b32.xlu0 %v622, 9
      %v961 = vpop.permute.xlu0 %960
      %962 = vrot.lane.b32.xlu0 %v542, 9
      %v963 = vpop.permute.xlu0 %962
      %964 = vrot.lane.b32.xlu0 %v623, 9
      %v965 = vpop.permute.xlu0 %964
      %966 = vrot.lane.b32.xlu0 %v545, 9
      %v967 = vpop.permute.xlu0 %966
      %968 = vrot.lane.b32.xlu0 %v624, 9
      %v969 = vpop.permute.xlu0 %968
      %970 = vrot.lane.b32.xlu0 %v548, 9
      %v971 = vpop.permute.xlu0 %970
      %972 = vrot.lane.b32.xlu0 %v625, 9
      %v973 = vpop.permute.xlu0 %972
      %974 = vrot.lane.b32.xlu0 %v551, 9
      %v975 = vpop.permute.xlu0 %974
      %976 = vrot.lane.b32.xlu0 %v626, 9
      %v977 = vpop.permute.xlu0 %976
      %978 = vrot.lane.b32.xlu0 %v554, 9
      %v979 = vpop.permute.xlu0 %978
      %980 = vrot.lane.b32.xlu0 %v627, 9
      %v981 = vpop.permute.xlu0 %980
      %982 = vrot.lane.b32.xlu0 %v557, 9
      %v983 = vpop.permute.xlu0 %982
      %984 = vrot.lane.b32.xlu0 %v628, 9
      %v985 = vpop.permute.xlu0 %984
      %986 = vrot.lane.b32.xlu0 %v560, 9
      %v987 = vpop.permute.xlu0 %986
      %988 = vrot.lane.b32.xlu0 %v629, 9
      %v989 = vpop.permute.xlu0 %988
      %990 = vrot.lane.b32.xlu0 %v563, 9
      %v991 = vpop.permute.xlu0 %990
      %992 = vrot.lane.b32.xlu0 %v630, 9
      %v993 = vpop.permute.xlu0 %992
      %994 = vrot.lane.b32.xlu0 %v566, 9
      %v995 = vpop.permute.xlu0 %994
      %996 = vrot.lane.b32.xlu0 %v631, 9
      %v997 = vpop.permute.xlu0 %996
      %998 = vrot.lane.b32.xlu0 %v569, 9
      %v999 = vpop.permute.xlu0 %998
      %1000 = vrot.lane.b32.xlu0 %v632, 9
      %v1001 = vpop.permute.xlu0 %1000
      %1002 = vrot.lane.b32.xlu0 %v572, 9
      %v1003 = vpop.permute.xlu0 %1002
      %1004 = vrot.lane.b32.xlu0 %v633, 9
      %v1005 = vpop.permute.xlu0 %1004
      %1006 = vrot.lane.b32.xlu0 %v575, 9
      %v1007 = vpop.permute.xlu0 %1006
      %1008 = vrot.lane.b32.xlu0 %v634, 9
      %v1009 = vpop.permute.xlu0 %1008
      %1010 = vrot.lane.b32.xlu0 %v578, 9
      %v1011 = vpop.permute.xlu0 %1010
      %1012 = vrot.lane.b32.xlu0 %v635, 9
      %v1013 = vpop.permute.xlu0 %1012
      %1014 = vrot.lane.b32.xlu0 %v581, 9
      %v1015 = vpop.permute.xlu0 %1014
      %1048 = vrot.lane.b32.xlu0 %v446, 12
      %v1049 = vpop.permute.xlu0 %1048
      %1050 = vrot.lane.b32.xlu0 %v447, 12
      %v1051 = vpop.permute.xlu0 %1050
      %1052 = vrot.lane.b32.xlu0 %v448, 12
      %v1053 = vpop.permute.xlu0 %1052
      %1054 = vrot.lane.b32.xlu0 %v449, 12
      %v1055 = vpop.permute.xlu0 %1054
      %1056 = vrot.lane.b32.xlu0 %v450, 12
      %v1057 = vpop.permute.xlu0 %1056
      %1058 = vrot.lane.b32.xlu0 %v451, 12
      %v1059 = vpop.permute.xlu0 %1058
      %1060 = vrot.lane.b32.xlu0 %v452, 12
      %v1061 = vpop.permute.xlu0 %1060
      %1062 = vrot.lane.b32.xlu0 %v453, 12
      %v1063 = vpop.permute.xlu0 %1062
      %1064 = vrot.lane.b32.xlu0 %v454, 12
      %v1065 = vpop.permute.xlu0 %1064
      %1066 = vrot.lane.b32.xlu0 %v455, 12
      %v1067 = vpop.permute.xlu0 %1066
      %1068 = vrot.lane.b32.xlu0 %v456, 12
      %v1069 = vpop.permute.xlu0 %1068
      %1070 = vrot.lane.b32.xlu0 %v457, 12
      %v1071 = vpop.permute.xlu0 %1070
      %1072 = vrot.lane.b32.xlu0 %v458, 12
      %v1073 = vpop.permute.xlu0 %1072
      %1074 = vrot.lane.b32.xlu0 %v459, 12
      %v1075 = vpop.permute.xlu0 %1074
      %1076 = vrot.lane.b32.xlu0 %v460, 12
      %v1077 = vpop.permute.xlu0 %1076
      %1078 = vrot.lane.b32.xlu0 %v461, 12
      %v1079 = vpop.permute.xlu0 %1078
      %1080 = vrot.lane.b32.xlu0 %v462, 12
      %v1081 = vpop.permute.xlu0 %1080
      %1082 = vrot.lane.b32.xlu0 %v463, 12
      %v1083 = vpop.permute.xlu0 %1082
      %1084 = vrot.lane.b32.xlu0 %v464, 12
      %v1085 = vpop.permute.xlu0 %1084
      %1086 = vrot.lane.b32.xlu0 %v465, 12
      %v1087 = vpop.permute.xlu0 %1086
      %1088 = vrot.lane.b32.xlu0 %v466, 12
      %v1089 = vpop.permute.xlu0 %1088
      %1090 = vrot.lane.b32.xlu0 %v467, 12
      %v1091 = vpop.permute.xlu0 %1090
      %1092 = vrot.lane.b32.xlu0 %v468, 12
      %v1093 = vpop.permute.xlu0 %1092
      %1094 = vrot.lane.b32.xlu0 %v469, 12
      %v1095 = vpop.permute.xlu0 %1094
      %1096 = vrot.lane.b32.xlu0 %v470, 12
      %v1097 = vpop.permute.xlu0 %1096
      %1098 = vrot.lane.b32.xlu0 %v471, 12
      %v1099 = vpop.permute.xlu0 %1098
      %1100 = vrot.lane.b32.xlu0 %v472, 12
      %v1101 = vpop.permute.xlu0 %1100
      %1102 = vrot.lane.b32.xlu0 %v473, 12
      %v1103 = vpop.permute.xlu0 %1102
      %1104 = vrot.lane.b32.xlu0 %v474, 12
      %v1105 = vpop.permute.xlu0 %1104
      %1106 = vrot.lane.b32.xlu0 %v475, 12
      %v1107 = vpop.permute.xlu0 %1106
      %1108 = vrot.lane.b32.xlu0 %v476, 12
      %v1109 = vpop.permute.xlu0 %1108
      %1110 = vrot.lane.b32.xlu0 %v477, 12
      %v1111 = vpop.permute.xlu0 %1110
      %1145 = vrot.lane.b32.xlu0 %v643, 15
      %v1146 = vpop.permute.xlu0 %1145
      %1147 = vrot.lane.b32.xlu0 %v711, 15
      %v1148 = vpop.permute.xlu0 %1147
      %1149 = vrot.lane.b32.xlu0 %v646, 15
      %v1150 = vpop.permute.xlu0 %1149
      %1151 = vrot.lane.b32.xlu0 %v712, 15
      %v1152 = vpop.permute.xlu0 %1151
      %1153 = vrot.lane.b32.xlu0 %v649, 15
      %v1154 = vpop.permute.xlu0 %1153
      %1155 = vrot.lane.b32.xlu0 %v713, 15
      %v1156 = vpop.permute.xlu0 %1155
      %1157 = vrot.lane.b32.xlu0 %v652, 15
      %v1158 = vpop.permute.xlu0 %1157
      %1159 = vrot.lane.b32.xlu0 %v714, 15
      %v1160 = vpop.permute.xlu0 %1159
      %1161 = vrot.lane.b32.xlu0 %v655, 15
      %v1162 = vpop.permute.xlu0 %1161
      %1163 = vrot.lane.b32.xlu0 %v715, 15
      %v1164 = vpop.permute.xlu0 %1163
      %1165 = vrot.lane.b32.xlu0 %v658, 15
      %v1166 = vpop.permute.xlu0 %1165
      %1167 = vrot.lane.b32.xlu0 %v716, 15
      %v1168 = vpop.permute.xlu0 %1167
      %1169 = vrot.lane.b32.xlu0 %v661, 15
      %v1170 = vpop.permute.xlu0 %1169
      %1171 = vrot.lane.b32.xlu0 %v717, 15
      %v1172 = vpop.permute.xlu0 %1171
      %1173 = vrot.lane.b32.xlu0 %v664, 15
      %v1174 = vpop.permute.xlu0 %1173
      %1175 = vrot.lane.b32.xlu0 %v718, 15
      %v1176 = vpop.permute.xlu0 %1175
      %1177 = vrot.lane.b32.xlu0 %v667, 15
      %v1178 = vpop.permute.xlu0 %1177
      %1179 = vrot.lane.b32.xlu0 %v719, 15
      %v1180 = vpop.permute.xlu0 %1179
      %1181 = vrot.lane.b32.xlu0 %v670, 15
      %v1182 = vpop.permute.xlu0 %1181
      %1183 = vrot.lane.b32.xlu0 %v720, 15
      %v1184 = vpop.permute.xlu0 %1183
      %1185 = vrot.lane.b32.xlu0 %v673, 15
      %v1186 = vpop.permute.xlu0 %1185
      %1187 = vrot.lane.b32.xlu0 %v721, 15
      %v1188 = vpop.permute.xlu0 %1187
      %1189 = vrot.lane.b32.xlu0 %v676, 15
      %v1190 = vpop.permute.xlu0 %1189
      %1191 = vrot.lane.b32.xlu0 %v722, 15
      %v1192 = vpop.permute.xlu0 %1191
      %1193 = vrot.lane.b32.xlu0 %v679, 15
      %v1194 = vpop.permute.xlu0 %1193
      %1195 = vrot.lane.b32.xlu0 %v723, 15
      %v1196 = vpop.permute.xlu0 %1195
      %1197 = vrot.lane.b32.xlu0 %v682, 15
      %v1198 = vpop.permute.xlu0 %1197
      %1199 = vrot.lane.b32.xlu0 %v724, 15
      %v1200 = vpop.permute.xlu0 %1199
      %1201 = vrot.lane.b32.xlu0 %v685, 15
      %v1202 = vpop.permute.xlu0 %1201
      %1203 = vrot.lane.b32.xlu0 %v725, 15
      %v1204 = vpop.permute.xlu0 %1203
      %1205 = vrot.lane.b32.xlu0 %v688, 15
      %v1206 = vpop.permute.xlu0 %1205
      %1207 = vrot.lane.b32.xlu0 %v726, 15
      %v1208 = vpop.permute.xlu0 %1207
      %1242 = vrot.lane.b32.xlu0 %v621, 18
      %v1243 = vpop.permute.xlu0 %1242
      %1244 = vrot.lane.b32.xlu0 %v539, 18
      %v1245 = vpop.permute.xlu0 %1244
      %1246 = vrot.lane.b32.xlu0 %v622, 18
      %v1247 = vpop.permute.xlu0 %1246
      %1248 = vrot.lane.b32.xlu0 %v542, 18
      %v1249 = vpop.permute.xlu0 %1248
      %1250 = vrot.lane.b32.xlu0 %v623, 18
      %v1251 = vpop.permute.xlu0 %1250
      %1252 = vrot.lane.b32.xlu0 %v545, 18
      %v1253 = vpop.permute.xlu0 %1252
      %1254 = vrot.lane.b32.xlu0 %v624, 18
      %v1255 = vpop.permute.xlu0 %1254
      %1256 = vrot.lane.b32.xlu0 %v548, 18
      %v1257 = vpop.permute.xlu0 %1256
      %1258 = vrot.lane.b32.xlu0 %v625, 18
      %v1259 = vpop.permute.xlu0 %1258
      %1260 = vrot.lane.b32.xlu0 %v551, 18
      %v1261 = vpop.permute.xlu0 %1260
      %1262 = vrot.lane.b32.xlu0 %v626, 18
      %v1263 = vpop.permute.xlu0 %1262
      %1264 = vrot.lane.b32.xlu0 %v554, 18
      %v1265 = vpop.permute.xlu0 %1264
      %1266 = vrot.lane.b32.xlu0 %v627, 18
      %v1267 = vpop.permute.xlu0 %1266
      %1268 = vrot.lane.b32.xlu0 %v557, 18
      %v1269 = vpop.permute.xlu0 %1268
      %1270 = vrot.lane.b32.xlu0 %v628, 18
      %v1271 = vpop.permute.xlu0 %1270
      %1272 = vrot.lane.b32.xlu0 %v560, 18
      %v1273 = vpop.permute.xlu0 %1272
      %1274 = vrot.lane.b32.xlu0 %v629, 18
      %v1275 = vpop.permute.xlu0 %1274
      %1276 = vrot.lane.b32.xlu0 %v563, 18
      %v1277 = vpop.permute.xlu0 %1276
      %1278 = vrot.lane.b32.xlu0 %v630, 18
      %v1279 = vpop.permute.xlu0 %1278
      %1280 = vrot.lane.b32.xlu0 %v566, 18
      %v1281 = vpop.permute.xlu0 %1280
      %1282 = vrot.lane.b32.xlu0 %v631, 18
      %v1283 = vpop.permute.xlu0 %1282
      %1284 = vrot.lane.b32.xlu0 %v569, 18
      %v1285 = vpop.permute.xlu0 %1284
      %1286 = vrot.lane.b32.xlu0 %v632, 18
      %v1287 = vpop.permute.xlu0 %1286
      %1288 = vrot.lane.b32.xlu0 %v572, 18
      %v1289 = vpop.permute.xlu0 %1288
      %1290 = vrot.lane.b32.xlu0 %v633, 18
      %v1291 = vpop.permute.xlu0 %1290
      %1292 = vrot.lane.b32.xlu0 %v575, 18
      %v1293 = vpop.permute.xlu0 %1292
      %1294 = vrot.lane.b32.xlu0 %v634, 18
      %v1295 = vpop.permute.xlu0 %1294
      %1296 = vrot.lane.b32.xlu0 %v578, 18
      %v1297 = vpop.permute.xlu0 %1296
      %1298 = vrot.lane.b32.xlu0 %v635, 18
      %v1299 = vpop.permute.xlu0 %1298
      %1300 = vrot.lane.b32.xlu0 %v581, 18
      %v1301 = vpop.permute.xlu0 %1300
      %1302 = vrot.lane.b32.xlu0 %v636, 18
      %v1303 = vpop.permute.xlu0 %1302
      %1304 = vrot.lane.b32.xlu0 %v584, 18
      %v1305 = vpop.permute.xlu0 %1304
      %1338 = vrot.lane.b32.xlu0 %v448, 21
      %v1339 = vpop.permute.xlu0 %1338
      %1340 = vrot.lane.b32.xlu0 %v449, 21
      %v1341 = vpop.permute.xlu0 %1340
      %1342 = vrot.lane.b32.xlu0 %v450, 21
      %v1343 = vpop.permute.xlu0 %1342
      %1344 = vrot.lane.b32.xlu0 %v451, 21
      %v1345 = vpop.permute.xlu0 %1344
      %1346 = vrot.lane.b32.xlu0 %v452, 21
      %v1347 = vpop.permute.xlu0 %1346
      %1348 = vrot.lane.b32.xlu0 %v453, 21
      %v1349 = vpop.permute.xlu0 %1348
      %1350 = vrot.lane.b32.xlu0 %v454, 21
      %v1351 = vpop.permute.xlu0 %1350
      %1352 = vrot.lane.b32.xlu0 %v455, 21
      %v1353 = vpop.permute.xlu0 %1352
      %1354 = vrot.lane.b32.xlu0 %v456, 21
      %v1355 = vpop.permute.xlu0 %1354
      %1356 = vrot.lane.b32.xlu0 %v457, 21
      %v1357 = vpop.permute.xlu0 %1356
      %1358 = vrot.lane.b32.xlu0 %v458, 21
      %v1359 = vpop.permute.xlu0 %1358
      %1360 = vrot.lane.b32.xlu0 %v459, 21
      %v1361 = vpop.permute.xlu0 %1360
      %1362 = vrot.lane.b32.xlu0 %v460, 21
      %v1363 = vpop.permute.xlu0 %1362
      %1364 = vrot.lane.b32.xlu0 %v461, 21
      %v1365 = vpop.permute.xlu0 %1364
      %1366 = vrot.lane.b32.xlu0 %v462, 21
      %v1367 = vpop.permute.xlu0 %1366
      %1368 = vrot.lane.b32.xlu0 %v463, 21
      %v1369 = vpop.permute.xlu0 %1368
      %1370 = vrot.lane.b32.xlu0 %v464, 21
      %v1371 = vpop.permute.xlu0 %1370
      %1372 = vrot.lane.b32.xlu0 %v465, 21
      %v1373 = vpop.permute.xlu0 %1372
      %1374 = vrot.lane.b32.xlu0 %v466, 21
      %v1375 = vpop.permute.xlu0 %1374
      %1376 = vrot.lane.b32.xlu0 %v467, 21
      %v1377 = vpop.permute.xlu0 %1376
      %1378 = vrot.lane.b32.xlu0 %v468, 21
      %v1379 = vpop.permute.xlu0 %1378
      %1380 = vrot.lane.b32.xlu0 %v469, 21
      %v1381 = vpop.permute.xlu0 %1380
      %1382 = vrot.lane.b32.xlu0 %v470, 21
      %v1383 = vpop.permute.xlu0 %1382
      %1384 = vrot.lane.b32.xlu0 %v471, 21
      %v1385 = vpop.permute.xlu0 %1384
      %1386 = vrot.lane.b32.xlu0 %v472, 21
      %v1387 = vpop.permute.xlu0 %1386
      %1388 = vrot.lane.b32.xlu0 %v473, 21
      %v1389 = vpop.permute.xlu0 %1388
      %1390 = vrot.lane.b32.xlu0 %v474, 21
      %v1391 = vpop.permute.xlu0 %1390
      %1392 = vrot.lane.b32.xlu0 %v475, 21
      %v1393 = vpop.permute.xlu0 %1392
      %1394 = vrot.lane.b32.xlu0 %v476, 21
      %v1395 = vpop.permute.xlu0 %1394
      %1396 = vrot.lane.b32.xlu0 %v477, 21
      %v1397 = vpop.permute.xlu0 %1396
      %1398 = vrot.lane.b32.xlu0 %v492, 21
      %v1399 = vpop.permute.xlu0 %1398
      %1400 = vrot.lane.b32.xlu0 %v493, 21
      %v1401 = vpop.permute.xlu0 %1400
      %1435 = vrot.lane.b32.xlu0 %v646, 24
      %v1436 = vpop.permute.xlu0 %1435
      %1437 = vrot.lane.b32.xlu0 %v712, 24
      %v1438 = vpop.permute.xlu0 %1437
      %1439 = vrot.lane.b32.xlu0 %v649, 24
      %v1440 = vpop.permute.xlu0 %1439
      %1441 = vrot.lane.b32.xlu0 %v713, 24
      %v1442 = vpop.permute.xlu0 %1441
      %1443 = vrot.lane.b32.xlu0 %v652, 24
      %v1444 = vpop.permute.xlu0 %1443
      %1445 = vrot.lane.b32.xlu0 %v714, 24
      %v1446 = vpop.permute.xlu0 %1445
      %1447 = vrot.lane.b32.xlu0 %v655, 24
      %v1448 = vpop.permute.xlu0 %1447
      %1449 = vrot.lane.b32.xlu0 %v715, 24
      %v1450 = vpop.permute.xlu0 %1449
      %1451 = vrot.lane.b32.xlu0 %v658, 24
      %v1452 = vpop.permute.xlu0 %1451
      %1453 = vrot.lane.b32.xlu0 %v716, 24
      %v1454 = vpop.permute.xlu0 %1453
      %1455 = vrot.lane.b32.xlu0 %v661, 24
      %v1456 = vpop.permute.xlu0 %1455
      %1457 = vrot.lane.b32.xlu0 %v717, 24
      %v1458 = vpop.permute.xlu0 %1457
      %1459 = vrot.lane.b32.xlu0 %v664, 24
      %v1460 = vpop.permute.xlu0 %1459
      %1461 = vrot.lane.b32.xlu0 %v718, 24
      %v1462 = vpop.permute.xlu0 %1461
      %1463 = vrot.lane.b32.xlu0 %v667, 24
      %v1464 = vpop.permute.xlu0 %1463
      %1465 = vrot.lane.b32.xlu0 %v719, 24
      %v1466 = vpop.permute.xlu0 %1465
      %1467 = vrot.lane.b32.xlu0 %v670, 24
      %v1468 = vpop.permute.xlu0 %1467
      %1469 = vrot.lane.b32.xlu0 %v720, 24
      %v1470 = vpop.permute.xlu0 %1469
      %1471 = vrot.lane.b32.xlu0 %v673, 24
      %v1472 = vpop.permute.xlu0 %1471
      %1473 = vrot.lane.b32.xlu0 %v721, 24
      %v1474 = vpop.permute.xlu0 %1473
      %1475 = vrot.lane.b32.xlu0 %v676, 24
      %v1476 = vpop.permute.xlu0 %1475
      %1477 = vrot.lane.b32.xlu0 %v722, 24
      %v1478 = vpop.permute.xlu0 %1477
      %1479 = vrot.lane.b32.xlu0 %v679, 24
      %v1480 = vpop.permute.xlu0 %1479
      %1481 = vrot.lane.b32.xlu0 %v723, 24
      %v1482 = vpop.permute.xlu0 %1481
      %1483 = vrot.lane.b32.xlu0 %v682, 24
      %v1484 = vpop.permute.xlu0 %1483
      %1485 = vrot.lane.b32.xlu0 %v724, 24
      %v1486 = vpop.permute.xlu0 %1485
      %1487 = vrot.lane.b32.xlu0 %v685, 24
      %v1488 = vpop.permute.xlu0 %1487
      %1489 = vrot.lane.b32.xlu0 %v725, 24
      %v1490 = vpop.permute.xlu0 %1489
      %1491 = vrot.lane.b32.xlu0 %v688, 24
      %v1492 = vpop.permute.xlu0 %1491
      %1493 = vrot.lane.b32.xlu0 %v726, 24
      %v1494 = vpop.permute.xlu0 %1493
      %1495 = vrot.lane.b32.xlu0 %v691, 24
      %v1496 = vpop.permute.xlu0 %1495
      %1497 = vrot.lane.b32.xlu0 %v727, 24
      %v1498 = vpop.permute.xlu0 %1497
      %vm1531 = vcmask 23552
      %v1532 = vsel %vm1531, %v619, %v729
      %v1533 = vsel %vm1531, %v533, %v731
      %v1534 = vsel %vm1531, %v620, %v733
      %v1535 = vsel %vm1531, %v536, %v735
      %v1536 = vsel %vm1531, %v621, %v737
      %v1537 = vsel %vm1531, %v539, %v739
      %v1538 = vsel %vm1531, %v622, %v741
      %v1539 = vsel %vm1531, %v542, %v743
      %v1540 = vsel %vm1531, %v623, %v745
      %v1541 = vsel %vm1531, %v545, %v747
      %v1542 = vsel %vm1531, %v624, %v749
      %v1543 = vsel %vm1531, %v548, %v751
      %v1544 = vsel %vm1531, %v625, %v753
      %v1545 = vsel %vm1531, %v551, %v755
      %v1546 = vsel %vm1531, %v626, %v757
      %v1547 = vsel %vm1531, %v554, %v759
      %v1548 = vsel %vm1531, %v627, %v761
      %v1549 = vsel %vm1531, %v557, %v763
      %v1550 = vsel %vm1531, %v628, %v765
      %v1551 = vsel %vm1531, %v560, %v767
      %v1552 = vsel %vm1531, %v629, %v769
      %v1553 = vsel %vm1531, %v563, %v771
      %v1554 = vsel %vm1531, %v630, %v773
      %v1555 = vsel %vm1531, %v566, %v775
      %v1556 = vsel %vm1531, %v631, %v777
      %v1557 = vsel %vm1531, %v569, %v779
      %v1558 = vsel %vm1531, %v632, %v781
      %v1559 = vsel %vm1531, %v572, %v783
      %v1560 = vsel %vm1531, %v633, %v785
      %v1561 = vsel %vm1531, %v575, %v787
      %v1562 = vsel %vm1531, %v634, %v789
      %v1563 = vsel %vm1531, %v578, %v791
      %vm1564 = vcmask 48128
      %v1565 = vsel %vm1564, %v1532, %v841
      %v1566 = vsel %vm1564, %v1533, %v843
      %v1567 = vsel %vm1564, %v1534, %v845
      %v1568 = vsel %vm1564, %v1535, %v847
      %v1569 = vsel %vm1564, %v1536, %v849
      %v1570 = vsel %vm1564, %v1537, %v851
      %v1571 = vsel %vm1564, %v1538, %v853
      %v1572 = vsel %vm1564, %v1539, %v855
      %v1573 = vsel %vm1564, %v1540, %v857
      %v1574 = vsel %vm1564, %v1541, %v859
      %v1575 = vsel %vm1564, %v1542, %v861
      %v1576 = vsel %vm1564, %v1543, %v863
      %v1577 = vsel %vm1564, %v1544, %v865
      %v1578 = vsel %vm1564, %v1545, %v867
      %v1579 = vsel %vm1564, %v1546, %v869
      %v1580 = vsel %vm1564, %v1547, %v871
      %v1581 = vsel %vm1564, %v1548, %v873
      %v1582 = vsel %vm1564, %v1549, %v875
      %v1583 = vsel %vm1564, %v1550, %v877
      %v1584 = vsel %vm1564, %v1551, %v879
      %v1585 = vsel %vm1564, %v1552, %v881
      %v1586 = vsel %vm1564, %v1553, %v883
      %v1587 = vsel %vm1564, %v1554, %v885
      %v1588 = vsel %vm1564, %v1555, %v887
      %v1589 = vsel %vm1564, %v1556, %v889
      %v1590 = vsel %vm1564, %v1557, %v891
      %v1591 = vsel %vm1564, %v1558, %v893
      %v1592 = vsel %vm1564, %v1559, %v895
      %v1593 = vsel %vm1564, %v1560, %v897
      %v1594 = vsel %vm1564, %v1561, %v899
      %v1595 = vsel %vm1564, %v1562, %v901
      %v1596 = vsel %vm1564, %v1563, %v903
      %vm1597 = vcmask 72704
      %v1598 = vsel %vm1597, %v1565, %v953
      %v1599 = vsel %vm1597, %v1566, %v955
      %v1600 = vsel %vm1597, %v1567, %v957
      %v1601 = vsel %vm1597, %v1568, %v959
      %v1602 = vsel %vm1597, %v1569, %v961
      %v1603 = vsel %vm1597, %v1570, %v963
      %v1604 = vsel %vm1597, %v1571, %v965
      %v1605 = vsel %vm1597, %v1572, %v967
      %v1606 = vsel %vm1597, %v1573, %v969
      %v1607 = vsel %vm1597, %v1574, %v971
      %v1608 = vsel %vm1597, %v1575, %v973
      %v1609 = vsel %vm1597, %v1576, %v975
      %v1610 = vsel %vm1597, %v1577, %v977
      %v1611 = vsel %vm1597, %v1578, %v979
      %v1612 = vsel %vm1597, %v1579, %v981
      %v1613 = vsel %vm1597, %v1580, %v983
      %v1614 = vsel %vm1597, %v1581, %v985
      %v1615 = vsel %vm1597, %v1582, %v987
      %v1616 = vsel %vm1597, %v1583, %v989
      %v1617 = vsel %vm1597, %v1584, %v991
      %v1618 = vsel %vm1597, %v1585, %v993
      %v1619 = vsel %vm1597, %v1586, %v995
      %v1620 = vsel %vm1597, %v1587, %v997
      %v1621 = vsel %vm1597, %v1588, %v999
      %v1622 = vsel %vm1597, %v1589, %v1001
      %v1623 = vsel %vm1597, %v1590, %v1003
      %v1624 = vsel %vm1597, %v1591, %v1005
      %v1625 = vsel %vm1597, %v1592, %v1007
      %v1626 = vsel %vm1597, %v1593, %v1009
      %v1627 = vsel %vm1597, %v1594, %v1011
      %v1628 = vsel %vm1597, %v1595, %v1013
      %v1629 = vsel %vm1597, %v1596, %v1015
      %vm1630 = vcmask 97280
      %v1631 = vsel %vm1630, %v1598, %v1049
      %v1632 = vsel %vm1630, %v1599, %v1051
      %v1633 = vsel %vm1630, %v1600, %v1053
      %v1634 = vsel %vm1630, %v1601, %v1055
      %v1635 = vsel %vm1630, %v1602, %v1057
      %v1636 = vsel %vm1630, %v1603, %v1059
      %v1637 = vsel %vm1630, %v1604, %v1061
      %v1638 = vsel %vm1630, %v1605, %v1063
      %v1639 = vsel %vm1630, %v1606, %v1065
      %v1640 = vsel %vm1630, %v1607, %v1067
      %v1641 = vsel %vm1630, %v1608, %v1069
      %v1642 = vsel %vm1630, %v1609, %v1071
      %v1643 = vsel %vm1630, %v1610, %v1073
      %v1644 = vsel %vm1630, %v1611, %v1075
      %v1645 = vsel %vm1630, %v1612, %v1077
      %v1646 = vsel %vm1630, %v1613, %v1079
      %v1647 = vsel %vm1630, %v1614, %v1081
      %v1648 = vsel %vm1630, %v1615, %v1083
      %v1649 = vsel %vm1630, %v1616, %v1085
      %v1650 = vsel %vm1630, %v1617, %v1087
      %v1651 = vsel %vm1630, %v1618, %v1089
      %v1652 = vsel %vm1630, %v1619, %v1091
      %v1653 = vsel %vm1630, %v1620, %v1093
      %v1654 = vsel %vm1630, %v1621, %v1095
      %v1655 = vsel %vm1630, %v1622, %v1097
      %v1656 = vsel %vm1630, %v1623, %v1099
      %v1657 = vsel %vm1630, %v1624, %v1101
      %v1658 = vsel %vm1630, %v1625, %v1103
      %v1659 = vsel %vm1630, %v1626, %v1105
      %v1660 = vsel %vm1630, %v1627, %v1107
      %v1661 = vsel %vm1630, %v1628, %v1109
      %v1662 = vsel %vm1630, %v1629, %v1111
      %vm1663 = vcmask 121856
      %v1664 = vsel %vm1663, %v1631, %v1146
      %v1665 = vsel %vm1663, %v1632, %v1148
      %v1666 = vsel %vm1663, %v1633, %v1150
      %v1667 = vsel %vm1663, %v1634, %v1152
      %v1668 = vsel %vm1663, %v1635, %v1154
      %v1669 = vsel %vm1663, %v1636, %v1156
      %v1670 = vsel %vm1663, %v1637, %v1158
      %v1671 = vsel %vm1663, %v1638, %v1160
      %v1672 = vsel %vm1663, %v1639, %v1162
      %v1673 = vsel %vm1663, %v1640, %v1164
      %v1674 = vsel %vm1663, %v1641, %v1166
      %v1675 = vsel %vm1663, %v1642, %v1168
      %v1676 = vsel %vm1663, %v1643, %v1170
      %v1677 = vsel %vm1663, %v1644, %v1172
      %v1678 = vsel %vm1663, %v1645, %v1174
      %v1679 = vsel %vm1663, %v1646, %v1176
      %v1680 = vsel %vm1663, %v1647, %v1178
      %v1681 = vsel %vm1663, %v1648, %v1180
      %v1682 = vsel %vm1663, %v1649, %v1182
      %v1683 = vsel %vm1663, %v1650, %v1184
      %v1684 = vsel %vm1663, %v1651, %v1186
      %v1685 = vsel %vm1663, %v1652, %v1188
      %v1686 = vsel %vm1663, %v1653, %v1190
      %v1687 = vsel %vm1663, %v1654, %v1192
      %v1688 = vsel %vm1663, %v1655, %v1194
      %v1689 = vsel %vm1663, %v1656, %v1196
      %v1690 = vsel %vm1663, %v1657, %v1198
      %v1691 = vsel %vm1663, %v1658, %v1200
      %v1692 = vsel %vm1663, %v1659, %v1202
      %v1693 = vsel %vm1663, %v1660, %v1204
      %v1694 = vsel %vm1663, %v1661, %v1206
      %v1695 = vsel %vm1663, %v1662, %v1208
      %vm1696 = vcmask 146432
      %v1697 = vsel %vm1696, %v1664, %v1243
      %v1698 = vsel %vm1696, %v1665, %v1245
      %v1699 = vsel %vm1696, %v1666, %v1247
      %v1700 = vsel %vm1696, %v1667, %v1249
      %v1701 = vsel %vm1696, %v1668, %v1251
      %v1702 = vsel %vm1696, %v1669, %v1253
      %v1703 = vsel %vm1696, %v1670, %v1255
      %v1704 = vsel %vm1696, %v1671, %v1257
      %v1705 = vsel %vm1696, %v1672, %v1259
      %v1706 = vsel %vm1696, %v1673, %v1261
      %v1707 = vsel %vm1696, %v1674, %v1263
      %v1708 = vsel %vm1696, %v1675, %v1265
      %v1709 = vsel %vm1696, %v1676, %v1267
      %v1710 = vsel %vm1696, %v1677, %v1269
      %v1711 = vsel %vm1696, %v1678, %v1271
      %v1712 = vsel %vm1696, %v1679, %v1273
      %v1713 = vsel %vm1696, %v1680, %v1275
      %v1714 = vsel %vm1696, %v1681, %v1277
      %v1715 = vsel %vm1696, %v1682, %v1279
      %v1716 = vsel %vm1696, %v1683, %v1281
      %v1717 = vsel %vm1696, %v1684, %v1283
      %v1718 = vsel %vm1696, %v1685, %v1285
      %v1719 = vsel %vm1696, %v1686, %v1287
      %v1720 = vsel %vm1696, %v1687, %v1289
      %v1721 = vsel %vm1696, %v1688, %v1291
      %v1722 = vsel %vm1696, %v1689, %v1293
      %v1723 = vsel %vm1696, %v1690, %v1295
      %v1724 = vsel %vm1696, %v1691, %v1297
      %v1725 = vsel %vm1696, %v1692, %v1299
      %v1726 = vsel %vm1696, %v1693, %v1301
      %v1727 = vsel %vm1696, %v1694, %v1303
      %v1728 = vsel %vm1696, %v1695, %v1305
      %vm1729 = vcmask 171008
      %v1730 = vsel %vm1729, %v1697, %v1339
      %v1731 = vsel %vm1729, %v1698, %v1341
      %v1732 = vsel %vm1729, %v1699, %v1343
      %v1733 = vsel %vm1729, %v1700, %v1345
      %v1734 = vsel %vm1729, %v1701, %v1347
      %v1735 = vsel %vm1729, %v1702, %v1349
      %v1736 = vsel %vm1729, %v1703, %v1351
      %v1737 = vsel %vm1729, %v1704, %v1353
      %v1738 = vsel %vm1729, %v1705, %v1355
      %v1739 = vsel %vm1729, %v1706, %v1357
      %v1740 = vsel %vm1729, %v1707, %v1359
      %v1741 = vsel %vm1729, %v1708, %v1361
      %v1742 = vsel %vm1729, %v1709, %v1363
      %v1743 = vsel %vm1729, %v1710, %v1365
      %v1744 = vsel %vm1729, %v1711, %v1367
      %v1745 = vsel %vm1729, %v1712, %v1369
      %v1746 = vsel %vm1729, %v1713, %v1371
      %v1747 = vsel %vm1729, %v1714, %v1373
      %v1748 = vsel %vm1729, %v1715, %v1375
      %v1749 = vsel %vm1729, %v1716, %v1377
      %v1750 = vsel %vm1729, %v1717, %v1379
      %v1751 = vsel %vm1729, %v1718, %v1381
      %v1752 = vsel %vm1729, %v1719, %v1383
      %v1753 = vsel %vm1729, %v1720, %v1385
      %v1754 = vsel %vm1729, %v1721, %v1387
      %v1755 = vsel %vm1729, %v1722, %v1389
      %v1756 = vsel %vm1729, %v1723, %v1391
      %v1757 = vsel %vm1729, %v1724, %v1393
      %v1758 = vsel %vm1729, %v1725, %v1395
      %v1759 = vsel %vm1729, %v1726, %v1397
      %v1760 = vsel %vm1729, %v1727, %v1399
      %v1761 = vsel %vm1729, %v1728, %v1401
      %vm1762 = vcmask 195584
      %v1763 = vsel %vm1762, %v1730, %v1436
      %v1764 = vsel %vm1762, %v1731, %v1438
      %v1765 = vsel %vm1762, %v1732, %v1440
      %v1766 = vsel %vm1762, %v1733, %v1442
      %v1767 = vsel %vm1762, %v1734, %v1444
      %v1768 = vsel %vm1762, %v1735, %v1446
      %v1769 = vsel %vm1762, %v1736, %v1448
      %v1770 = vsel %vm1762, %v1737, %v1450
      %v1771 = vsel %vm1762, %v1738, %v1452
      %v1772 = vsel %vm1762, %v1739, %v1454
      %v1773 = vsel %vm1762, %v1740, %v1456
      %v1774 = vsel %vm1762, %v1741, %v1458
      %v1775 = vsel %vm1762, %v1742, %v1460
      %v1776 = vsel %vm1762, %v1743, %v1462
      %v1777 = vsel %vm1762, %v1744, %v1464
      %v1778 = vsel %vm1762, %v1745, %v1466
      %v1779 = vsel %vm1762, %v1746, %v1468
      %v1780 = vsel %vm1762, %v1747, %v1470
      %v1781 = vsel %vm1762, %v1748, %v1472
      %v1782 = vsel %vm1762, %v1749, %v1474
      %v1783 = vsel %vm1762, %v1750, %v1476
      %v1784 = vsel %vm1762, %v1751, %v1478
      %v1785 = vsel %vm1762, %v1752, %v1480
      %v1786 = vsel %vm1762, %v1753, %v1482
      %v1787 = vsel %vm1762, %v1754, %v1484
      %v1788 = vsel %vm1762, %v1755, %v1486
      %v1789 = vsel %vm1762, %v1756, %v1488
      %v1790 = vsel %vm1762, %v1757, %v1490
      %v1791 = vsel %vm1762, %v1758, %v1492
      %v1792 = vsel %vm1762, %v1759, %v1494
      %v1793 = vsel %vm1762, %v1760, %v1496
      %v1794 = vsel %vm1762, %v1761, %v1498
      %v1795 = vld [vmem:[%s3] sm:$0xff]
      %v1796 = vld [vmem:[%s3 + $0x8] sm:$0xff]
      %v1797 = vld [vmem:[%s3 + $0x10] sm:$0xff]
      %v1798 = vld [vmem:[%s3 + $0x18] sm:$0x7]
      %v1799 = vld [vmem:[%s4] sm:$0x1]
      %v1801 = vlaneseq
      %v1802 = vshrl.u32 %v1801, 7
      %v1803 = vsub.s32 0, %v1802
      %v1804 = vrot.slane %v1799, %v1803
      %vm1806 = vcmask 220160
      %v1808 = vsel %vm1806, %v1763, 0
      %v1811 = vsel %vm1806, %v1764, 0
      %v1814 = vsel %vm1806, %v1765, 0
      %v1817 = vsel %vm1806, %v1766, 0
      %v1820 = vsel %vm1806, %v1767, 0
      %v1823 = vsel %vm1806, %v1768, 0
      %v1826 = vsel %vm1806, %v1769, 0
      %v1829 = vsel %vm1806, %v1770, 0
      %v1832 = vsel %vm1806, %v1771, 0
      %v1835 = vsel %vm1806, %v1772, 0
      %v1838 = vsel %vm1806, %v1773, 0
      %v1841 = vsel %vm1806, %v1774, 0
      %v1844 = vsel %vm1806, %v1775, 0
      %v1847 = vsel %vm1806, %v1776, 0
      %v1850 = vsel %vm1806, %v1777, 0
      %v1853 = vsel %vm1806, %v1778, 0
      %v1856 = vsel %vm1806, %v1779, 0
      %v1859 = vsel %vm1806, %v1780, 0
      %v1862 = vsel %vm1806, %v1781, 0
      %v1865 = vsel %vm1806, %v1782, 0
      %v1868 = vsel %vm1806, %v1783, 0
      %v1871 = vsel %vm1806, %v1784, 0
      %v1874 = vsel %vm1806, %v1785, 0
      %v1877 = vsel %vm1806, %v1786, 0
      %v1880 = vsel %vm1806, %v1787, 0
      %v1883 = vsel %vm1806, %v1788, 0
      %v1886 = vsel %vm1806, %v1789, 0
      %v1889 = vsel %vm1806, %v1790, 0
      %v1892 = vsel %vm1806, %v1791, 0
      %v1895 = vsel %vm1806, %v1792, 0
      %v1898 = vsel %vm1806, %v1793, 0
      %v1901 = vsel %vm1806, %v1794, 0
      %vm1903 = vcmask 1042432
      %v1905 = vsel %vm1903, %v1798, 0
      %1907 = vmatprep.subr.mxu0 0.0
      %v1908 = vand.u32 %v1795, 4294901760
      %1909 = vmatpush1.msra.mxu0 %v1908
      %1910 = vmatprep.subr.mxu0 0.0
      %v1911 = vand.u32 %v1796, 4294901760
      %1912 = vmatpush1.msra.mxu0 %v1911
      %1913 = vmatprep.subr.mxu0 0.0
      %v1914 = vand.u32 %v1797, 4294901760
      %1915 = vmatpush1.msra.mxu0 %v1914
      %1916 = vmatprep.subr.mxu0 0.0
      %v1917 = vand.u32 %v1905, 4294901760
      %1918 = vmatpush1.msra.mxu0 %v1917
      %1919 = vmatprep.subr.mxu0 0.0
      %1920 = vmatpush1.msra.mxu0 0.0
      %1921 = vmatprep.subr.mxu0 0.0
      %1922 = vmatpush1.msra.mxu0 0.0
      %1923 = vmatprep.subr.mxu0 0.0
      %1924 = vmatpush1.msra.mxu0 0.0
      %1925 = vmatprep.subr.mxu0 0.0
      %1926 = vmatpush1.msra.mxu0 0.0
      %1927 = vmatprep.subr.mxu0 0.0
      %1928 = vmatpush1.msra.mxu0 0.0
      %1929 = vmatprep.subr.mxu0 0.0
      %1930 = vmatpush1.msra.mxu0 0.0
      %1931 = vmatprep.subr.mxu0 0.0
      %1932 = vmatpush1.msra.mxu0 0.0
      %1933 = vmatprep.subr.mxu0 0.0
      %1934 = vmatpush1.msra.mxu0 0.0
      %1935 = vmatprep.subr.mxu0 0.0
      %1936 = vmatpush1.msra.mxu0 0.0
      %1937 = vmatprep.subr.mxu0 0.0
      %1938 = vmatpush1.msra.mxu0 0.0
      %1939 = vmatprep.subr.mxu0 0.0
      %1940 = vmatpush1.msra.mxu0 0.0
      %1941 = vmatprep.subr.mxu0 0.0
      %1942 = vmatpush1.msra.mxu0 0.0
      %1943 = vmatprep.subr.mxu0 0.0
      %1944 = vmatpush1.msra.mxu0 0.0
      %1945 = vmatprep.subr.mxu0 0.0
      %1946 = vmatpush1.msra.mxu0 0.0
      %1947 = vmatprep.subr.mxu0 0.0
      %1948 = vmatpush1.msra.mxu0 0.0
      %1949 = vmatprep.subr.mxu0 0.0
      %1950 = vmatpush1.msra.mxu0 0.0
      %1951 = vmatprep.subr.mxu0 0.0
      %1952 = vmatpush1.msra.mxu0 0.0
      %1953 = vmatprep.subr.mxu0 0.0
      %1954 = vmatpush1.msra.mxu0 0.0
      %1955 = vmatprep.subr.mxu0 0.0
      %1956 = vmatpush1.msra.mxu0 0.0
      %1957 = vmatprep.subr.mxu0 0.0
      %1958 = vmatpush1.msra.mxu0 0.0
      %1959 = vmatprep.subr.mxu0 0.0
      %1960 = vmatpush1.msra.mxu0 0.0
      %1961 = vmatprep.subr.mxu0 0.0
      %1962 = vmatpush1.msra.mxu0 0.0
      %1963 = vmatprep.subr.mxu0 0.0
      %1964 = vmatpush1.msra.mxu0 0.0
      %1965 = vmatprep.subr.mxu0 0.0
      %1966 = vmatpush1.msra.mxu0 0.0
      %1967 = vmatprep.subr.mxu0 0.0
      %1968 = vmatpush1.msra.mxu0 0.0
      %1969 = vmatprep.subr.mxu0 0.0
      %1970 = vmatpush1.msra.mxu0 0.0
      %1971 = vmatprep.subr.mxu0 0.0
      %1972 = vmatpush1.msra.mxu0 0.0
      %1973 = vmatprep.subr.mxu0 0.0
      %1974 = vmatpush1.msra.mxu0 0.0
      %1975 = vmatprep.mubr.f32.mxu0 0.0
      %v1976 = vand.u32 %v1808, 4294901760
      %v1977 = vsub.f32 %v1808, %v1976
      %v1978 = vand.u32 %v1977, 4294901760
      %v1979 = vsub.f32 %v1977, %v1978
      %v1980 = vand.u32 %v1979, 4294901760
      %1981 = vmatmul.mubr.f32.gmra.mrb[0].mxu0 %v1980
      %v1982 = vpop.f32.mrb[0].mxu0
      %v1983 = vadd.f32 %v1804, %v1982
      %v1984 = vpop.f32.mrb[0].mxu0
      %1985 = vmatprep.mubr.f32.mxu0 0.0
      %v1986 = vand.u32 %v1811, 4294901760
      %v1987 = vsub.f32 %v1811, %v1986
      %v1988 = vand.u32 %v1987, 4294901760
      %v1989 = vsub.f32 %v1987, %v1988
      %v1990 = vand.u32 %v1989, 4294901760
      %1991 = vmatmul.mubr.f32.gmra.mrb[0].mxu0 %v1990
      %v1992 = vpop.f32.mrb[0].mxu0
      %v1993 = vadd.f32 %v1804, %v1992
      %v1994 = vpop.f32.mrb[0].mxu0
      %1995 = vmatprep.mubr.f32.mxu0 0.0
      %v1996 = vand.u32 %v1814, 4294901760
      %v1997 = vsub.f32 %v1814, %v1996
      %v1998 = vand.u32 %v1997, 4294901760
      %v1999 = vsub.f32 %v1997, %v1998
      %v2000 = vand.u32 %v1999, 4294901760
      %2001 = vmatmul.mubr.f32.gmra.mrb[0].mxu0 %v2000
      %v2002 = vpop.f32.mrb[0].mxu0
      %v2003 = vadd.f32 %v1804, %v2002
      %v2004 = vpop.f32.mrb[0].mxu0
      %2005 = vmatprep.mubr.f32.mxu0 0.0
      %v2006 = vand.u32 %v1817, 4294901760
      %v2007 = vsub.f32 %v1817, %v2006
      %v2008 = vand.u32 %v2007, 4294901760
      %v2009 = vsub.f32 %v2007, %v2008
      %v2010 = vand.u32 %v2009, 4294901760
      %2011 = vmatmul.mubr.f32.gmra.mrb[0].mxu0 %v2010
      %v2012 = vpop.f32.mrb[0].mxu0
      %v2013 = vadd.f32 %v1804, %v2012
      %v2014 = vpop.f32.mrb[0].mxu0
      %2015 = vmatprep.mubr.f32.mxu0 0.0
      %v2016 = vand.u32 %v1820, 4294901760
      %v2017 = vsub.f32 %v1820, %v2016
      %v2018 = vand.u32 %v2017, 4294901760
      %v2019 = vsub.f32 %v2017, %v2018
      %v2020 = vand.u32 %v2019, 4294901760
      %2021 = vmatmul.mubr.f32.gmra.mrb[0].mxu0 %v2020
      %v2022 = vpop.f32.mrb[0].mxu0
      %v2023 = vadd.f32 %v1804, %v2022
      %v2024 = vpop.f32.mrb[0].mxu0
      %2025 = vmatprep.mubr.f32.mxu0 0.0
      %v2026 = vand.u32 %v1823, 4294901760
      %v2027 = vsub.f32 %v1823, %v2026
      %v2028 = vand.u32 %v2027, 4294901760
      %v2029 = vsub.f32 %v2027, %v2028
      %v2030 = vand.u32 %v2029, 4294901760
      %2031 = vmatmul.mubr.f32.gmra.mrb[0].mxu0 %v2030
      %v2032 = vpop.f32.mrb[0].mxu0
      %v2033 = vadd.f32 %v1804, %v2032
      %v2034 = vpop.f32.mrb[0].mxu0
      %2035 = vmatprep.mubr.f32.mxu0 0.0
      %v2036 = vand.u32 %v1826, 4294901760
      %v2037 = vsub.f32 %v1826, %v2036
      %v2038 = vand.u32 %v2037, 4294901760
      %v2039 = vsub.f32 %v2037, %v2038
      %v2040 = vand.u32 %v2039, 4294901760
      %2041 = vmatmul.mubr.f32.gmra.mrb[0].mxu0 %v2040
      %v2042 = vpop.f32.mrb[0].mxu0
      %v2043 = vadd.f32 %v1804, %v2042
      %v2044 = vpop.f32.mrb[0].mxu0
      %2045 = vmatprep.mubr.f32.mxu0 0.0
      %v2046 = vand.u32 %v1829, 4294901760
      %v2047 = vsub.f32 %v1829, %v2046
      %v2048 = vand.u32 %v2047, 4294901760
      %v2049 = vsub.f32 %v2047, %v2048
      %v2050 = vand.u32 %v2049, 4294901760
      %2051 = vmatmul.mubr.f32.gmra.mrb[0].mxu0 %v2050
      %v2052 = vpop.f32.mrb[0].mxu0
      %v2053 = vadd.f32 %v1804, %v2052
      %v2054 = vpop.f32.mrb[0].mxu0
      %2055 = vmatprep.mubr.f32.mxu0 0.0
      %v2056 = vand.u32 %v1832, 4294901760
      %v2057 = vsub.f32 %v1832, %v2056
      %v2058 = vand.u32 %v2057, 4294901760
      %v2059 = vsub.f32 %v2057, %v2058
      %v2060 = vand.u32 %v2059, 4294901760
      %2061 = vmatmul.mubr.f32.gmra.mrb[0].mxu0 %v2060
      %v2062 = vpop.f32.mrb[0].mxu0
      %v2063 = vadd.f32 %v1804, %v2062
      %v2064 = vpop.f32.mrb[0].mxu0
      %2065 = vmatprep.mubr.f32.mxu0 0.0
      %v2066 = vand.u32 %v1835, 4294901760
      %v2067 = vsub.f32 %v1835, %v2066
      %v2068 = vand.u32 %v2067, 4294901760
      %v2069 = vsub.f32 %v2067, %v2068
      %v2070 = vand.u32 %v2069, 4294901760
      %2071 = vmatmul.mubr.f32.gmra.mrb[0].mxu0 %v2070
      %v2072 = vpop.f32.mrb[0].mxu0
      %v2073 = vadd.f32 %v1804, %v2072
      %v2074 = vpop.f32.mrb[0].mxu0
      %2075 = vmatprep.mubr.f32.mxu0 0.0
      %v2076 = vand.u32 %v1838, 4294901760
      %v2077 = vsub.f32 %v1838, %v2076
      %v2078 = vand.u32 %v2077, 4294901760
      %v2079 = vsub.f32 %v2077, %v2078
      %v2080 = vand.u32 %v2079, 4294901760
      %2081 = vmatmul.mubr.f32.gmra.mrb[0].mxu0 %v2080
      %v2082 = vpop.f32.mrb[0].mxu0
      %v2083 = vadd.f32 %v1804, %v2082
      %v2084 = vpop.f32.mrb[0].mxu0
      %2085 = vmatprep.mubr.f32.mxu0 0.0
      %v2086 = vand.u32 %v1841, 4294901760
      %v2087 = vsub.f32 %v1841, %v2086
      %v2088 = vand.u32 %v2087, 4294901760
      %v2089 = vsub.f32 %v2087, %v2088
      %v2090 = vand.u32 %v2089, 4294901760
      %2091 = vmatmul.mubr.f32.gmra.mrb[0].mxu0 %v2090
      %v2092 = vpop.f32.mrb[0].mxu0
      %v2093 = vadd.f32 %v1804, %v2092
      %v2094 = vpop.f32.mrb[0].mxu0
      %2095 = vmatprep.mubr.f32.mxu0 0.0
      %v2096 = vand.u32 %v1844, 4294901760
      %v2097 = vsub.f32 %v1844, %v2096
      %v2098 = vand.u32 %v2097, 4294901760
      %v2099 = vsub.f32 %v2097, %v2098
      %v2100 = vand.u32 %v2099, 4294901760
      %2101 = vmatmul.mubr.f32.gmra.mrb[0].mxu0 %v2100
      %v2102 = vpop.f32.mrb[0].mxu0
      %v2103 = vadd.f32 %v1804, %v2102
      %v2104 = vpop.f32.mrb[0].mxu0
      %2105 = vmatprep.mubr.f32.mxu0 0.0
      %v2106 = vand.u32 %v1847, 4294901760
      %v2107 = vsub.f32 %v1847, %v2106
      %v2108 = vand.u32 %v2107, 4294901760
      %v2109 = vsub.f32 %v2107, %v2108
      %v2110 = vand.u32 %v2109, 4294901760
      %2111 = vmatmul.mubr.f32.gmra.mrb[0].mxu0 %v2110
      %v2112 = vpop.f32.mrb[0].mxu0
      %v2113 = vadd.f32 %v1804, %v2112
      %v2114 = vpop.f32.mrb[0].mxu0
      %2115 = vmatprep.mubr.f32.mxu0 0.0
      %v2116 = vand.u32 %v1850, 4294901760
      %v2117 = vsub.f32 %v1850, %v2116
      %v2118 = vand.u32 %v2117, 4294901760
      %v2119 = vsub.f32 %v2117, %v2118
      %v2120 = vand.u32 %v2119, 4294901760
      %2121 = vmatmul.mubr.f32.gmra.mrb[0].mxu0 %v2120
      %v2122 = vpop.f32.mrb[0].mxu0
      %v2123 = vadd.f32 %v1804, %v2122
      %v2124 = vpop.f32.mrb[0].mxu0
      %2125 = vmatprep.mubr.f32.mxu0 0.0
      %v2126 = vand.u32 %v1853, 4294901760
      %v2127 = vsub.f32 %v1853, %v2126
      %v2128 = vand.u32 %v2127, 4294901760
      %v2129 = vsub.f32 %v2127, %v2128
      %v2130 = vand.u32 %v2129, 4294901760
      %2131 = vmatmul.mubr.f32.gmra.mrb[0].mxu0 %v2130
      %v2132 = vpop.f32.mrb[0].mxu0
      %v2133 = vadd.f32 %v1804, %v2132
      %v2134 = vpop.f32.mrb[0].mxu0
      %2135 = vmatprep.mubr.f32.mxu0 0.0
      %v2136 = vand.u32 %v1856, 4294901760
      %v2137 = vsub.f32 %v1856, %v2136
      %v2138 = vand.u32 %v2137, 4294901760
      %v2139 = vsub.f32 %v2137, %v2138
      %v2140 = vand.u32 %v2139, 4294901760
      %2141 = vmatmul.mubr.f32.gmra.mrb[0].mxu0 %v2140
      %v2142 = vpop.f32.mrb[0].mxu0
      %v2143 = vadd.f32 %v1804, %v2142
      %v2144 = vpop.f32.mrb[0].mxu0
      %2145 = vmatprep.mubr.f32.mxu0 0.0
      %v2146 = vand.u32 %v1859, 4294901760
      %v2147 = vsub.f32 %v1859, %v2146
      %v2148 = vand.u32 %v2147, 4294901760
      %v2149 = vsub.f32 %v2147, %v2148
      %v2150 = vand.u32 %v2149, 4294901760
      %2151 = vmatmul.mubr.f32.gmra.mrb[0].mxu0 %v2150
      %v2152 = vpop.f32.mrb[0].mxu0
      %v2153 = vadd.f32 %v1804, %v2152
      %v2154 = vpop.f32.mrb[0].mxu0
      %2155 = vmatprep.mubr.f32.mxu0 0.0
      %v2156 = vand.u32 %v1862, 4294901760
      %v2157 = vsub.f32 %v1862, %v2156
      %v2158 = vand.u32 %v2157, 4294901760
      %v2159 = vsub.f32 %v2157, %v2158
      %v2160 = vand.u32 %v2159, 4294901760
      %2161 = vmatmul.mubr.f32.gmra.mrb[0].mxu0 %v2160
      %v2162 = vpop.f32.mrb[0].mxu0
      %v2163 = vadd.f32 %v1804, %v2162
      %v2164 = vpop.f32.mrb[0].mxu0
      %2165 = vmatprep.mubr.f32.mxu0 0.0
      %v2166 = vand.u32 %v1865, 4294901760
      %v2167 = vsub.f32 %v1865, %v2166
      %v2168 = vand.u32 %v2167, 4294901760
      %v2169 = vsub.f32 %v2167, %v2168
      %v2170 = vand.u32 %v2169, 4294901760
      %2171 = vmatmul.mubr.f32.gmra.mrb[0].mxu0 %v2170
      %v2172 = vpop.f32.mrb[0].mxu0
      %v2173 = vadd.f32 %v1804, %v2172
      %v2174 = vpop.f32.mrb[0].mxu0
      %2175 = vmatprep.mubr.f32.mxu0 0.0
      %v2176 = vand.u32 %v1868, 4294901760
      %v2177 = vsub.f32 %v1868, %v2176
      %v2178 = vand.u32 %v2177, 4294901760
      %v2179 = vsub.f32 %v2177, %v2178
      %v2180 = vand.u32 %v2179, 4294901760
      %2181 = vmatmul.mubr.f32.gmra.mrb[0].mxu0 %v2180
      %v2182 = vpop.f32.mrb[0].mxu0
      %v2183 = vadd.f32 %v1804, %v2182
      %v2184 = vpop.f32.mrb[0].mxu0
      %2185 = vmatprep.mubr.f32.mxu0 0.0
      %v2186 = vand.u32 %v1871, 4294901760
      %v2187 = vsub.f32 %v1871, %v2186
      %v2188 = vand.u32 %v2187, 4294901760
      %v2189 = vsub.f32 %v2187, %v2188
      %v2190 = vand.u32 %v2189, 4294901760
      %2191 = vmatmul.mubr.f32.gmra.mrb[0].mxu0 %v2190
      %v2192 = vpop.f32.mrb[0].mxu0
      %v2193 = vadd.f32 %v1804, %v2192
      %v2194 = vpop.f32.mrb[0].mxu0
      %2195 = vmatprep.mubr.f32.mxu0 0.0
      %v2196 = vand.u32 %v1874, 4294901760
      %v2197 = vsub.f32 %v1874, %v2196
      %v2198 = vand.u32 %v2197, 4294901760
      %v2199 = vsub.f32 %v2197, %v2198
      %v2200 = vand.u32 %v2199, 4294901760
      %2201 = vmatmul.mubr.f32.gmra.mrb[0].mxu0 %v2200
      %v2202 = vpop.f32.mrb[0].mxu0
      %v2203 = vadd.f32 %v1804, %v2202
      %v2204 = vpop.f32.mrb[0].mxu0
      %2205 = vmatprep.mubr.f32.mxu0 0.0
      %v2206 = vand.u32 %v1877, 4294901760
      %v2207 = vsub.f32 %v1877, %v2206
      %v2208 = vand.u32 %v2207, 4294901760
      %v2209 = vsub.f32 %v2207, %v2208
      %v2210 = vand.u32 %v2209, 4294901760
      %2211 = vmatmul.mubr.f32.gmra.mrb[0].mxu0 %v2210
      %v2212 = vpop.f32.mrb[0].mxu0
      %v2213 = vadd.f32 %v1804, %v2212
      %v2214 = vpop.f32.mrb[0].mxu0
      %2215 = vmatprep.mubr.f32.mxu0 0.0
      %v2216 = vand.u32 %v1880, 4294901760
      %v2217 = vsub.f32 %v1880, %v2216
      %v2218 = vand.u32 %v2217, 4294901760
      %v2219 = vsub.f32 %v2217, %v2218
      %v2220 = vand.u32 %v2219, 4294901760
      %2221 = vmatmul.mubr.f32.gmra.mrb[0].mxu0 %v2220
      %v2222 = vpop.f32.mrb[0].mxu0
      %v2223 = vadd.f32 %v1804, %v2222
      %v2224 = vpop.f32.mrb[0].mxu0
      %2225 = vmatprep.mubr.f32.mxu0 0.0
      %v2226 = vand.u32 %v1883, 4294901760
      %v2227 = vsub.f32 %v1883, %v2226
      %v2228 = vand.u32 %v2227, 4294901760
      %v2229 = vsub.f32 %v2227, %v2228
      %v2230 = vand.u32 %v2229, 4294901760
      %2231 = vmatmul.mubr.f32.gmra.mrb[0].mxu0 %v2230
      %v2232 = vpop.f32.mrb[0].mxu0
      %v2233 = vadd.f32 %v1804, %v2232
      %v2234 = vpop.f32.mrb[0].mxu0
      %2235 = vmatprep.mubr.f32.mxu0 0.0
      %v2236 = vand.u32 %v1886, 4294901760
      %v2237 = vsub.f32 %v1886, %v2236
      %v2238 = vand.u32 %v2237, 4294901760
      %v2239 = vsub.f32 %v2237, %v2238
      %v2240 = vand.u32 %v2239, 4294901760
      %2241 = vmatmul.mubr.f32.gmra.mrb[0].mxu0 %v2240
      %v2242 = vpop.f32.mrb[0].mxu0
      %v2243 = vadd.f32 %v1804, %v2242
      %v2244 = vpop.f32.mrb[0].mxu0
      %2245 = vmatprep.mubr.f32.mxu0 0.0
      %v2246 = vand.u32 %v1889, 4294901760
      %v2247 = vsub.f32 %v1889, %v2246
      %v2248 = vand.u32 %v2247, 4294901760
      %v2249 = vsub.f32 %v2247, %v2248
      %v2250 = vand.u32 %v2249, 4294901760
      %2251 = vmatmul.mubr.f32.gmra.mrb[0].mxu0 %v2250
      %v2252 = vpop.f32.mrb[0].mxu0
      %v2253 = vadd.f32 %v1804, %v2252
      %v2254 = vpop.f32.mrb[0].mxu0
      %2255 = vmatprep.mubr.f32.mxu0 0.0
      %v2256 = vand.u32 %v1892, 4294901760
      %v2257 = vsub.f32 %v1892, %v2256
      %v2258 = vand.u32 %v2257, 4294901760
      %v2259 = vsub.f32 %v2257, %v2258
      %v2260 = vand.u32 %v2259, 4294901760
      %2261 = vmatmul.mubr.f32.gmra.mrb[0].mxu0 %v2260
      %v2262 = vpop.f32.mrb[0].mxu0
      %v2263 = vadd.f32 %v1804, %v2262
      %v2264 = vpop.f32.mrb[0].mxu0
      %2265 = vmatprep.mubr.f32.mxu0 0.0
      %v2266 = vand.u32 %v1895, 4294901760
      %v2267 = vsub.f32 %v1895, %v2266
      %v2268 = vand.u32 %v2267, 4294901760
      %v2269 = vsub.f32 %v2267, %v2268
      %v2270 = vand.u32 %v2269, 4294901760
      %2271 = vmatmul.mubr.f32.gmra.mrb[0].mxu0 %v2270
      %v2272 = vpop.f32.mrb[0].mxu0
      %v2273 = vadd.f32 %v1804, %v2272
      %v2274 = vpop.f32.mrb[0].mxu0
      %2275 = vmatprep.mubr.f32.mxu0 0.0
      %v2276 = vand.u32 %v1898, 4294901760
      %v2277 = vsub.f32 %v1898, %v2276
      %v2278 = vand.u32 %v2277, 4294901760
      %v2279 = vsub.f32 %v2277, %v2278
      %v2280 = vand.u32 %v2279, 4294901760
      %2281 = vmatmul.mubr.f32.gmra.mrb[0].mxu0 %v2280
      %v2282 = vpop.f32.mrb[0].mxu0
      %v2283 = vadd.f32 %v1804, %v2282
      %v2284 = vpop.f32.mrb[0].mxu0
      %2285 = vmatprep.mubr.f32.mxu0 0.0
      %v2286 = vand.u32 %v1901, 4294901760
      %v2287 = vsub.f32 %v1901, %v2286
      %v2288 = vand.u32 %v2287, 4294901760
      %v2289 = vsub.f32 %v2287, %v2288
      %v2290 = vand.u32 %v2289, 4294901760
      %2291 = vmatmul.mubr.f32.gmra.mrb[0].mxu0 %v2290
      %v2292 = vpop.f32.mrb[0].mxu0
      %v2293 = vadd.f32 %v1804, %v2292
      %v2294 = vpop.f32.mrb[0].mxu0
      %2295 = vdwg.mxu0
      %2296 = vmatprep.subr.mxu0 0.0
      %v2297 = vand.u32 %v1795, 4294901760
      %v2298 = vsub.f32 %v1795, %v2297
      %v2299 = vand.u32 %v2298, 4294901760
      %v2300 = vsub.f32 %v2298, %v2299
      %v2301 = vand.u32 %v2300, 4294901760
      %2302 = vmatpush1.msra.mxu0 %v2301
      %2303 = vmatprep.subr.mxu0 0.0
      %v2304 = vand.u32 %v1796, 4294901760
      %v2305 = vsub.f32 %v1796, %v2304
      %v2306 = vand.u32 %v2305, 4294901760
      %v2307 = vsub.f32 %v2305, %v2306
      %v2308 = vand.u32 %v2307, 4294901760
      %2309 = vmatpush1.msra.mxu0 %v2308
      %2310 = vmatprep.subr.mxu0 0.0
      %v2311 = vand.u32 %v1797, 4294901760
      %v2312 = vsub.f32 %v1797, %v2311
      %v2313 = vand.u32 %v2312, 4294901760
      %v2314 = vsub.f32 %v2312, %v2313
      %v2315 = vand.u32 %v2314, 4294901760
      %2316 = vmatpush1.msra.mxu0 %v2315
      %2317 = vmatprep.subr.mxu0 0.0
      %v2318 = vand.u32 %v1905, 4294901760
      %v2319 = vsub.f32 %v1905, %v2318
      %v2320 = vand.u32 %v2319, 4294901760
      %v2321 = vsub.f32 %v2319, %v2320
      %v2322 = vand.u32 %v2321, 4294901760
      %2323 = vmatpush1.msra.mxu0 %v2322
      %2324 = vmatprep.subr.mxu0 0.0
      %2325 = vmatpush1.msra.mxu0 0.0
      %2326 = vmatprep.subr.mxu0 0.0
      %2327 = vmatpush1.msra.mxu0 0.0
      %2328 = vmatprep.subr.mxu0 0.0
      %2329 = vmatpush1.msra.mxu0 0.0
      %2330 = vmatprep.subr.mxu0 0.0
      %2331 = vmatpush1.msra.mxu0 0.0
      %2332 = vmatprep.subr.mxu0 0.0
      %2333 = vmatpush1.msra.mxu0 0.0
      %2334 = vmatprep.subr.mxu0 0.0
      %2335 = vmatpush1.msra.mxu0 0.0
      %2336 = vmatprep.subr.mxu0 0.0
      %2337 = vmatpush1.msra.mxu0 0.0
      %2338 = vmatprep.subr.mxu0 0.0
      %2339 = vmatpush1.msra.mxu0 0.0
      %2340 = vmatprep.subr.mxu0 0.0
      %2341 = vmatpush1.msra.mxu0 0.0
      %2342 = vmatprep.subr.mxu0 0.0
      %2343 = vmatpush1.msra.mxu0 0.0
      %2344 = vmatprep.subr.mxu0 0.0
      %2345 = vmatpush1.msra.mxu0 0.0
      %2346 = vmatprep.subr.mxu0 0.0
      %2347 = vmatpush1.msra.mxu0 0.0
      %2348 = vmatprep.subr.mxu0 0.0
      %2349 = vmatpush1.msra.mxu0 0.0
      %2350 = vmatprep.subr.mxu0 0.0
      %2351 = vmatpush1.msra.mxu0 0.0
      %2352 = vmatprep.subr.mxu0 0.0
      %2353 = vmatpush1.msra.mxu0 0.0
      %2354 = vmatprep.subr.mxu0 0.0
      %2355 = vmatpush1.msra.mxu0 0.0
      %2356 = vmatprep.subr.mxu0 0.0
      %2357 = vmatpush1.msra.mxu0 0.0
      %2358 = vmatprep.subr.mxu0 0.0
      %2359 = vmatpush1.msra.mxu0 0.0
      %2360 = vmatprep.subr.mxu0 0.0
      %2361 = vmatpush1.msra.mxu0 0.0
      %2362 = vmatprep.subr.mxu0 0.0
      %2363 = vmatpush1.msra.mxu0 0.0
      %2364 = vmatprep.subr.mxu0 0.0
      %2365 = vmatpush1.msra.mxu0 0.0
      %2366 = vmatprep.subr.mxu0 0.0
      %2367 = vmatpush1.msra.mxu0 0.0
      %2368 = vmatprep.subr.mxu0 0.0
      %2369 = vmatpush1.msra.mxu0 0.0
      %2370 = vmatprep.subr.mxu0 0.0
      %2371 = vmatpush1.msra.mxu0 0.0
      %2372 = vmatprep.subr.mxu0 0.0
      %2373 = vmatpush1.msra.mxu0 0.0
      %2374 = vmatprep.subr.mxu0 0.0
      %2375 = vmatpush1.msra.mxu0 0.0
      %2376 = vmatprep.subr.mxu0 0.0
      %2377 = vmatpush1.msra.mxu0 0.0
      %2378 = vmatprep.subr.mxu0 0.0
      %2379 = vmatpush1.msra.mxu0 0.0
      %2380 = vmatprep.mubr.f32.mxu0 0.0
      %v2381 = vand.u32 %v1808, 4294901760
      %2382 = vmatmul.mubr.f32.gmra.mrb[0].mxu0 %v2381
      %v2383 = vpop.f32.mrb[0].mxu0
      %v2384 = vadd.f32 %v1983, %v2383
      %v2385 = vpop.f32.mrb[0].mxu0
      %2386 = vmatprep.mubr.f32.mxu0 0.0
      %v2387 = vand.u32 %v1811, 4294901760
      %2388 = vmatmul.mubr.f32.gmra.mrb[0].mxu0 %v2387
      %v2389 = vpop.f32.mrb[0].mxu0
      %v2390 = vadd.f32 %v1993, %v2389
      %v2391 = vpop.f32.mrb[0].mxu0
      %2392 = vmatprep.mubr.f32.mxu0 0.0
      %v2393 = vand.u32 %v1814, 4294901760
      %2394 = vmatmul.mubr.f32.gmra.mrb[0].mxu0 %v2393
      %v2395 = vpop.f32.mrb[0].mxu0
      %v2396 = vadd.f32 %v2003, %v2395
      %v2397 = vpop.f32.mrb[0].mxu0
      %2398 = vmatprep.mubr.f32.mxu0 0.0
      %v2399 = vand.u32 %v1817, 4294901760
      %2400 = vmatmul.mubr.f32.gmra.mrb[0].mxu0 %v2399
      %v2401 = vpop.f32.mrb[0].mxu0
      %v2402 = vadd.f32 %v2013, %v2401
      %v2403 = vpop.f32.mrb[0].mxu0
      %2404 = vmatprep.mubr.f32.mxu0 0.0
      %v2405 = vand.u32 %v1820, 4294901760
      %2406 = vmatmul.mubr.f32.gmra.mrb[0].mxu0 %v2405
      %v2407 = vpop.f32.mrb[0].mxu0
      %v2408 = vadd.f32 %v2023, %v2407
      %v2409 = vpop.f32.mrb[0].mxu0
      %2410 = vmatprep.mubr.f32.mxu0 0.0
      %v2411 = vand.u32 %v1823, 4294901760
      %2412 = vmatmul.mubr.f32.gmra.mrb[0].mxu0 %v2411
      %v2413 = vpop.f32.mrb[0].mxu0
      %v2414 = vadd.f32 %v2033, %v2413
      %v2415 = vpop.f32.mrb[0].mxu0
      %2416 = vmatprep.mubr.f32.mxu0 0.0
      %v2417 = vand.u32 %v1826, 4294901760
      %2418 = vmatmul.mubr.f32.gmra.mrb[0].mxu0 %v2417
      %v2419 = vpop.f32.mrb[0].mxu0
      %v2420 = vadd.f32 %v2043, %v2419
      %v2421 = vpop.f32.mrb[0].mxu0
      %2422 = vmatprep.mubr.f32.mxu0 0.0
      %v2423 = vand.u32 %v1829, 4294901760
      %2424 = vmatmul.mubr.f32.gmra.mrb[0].mxu0 %v2423
      %v2425 = vpop.f32.mrb[0].mxu0
      %v2426 = vadd.f32 %v2053, %v2425
      %v2427 = vpop.f32.mrb[0].mxu0
      %2428 = vmatprep.mubr.f32.mxu0 0.0
      %v2429 = vand.u32 %v1832, 4294901760
      %2430 = vmatmul.mubr.f32.gmra.mrb[0].mxu0 %v2429
      %v2431 = vpop.f32.mrb[0].mxu0
      %v2432 = vadd.f32 %v2063, %v2431
      %v2433 = vpop.f32.mrb[0].mxu0
      %2434 = vmatprep.mubr.f32.mxu0 0.0
      %v2435 = vand.u32 %v1835, 4294901760
      %2436 = vmatmul.mubr.f32.gmra.mrb[0].mxu0 %v2435
      %v2437 = vpop.f32.mrb[0].mxu0
      %v2438 = vadd.f32 %v2073, %v2437
      %v2439 = vpop.f32.mrb[0].mxu0
      %2440 = vmatprep.mubr.f32.mxu0 0.0
      %v2441 = vand.u32 %v1838, 4294901760
      %2442 = vmatmul.mubr.f32.gmra.mrb[0].mxu0 %v2441
      %v2443 = vpop.f32.mrb[0].mxu0
      %v2444 = vadd.f32 %v2083, %v2443
      %v2445 = vpop.f32.mrb[0].mxu0
      %2446 = vmatprep.mubr.f32.mxu0 0.0
      %v2447 = vand.u32 %v1841, 4294901760
      %2448 = vmatmul.mubr.f32.gmra.mrb[0].mxu0 %v2447
      %v2449 = vpop.f32.mrb[0].mxu0
      %v2450 = vadd.f32 %v2093, %v2449
      %v2451 = vpop.f32.mrb[0].mxu0
      %2452 = vmatprep.mubr.f32.mxu0 0.0
      %v2453 = vand.u32 %v1844, 4294901760
      %2454 = vmatmul.mubr.f32.gmra.mrb[0].mxu0 %v2453
      %v2455 = vpop.f32.mrb[0].mxu0
      %v2456 = vadd.f32 %v2103, %v2455
      %v2457 = vpop.f32.mrb[0].mxu0
      %2458 = vmatprep.mubr.f32.mxu0 0.0
      %v2459 = vand.u32 %v1847, 4294901760
      %2460 = vmatmul.mubr.f32.gmra.mrb[0].mxu0 %v2459
      %v2461 = vpop.f32.mrb[0].mxu0
      %v2462 = vadd.f32 %v2113, %v2461
      %v2463 = vpop.f32.mrb[0].mxu0
      %2464 = vmatprep.mubr.f32.mxu0 0.0
      %v2465 = vand.u32 %v1850, 4294901760
      %2466 = vmatmul.mubr.f32.gmra.mrb[0].mxu0 %v2465
      %v2467 = vpop.f32.mrb[0].mxu0
      %v2468 = vadd.f32 %v2123, %v2467
      %v2469 = vpop.f32.mrb[0].mxu0
      %2470 = vmatprep.mubr.f32.mxu0 0.0
      %v2471 = vand.u32 %v1853, 4294901760
      %2472 = vmatmul.mubr.f32.gmra.mrb[0].mxu0 %v2471
      %v2473 = vpop.f32.mrb[0].mxu0
      %v2474 = vadd.f32 %v2133, %v2473
      %v2475 = vpop.f32.mrb[0].mxu0
      %2476 = vmatprep.mubr.f32.mxu0 0.0
      %v2477 = vand.u32 %v1856, 4294901760
      %2478 = vmatmul.mubr.f32.gmra.mrb[0].mxu0 %v2477
      %v2479 = vpop.f32.mrb[0].mxu0
      %v2480 = vadd.f32 %v2143, %v2479
      %v2481 = vpop.f32.mrb[0].mxu0
      %2482 = vmatprep.mubr.f32.mxu0 0.0
      %v2483 = vand.u32 %v1859, 4294901760
      %2484 = vmatmul.mubr.f32.gmra.mrb[0].mxu0 %v2483
      %v2485 = vpop.f32.mrb[0].mxu0
      %v2486 = vadd.f32 %v2153, %v2485
      %v2487 = vpop.f32.mrb[0].mxu0
      %2488 = vmatprep.mubr.f32.mxu0 0.0
      %v2489 = vand.u32 %v1862, 4294901760
      %2490 = vmatmul.mubr.f32.gmra.mrb[0].mxu0 %v2489
      %v2491 = vpop.f32.mrb[0].mxu0
      %v2492 = vadd.f32 %v2163, %v2491
      %v2493 = vpop.f32.mrb[0].mxu0
      %2494 = vmatprep.mubr.f32.mxu0 0.0
      %v2495 = vand.u32 %v1865, 4294901760
      %2496 = vmatmul.mubr.f32.gmra.mrb[0].mxu0 %v2495
      %v2497 = vpop.f32.mrb[0].mxu0
      %v2498 = vadd.f32 %v2173, %v2497
      %v2499 = vpop.f32.mrb[0].mxu0
      %2500 = vmatprep.mubr.f32.mxu0 0.0
      %v2501 = vand.u32 %v1868, 4294901760
      %2502 = vmatmul.mubr.f32.gmra.mrb[0].mxu0 %v2501
      %v2503 = vpop.f32.mrb[0].mxu0
      %v2504 = vadd.f32 %v2183, %v2503
      %v2505 = vpop.f32.mrb[0].mxu0
      %2506 = vmatprep.mubr.f32.mxu0 0.0
      %v2507 = vand.u32 %v1871, 4294901760
      %2508 = vmatmul.mubr.f32.gmra.mrb[0].mxu0 %v2507
      %v2509 = vpop.f32.mrb[0].mxu0
      %v2510 = vadd.f32 %v2193, %v2509
      %v2511 = vpop.f32.mrb[0].mxu0
      %2512 = vmatprep.mubr.f32.mxu0 0.0
      %v2513 = vand.u32 %v1874, 4294901760
      %2514 = vmatmul.mubr.f32.gmra.mrb[0].mxu0 %v2513
      %v2515 = vpop.f32.mrb[0].mxu0
      %v2516 = vadd.f32 %v2203, %v2515
      %v2517 = vpop.f32.mrb[0].mxu0
      %2518 = vmatprep.mubr.f32.mxu0 0.0
      %v2519 = vand.u32 %v1877, 4294901760
      %2520 = vmatmul.mubr.f32.gmra.mrb[0].mxu0 %v2519
      %v2521 = vpop.f32.mrb[0].mxu0
      %v2522 = vadd.f32 %v2213, %v2521
      %v2523 = vpop.f32.mrb[0].mxu0
      %2524 = vmatprep.mubr.f32.mxu0 0.0
      %v2525 = vand.u32 %v1880, 4294901760
      %2526 = vmatmul.mubr.f32.gmra.mrb[0].mxu0 %v2525
      %v2527 = vpop.f32.mrb[0].mxu0
      %v2528 = vadd.f32 %v2223, %v2527
      %v2529 = vpop.f32.mrb[0].mxu0
      %2530 = vmatprep.mubr.f32.mxu0 0.0
      %v2531 = vand.u32 %v1883, 4294901760
      %2532 = vmatmul.mubr.f32.gmra.mrb[0].mxu0 %v2531
      %v2533 = vpop.f32.mrb[0].mxu0
      %v2534 = vadd.f32 %v2233, %v2533
      %v2535 = vpop.f32.mrb[0].mxu0
      %2536 = vmatprep.mubr.f32.mxu0 0.0
      %v2537 = vand.u32 %v1886, 4294901760
      %2538 = vmatmul.mubr.f32.gmra.mrb[0].mxu0 %v2537
      %v2539 = vpop.f32.mrb[0].mxu0
      %v2540 = vadd.f32 %v2243, %v2539
      %v2541 = vpop.f32.mrb[0].mxu0
      %2542 = vmatprep.mubr.f32.mxu0 0.0
      %v2543 = vand.u32 %v1889, 4294901760
      %2544 = vmatmul.mubr.f32.gmra.mrb[0].mxu0 %v2543
      %v2545 = vpop.f32.mrb[0].mxu0
      %v2546 = vadd.f32 %v2253, %v2545
      %v2547 = vpop.f32.mrb[0].mxu0
      %2548 = vmatprep.mubr.f32.mxu0 0.0
      %v2549 = vand.u32 %v1892, 4294901760
      %2550 = vmatmul.mubr.f32.gmra.mrb[0].mxu0 %v2549
      %v2551 = vpop.f32.mrb[0].mxu0
      %v2552 = vadd.f32 %v2263, %v2551
      %v2553 = vpop.f32.mrb[0].mxu0
      %2554 = vmatprep.mubr.f32.mxu0 0.0
      %v2555 = vand.u32 %v1895, 4294901760
      %2556 = vmatmul.mubr.f32.gmra.mrb[0].mxu0 %v2555
      %v2557 = vpop.f32.mrb[0].mxu0
      %v2558 = vadd.f32 %v2273, %v2557
      %v2559 = vpop.f32.mrb[0].mxu0
      %2560 = vmatprep.mubr.f32.mxu0 0.0
      %v2561 = vand.u32 %v1898, 4294901760
      %2562 = vmatmul.mubr.f32.gmra.mrb[0].mxu0 %v2561
      %v2563 = vpop.f32.mrb[0].mxu0
      %v2564 = vadd.f32 %v2283, %v2563
      %v2565 = vpop.f32.mrb[0].mxu0
      %2566 = vmatprep.mubr.f32.mxu0 0.0
      %v2567 = vand.u32 %v1901, 4294901760
      %2568 = vmatmul.mubr.f32.gmra.mrb[0].mxu0 %v2567
      %v2569 = vpop.f32.mrb[0].mxu0
      %v2570 = vadd.f32 %v2293, %v2569
      %v2571 = vpop.f32.mrb[0].mxu0
      %2572 = vdwg.mxu0
      %2573 = vmatprep.subr.mxu0 0.0
      %v2574 = vand.u32 %v1795, 4294901760
      %v2575 = vsub.f32 %v1795, %v2574
      %2576 = vmatpush1.msra.mxu0 %v2575
      %2577 = vmatprep.subr.mxu0 0.0
      %v2578 = vand.u32 %v1796, 4294901760
      %v2579 = vsub.f32 %v1796, %v2578
      %2580 = vmatpush1.msra.mxu0 %v2579
      %2581 = vmatprep.subr.mxu0 0.0
      %v2582 = vand.u32 %v1797, 4294901760
      %v2583 = vsub.f32 %v1797, %v2582
      %2584 = vmatpush1.msra.mxu0 %v2583
      %2585 = vmatprep.subr.mxu0 0.0
      %v2586 = vand.u32 %v1905, 4294901760
      %v2587 = vsub.f32 %v1905, %v2586
      %2588 = vmatpush1.msra.mxu0 %v2587
      %2589 = vmatprep.subr.mxu0 0.0
      %2590 = vmatpush1.msra.mxu0 0.0
      %2591 = vmatprep.subr.mxu0 0.0
      %2592 = vmatpush1.msra.mxu0 0.0
      %2593 = vmatprep.subr.mxu0 0.0
      %2594 = vmatpush1.msra.mxu0 0.0
      %2595 = vmatprep.subr.mxu0 0.0
      %2596 = vmatpush1.msra.mxu0 0.0
      %2597 = vmatprep.subr.mxu0 0.0
      %2598 = vmatpush1.msra.mxu0 0.0
      %2599 = vmatprep.subr.mxu0 0.0
      %2600 = vmatpush1.msra.mxu0 0.0
      %2601 = vmatprep.subr.mxu0 0.0
      %2602 = vmatpush1.msra.mxu0 0.0
      %2603 = vmatprep.subr.mxu0 0.0
      %2604 = vmatpush1.msra.mxu0 0.0
      %2605 = vmatprep.subr.mxu0 0.0
      %2606 = vmatpush1.msra.mxu0 0.0
      %2607 = vmatprep.subr.mxu0 0.0
      %2608 = vmatpush1.msra.mxu0 0.0
      %2609 = vmatprep.subr.mxu0 0.0
      %2610 = vmatpush1.msra.mxu0 0.0
      %2611 = vmatprep.subr.mxu0 0.0
      %2612 = vmatpush1.msra.mxu0 0.0
      %2613 = vmatprep.subr.mxu0 0.0
      %2614 = vmatpush1.msra.mxu0 0.0
      %2615 = vmatprep.subr.mxu0 0.0
      %2616 = vmatpush1.msra.mxu0 0.0
      %2617 = vmatprep.subr.mxu0 0.0
      %2618 = vmatpush1.msra.mxu0 0.0
      %2619 = vmatprep.subr.mxu0 0.0
      %2620 = vmatpush1.msra.mxu0 0.0
      %2621 = vmatprep.subr.mxu0 0.0
      %2622 = vmatpush1.msra.mxu0 0.0
      %2623 = vmatprep.subr.mxu0 0.0
      %2624 = vmatpush1.msra.mxu0 0.0
      %2625 = vmatprep.subr.mxu0 0.0
      %2626 = vmatpush1.msra.mxu0 0.0
      %2627 = vmatprep.subr.mxu0 0.0
      %2628 = vmatpush1.msra.mxu0 0.0
      %2629 = vmatprep.subr.mxu0 0.0
      %2630 = vmatpush1.msra.mxu0 0.0
      %2631 = vmatprep.subr.mxu0 0.0
      %2632 = vmatpush1.msra.mxu0 0.0
      %2633 = vmatprep.subr.mxu0 0.0
      %2634 = vmatpush1.msra.mxu0 0.0
      %2635 = vmatprep.subr.mxu0 0.0
      %2636 = vmatpush1.msra.mxu0 0.0
      %2637 = vmatprep.subr.mxu0 0.0
      %2638 = vmatpush1.msra.mxu0 0.0
      %2639 = vmatprep.subr.mxu0 0.0
      %2640 = vmatpush1.msra.mxu0 0.0
      %2641 = vmatprep.subr.mxu0 0.0
      %2642 = vmatpush1.msra.mxu0 0.0
      %2643 = vmatprep.subr.mxu0 0.0
      %2644 = vmatpush1.msra.mxu0 0.0
      %2645 = vmatprep.mubr.f32.mxu0 0.0
      %v2646 = vand.u32 %v1808, 4294901760
      %v2647 = vsub.f32 %v1808, %v2646
      %2648 = vmatmul.mubr.f32.gmra.mrb[0].mxu0 %v2647
      %v2649 = vpop.f32.mrb[0].mxu0
      %v2650 = vadd.f32 %v2384, %v2649
      %v2651 = vpop.f32.mrb[0].mxu0
      %2652 = vmatprep.mubr.f32.mxu0 0.0
      %v2653 = vand.u32 %v1811, 4294901760
      %v2654 = vsub.f32 %v1811, %v2653
      %2655 = vmatmul.mubr.f32.gmra.mrb[0].mxu0 %v2654
      %v2656 = vpop.f32.mrb[0].mxu0
      %v2657 = vadd.f32 %v2390, %v2656
      %v2658 = vpop.f32.mrb[0].mxu0
      %2659 = vmatprep.mubr.f32.mxu0 0.0
      %v2660 = vand.u32 %v1814, 4294901760
      %v2661 = vsub.f32 %v1814, %v2660
      %2662 = vmatmul.mubr.f32.gmra.mrb[0].mxu0 %v2661
      %v2663 = vpop.f32.mrb[0].mxu0
      %v2664 = vadd.f32 %v2396, %v2663
      %v2665 = vpop.f32.mrb[0].mxu0
      %2666 = vmatprep.mubr.f32.mxu0 0.0
      %v2667 = vand.u32 %v1817, 4294901760
      %v2668 = vsub.f32 %v1817, %v2667
      %2669 = vmatmul.mubr.f32.gmra.mrb[0].mxu0 %v2668
      %v2670 = vpop.f32.mrb[0].mxu0
      %v2671 = vadd.f32 %v2402, %v2670
      %v2672 = vpop.f32.mrb[0].mxu0
      %2673 = vmatprep.mubr.f32.mxu0 0.0
      %v2674 = vand.u32 %v1820, 4294901760
      %v2675 = vsub.f32 %v1820, %v2674
      %2676 = vmatmul.mubr.f32.gmra.mrb[0].mxu0 %v2675
      %v2677 = vpop.f32.mrb[0].mxu0
      %v2678 = vadd.f32 %v2408, %v2677
      %v2679 = vpop.f32.mrb[0].mxu0
      %2680 = vmatprep.mubr.f32.mxu0 0.0
      %v2681 = vand.u32 %v1823, 4294901760
      %v2682 = vsub.f32 %v1823, %v2681
      %2683 = vmatmul.mubr.f32.gmra.mrb[0].mxu0 %v2682
      %v2684 = vpop.f32.mrb[0].mxu0
      %v2685 = vadd.f32 %v2414, %v2684
      %v2686 = vpop.f32.mrb[0].mxu0
      %2687 = vmatprep.mubr.f32.mxu0 0.0
      %v2688 = vand.u32 %v1826, 4294901760
      %v2689 = vsub.f32 %v1826, %v2688
      %2690 = vmatmul.mubr.f32.gmra.mrb[0].mxu0 %v2689
      %v2691 = vpop.f32.mrb[0].mxu0
      %v2692 = vadd.f32 %v2420, %v2691
      %v2693 = vpop.f32.mrb[0].mxu0
      %2694 = vmatprep.mubr.f32.mxu0 0.0
      %v2695 = vand.u32 %v1829, 4294901760
      %v2696 = vsub.f32 %v1829, %v2695
      %2697 = vmatmul.mubr.f32.gmra.mrb[0].mxu0 %v2696
      %v2698 = vpop.f32.mrb[0].mxu0
      %v2699 = vadd.f32 %v2426, %v2698
      %v2700 = vpop.f32.mrb[0].mxu0
      %2701 = vmatprep.mubr.f32.mxu0 0.0
      %v2702 = vand.u32 %v1832, 4294901760
      %v2703 = vsub.f32 %v1832, %v2702
      %2704 = vmatmul.mubr.f32.gmra.mrb[0].mxu0 %v2703
      %v2705 = vpop.f32.mrb[0].mxu0
      %v2706 = vadd.f32 %v2432, %v2705
      %v2707 = vpop.f32.mrb[0].mxu0
      %2708 = vmatprep.mubr.f32.mxu0 0.0
      %v2709 = vand.u32 %v1835, 4294901760
      %v2710 = vsub.f32 %v1835, %v2709
      %2711 = vmatmul.mubr.f32.gmra.mrb[0].mxu0 %v2710
      %v2712 = vpop.f32.mrb[0].mxu0
      %v2713 = vadd.f32 %v2438, %v2712
      %v2714 = vpop.f32.mrb[0].mxu0
      %2715 = vmatprep.mubr.f32.mxu0 0.0
      %v2716 = vand.u32 %v1838, 4294901760
      %v2717 = vsub.f32 %v1838, %v2716
      %2718 = vmatmul.mubr.f32.gmra.mrb[0].mxu0 %v2717
      %v2719 = vpop.f32.mrb[0].mxu0
      %v2720 = vadd.f32 %v2444, %v2719
      %v2721 = vpop.f32.mrb[0].mxu0
      %2722 = vmatprep.mubr.f32.mxu0 0.0
      %v2723 = vand.u32 %v1841, 4294901760
      %v2724 = vsub.f32 %v1841, %v2723
      %2725 = vmatmul.mubr.f32.gmra.mrb[0].mxu0 %v2724
      %v2726 = vpop.f32.mrb[0].mxu0
      %v2727 = vadd.f32 %v2450, %v2726
      %v2728 = vpop.f32.mrb[0].mxu0
      %2729 = vmatprep.mubr.f32.mxu0 0.0
      %v2730 = vand.u32 %v1844, 4294901760
      %v2731 = vsub.f32 %v1844, %v2730
      %2732 = vmatmul.mubr.f32.gmra.mrb[0].mxu0 %v2731
      %v2733 = vpop.f32.mrb[0].mxu0
      %v2734 = vadd.f32 %v2456, %v2733
      %v2735 = vpop.f32.mrb[0].mxu0
      %2736 = vmatprep.mubr.f32.mxu0 0.0
      %v2737 = vand.u32 %v1847, 4294901760
      %v2738 = vsub.f32 %v1847, %v2737
      %2739 = vmatmul.mubr.f32.gmra.mrb[0].mxu0 %v2738
      %v2740 = vpop.f32.mrb[0].mxu0
      %v2741 = vadd.f32 %v2462, %v2740
      %v2742 = vpop.f32.mrb[0].mxu0
      %2743 = vmatprep.mubr.f32.mxu0 0.0
      %v2744 = vand.u32 %v1850, 4294901760
      %v2745 = vsub.f32 %v1850, %v2744
      %2746 = vmatmul.mubr.f32.gmra.mrb[0].mxu0 %v2745
      %v2747 = vpop.f32.mrb[0].mxu0
      %v2748 = vadd.f32 %v2468, %v2747
      %v2749 = vpop.f32.mrb[0].mxu0
      %2750 = vmatprep.mubr.f32.mxu0 0.0
      %v2751 = vand.u32 %v1853, 4294901760
      %v2752 = vsub.f32 %v1853, %v2751
      %2753 = vmatmul.mubr.f32.gmra.mrb[0].mxu0 %v2752
      %v2754 = vpop.f32.mrb[0].mxu0
      %v2755 = vadd.f32 %v2474, %v2754
      %v2756 = vpop.f32.mrb[0].mxu0
      %2757 = vmatprep.mubr.f32.mxu0 0.0
      %v2758 = vand.u32 %v1856, 4294901760
      %v2759 = vsub.f32 %v1856, %v2758
      %2760 = vmatmul.mubr.f32.gmra.mrb[0].mxu0 %v2759
      %v2761 = vpop.f32.mrb[0].mxu0
      %v2762 = vadd.f32 %v2480, %v2761
      %v2763 = vpop.f32.mrb[0].mxu0
      %2764 = vmatprep.mubr.f32.mxu0 0.0
      %v2765 = vand.u32 %v1859, 4294901760
      %v2766 = vsub.f32 %v1859, %v2765
      %2767 = vmatmul.mubr.f32.gmra.mrb[0].mxu0 %v2766
      %v2768 = vpop.f32.mrb[0].mxu0
      %v2769 = vadd.f32 %v2486, %v2768
      %v2770 = vpop.f32.mrb[0].mxu0
      %2771 = vmatprep.mubr.f32.mxu0 0.0
      %v2772 = vand.u32 %v1862, 4294901760
      %v2773 = vsub.f32 %v1862, %v2772
      %2774 = vmatmul.mubr.f32.gmra.mrb[0].mxu0 %v2773
      %v2775 = vpop.f32.mrb[0].mxu0
      %v2776 = vadd.f32 %v2492, %v2775
      %v2777 = vpop.f32.mrb[0].mxu0
      %2778 = vmatprep.mubr.f32.mxu0 0.0
      %v2779 = vand.u32 %v1865, 4294901760
      %v2780 = vsub.f32 %v1865, %v2779
      %2781 = vmatmul.mubr.f32.gmra.mrb[0].mxu0 %v2780
      %v2782 = vpop.f32.mrb[0].mxu0
      %v2783 = vadd.f32 %v2498, %v2782
      %v2784 = vpop.f32.mrb[0].mxu0
      %2785 = vmatprep.mubr.f32.mxu0 0.0
      %v2786 = vand.u32 %v1868, 4294901760
      %v2787 = vsub.f32 %v1868, %v2786
      %2788 = vmatmul.mubr.f32.gmra.mrb[0].mxu0 %v2787
      %v2789 = vpop.f32.mrb[0].mxu0
      %v2790 = vadd.f32 %v2504, %v2789
      %v2791 = vpop.f32.mrb[0].mxu0
      %2792 = vmatprep.mubr.f32.mxu0 0.0
      %v2793 = vand.u32 %v1871, 4294901760
      %v2794 = vsub.f32 %v1871, %v2793
      %2795 = vmatmul.mubr.f32.gmra.mrb[0].mxu0 %v2794
      %v2796 = vpop.f32.mrb[0].mxu0
      %v2797 = vadd.f32 %v2510, %v2796
      %v2798 = vpop.f32.mrb[0].mxu0
      %2799 = vmatprep.mubr.f32.mxu0 0.0
      %v2800 = vand.u32 %v1874, 4294901760
      %v2801 = vsub.f32 %v1874, %v2800
      %2802 = vmatmul.mubr.f32.gmra.mrb[0].mxu0 %v2801
      %v2803 = vpop.f32.mrb[0].mxu0
      %v2804 = vadd.f32 %v2516, %v2803
      %v2805 = vpop.f32.mrb[0].mxu0
      %2806 = vmatprep.mubr.f32.mxu0 0.0
      %v2807 = vand.u32 %v1877, 4294901760
      %v2808 = vsub.f32 %v1877, %v2807
      %2809 = vmatmul.mubr.f32.gmra.mrb[0].mxu0 %v2808
      %v2810 = vpop.f32.mrb[0].mxu0
      %v2811 = vadd.f32 %v2522, %v2810
      %v2812 = vpop.f32.mrb[0].mxu0
      %2813 = vmatprep.mubr.f32.mxu0 0.0
      %v2814 = vand.u32 %v1880, 4294901760
      %v2815 = vsub.f32 %v1880, %v2814
      %2816 = vmatmul.mubr.f32.gmra.mrb[0].mxu0 %v2815
      %v2817 = vpop.f32.mrb[0].mxu0
      %v2818 = vadd.f32 %v2528, %v2817
      %v2819 = vpop.f32.mrb[0].mxu0
      %2820 = vmatprep.mubr.f32.mxu0 0.0
      %v2821 = vand.u32 %v1883, 4294901760
      %v2822 = vsub.f32 %v1883, %v2821
      %2823 = vmatmul.mubr.f32.gmra.mrb[0].mxu0 %v2822
      %v2824 = vpop.f32.mrb[0].mxu0
      %v2825 = vadd.f32 %v2534, %v2824
      %v2826 = vpop.f32.mrb[0].mxu0
      %2827 = vmatprep.mubr.f32.mxu0 0.0
      %v2828 = vand.u32 %v1886, 4294901760
      %v2829 = vsub.f32 %v1886, %v2828
      %2830 = vmatmul.mubr.f32.gmra.mrb[0].mxu0 %v2829
      %v2831 = vpop.f32.mrb[0].mxu0
      %v2832 = vadd.f32 %v2540, %v2831
      %v2833 = vpop.f32.mrb[0].mxu0
      %2834 = vmatprep.mubr.f32.mxu0 0.0
      %v2835 = vand.u32 %v1889, 4294901760
      %v2836 = vsub.f32 %v1889, %v2835
      %2837 = vmatmul.mubr.f32.gmra.mrb[0].mxu0 %v2836
      %v2838 = vpop.f32.mrb[0].mxu0
      %v2839 = vadd.f32 %v2546, %v2838
      %v2840 = vpop.f32.mrb[0].mxu0
      %2841 = vmatprep.mubr.f32.mxu0 0.0
      %v2842 = vand.u32 %v1892, 4294901760
      %v2843 = vsub.f32 %v1892, %v2842
      %2844 = vmatmul.mubr.f32.gmra.mrb[0].mxu0 %v2843
      %v2845 = vpop.f32.mrb[0].mxu0
      %v2846 = vadd.f32 %v2552, %v2845
      %v2847 = vpop.f32.mrb[0].mxu0
      %2848 = vmatprep.mubr.f32.mxu0 0.0
      %v2849 = vand.u32 %v1895, 4294901760
      %v2850 = vsub.f32 %v1895, %v2849
      %2851 = vmatmul.mubr.f32.gmra.mrb[0].mxu0 %v2850
      %v2852 = vpop.f32.mrb[0].mxu0
      %v2853 = vadd.f32 %v2558, %v2852
      %v2854 = vpop.f32.mrb[0].mxu0
      %2855 = vmatprep.mubr.f32.mxu0 0.0
      %v2856 = vand.u32 %v1898, 4294901760
      %v2857 = vsub.f32 %v1898, %v2856
      %2858 = vmatmul.mubr.f32.gmra.mrb[0].mxu0 %v2857
      %v2859 = vpop.f32.mrb[0].mxu0
      %v2860 = vadd.f32 %v2564, %v2859
      %v2861 = vpop.f32.mrb[0].mxu0
      %2862 = vmatprep.mubr.f32.mxu0 0.0
      %v2863 = vand.u32 %v1901, 4294901760
      %v2864 = vsub.f32 %v1901, %v2863
      %2865 = vmatmul.mubr.f32.gmra.mrb[0].mxu0 %v2864
      %v2866 = vpop.f32.mrb[0].mxu0
      %v2867 = vadd.f32 %v2570, %v2866
      %v2868 = vpop.f32.mrb[0].mxu0
      %2869 = vdwg.mxu0
      %2870 = vmatprep.subr.mxu0 0.0
      %v2871 = vand.u32 %v1795, 4294901760
      %2872 = vmatpush1.msra.mxu0 %v2871
      %2873 = vmatprep.subr.mxu0 0.0
      %v2874 = vand.u32 %v1796, 4294901760
      %2875 = vmatpush1.msra.mxu0 %v2874
      %2876 = vmatprep.subr.mxu0 0.0
      %v2877 = vand.u32 %v1797, 4294901760
      %2878 = vmatpush1.msra.mxu0 %v2877
      %2879 = vmatprep.subr.mxu0 0.0
      %v2880 = vand.u32 %v1905, 4294901760
      %2881 = vmatpush1.msra.mxu0 %v2880
      %2882 = vmatprep.subr.mxu0 0.0
      %2883 = vmatpush1.msra.mxu0 0.0
      %2884 = vmatprep.subr.mxu0 0.0
      %2885 = vmatpush1.msra.mxu0 0.0
      %2886 = vmatprep.subr.mxu0 0.0
      %2887 = vmatpush1.msra.mxu0 0.0
      %2888 = vmatprep.subr.mxu0 0.0
      %2889 = vmatpush1.msra.mxu0 0.0
      %2890 = vmatprep.subr.mxu0 0.0
      %2891 = vmatpush1.msra.mxu0 0.0
      %2892 = vmatprep.subr.mxu0 0.0
      %2893 = vmatpush1.msra.mxu0 0.0
      %2894 = vmatprep.subr.mxu0 0.0
      %2895 = vmatpush1.msra.mxu0 0.0
      %2896 = vmatprep.subr.mxu0 0.0
      %2897 = vmatpush1.msra.mxu0 0.0
      %2898 = vmatprep.subr.mxu0 0.0
      %2899 = vmatpush1.msra.mxu0 0.0
      %2900 = vmatprep.subr.mxu0 0.0
      %2901 = vmatpush1.msra.mxu0 0.0
      %2902 = vmatprep.subr.mxu0 0.0
      %2903 = vmatpush1.msra.mxu0 0.0
      %2904 = vmatprep.subr.mxu0 0.0
      %2905 = vmatpush1.msra.mxu0 0.0
      %2906 = vmatprep.subr.mxu0 0.0
      %2907 = vmatpush1.msra.mxu0 0.0
      %2908 = vmatprep.subr.mxu0 0.0
      %2909 = vmatpush1.msra.mxu0 0.0
      %2910 = vmatprep.subr.mxu0 0.0
      %2911 = vmatpush1.msra.mxu0 0.0
      %2912 = vmatprep.subr.mxu0 0.0
      %2913 = vmatpush1.msra.mxu0 0.0
      %2914 = vmatprep.subr.mxu0 0.0
      %2915 = vmatpush1.msra.mxu0 0.0
      %2916 = vmatprep.subr.mxu0 0.0
      %2917 = vmatpush1.msra.mxu0 0.0
      %2918 = vmatprep.subr.mxu0 0.0
      %2919 = vmatpush1.msra.mxu0 0.0
      %2920 = vmatprep.subr.mxu0 0.0
      %2921 = vmatpush1.msra.mxu0 0.0
      %2922 = vmatprep.subr.mxu0 0.0
      %2923 = vmatpush1.msra.mxu0 0.0
      %2924 = vmatprep.subr.mxu0 0.0
      %2925 = vmatpush1.msra.mxu0 0.0
      %2926 = vmatprep.subr.mxu0 0.0
      %2927 = vmatpush1.msra.mxu0 0.0
      %2928 = vmatprep.subr.mxu0 0.0
      %2929 = vmatpush1.msra.mxu0 0.0
      %2930 = vmatprep.subr.mxu0 0.0
      %2931 = vmatpush1.msra.mxu0 0.0
      %2932 = vmatprep.subr.mxu0 0.0
      %2933 = vmatpush1.msra.mxu0 0.0
      %2934 = vmatprep.subr.mxu0 0.0
      %2935 = vmatpush1.msra.mxu0 0.0
      %2936 = vmatprep.subr.mxu0 0.0
      %2937 = vmatpush1.msra.mxu0 0.0
      %2938 = vmatprep.mubr.f32.mxu0 0.0
      %v2939 = vand.u32 %v1808, 4294901760
      %v2940 = vsub.f32 %v1808, %v2939
      %v2941 = vand.u32 %v2940, 4294901760
      %2942 = vmatmul.mubr.f32.gmra.mrb[0].mxu0 %v2941
      %v2943 = vpop.f32.mrb[0].mxu0
      %v2944 = vadd.f32 %v2650, %v2943
      %v2945 = vpop.f32.mrb[0].mxu0
      %2946 = vmatprep.mubr.f32.mxu0 0.0
      %v2947 = vand.u32 %v1811, 4294901760
      %v2948 = vsub.f32 %v1811, %v2947
      %v2949 = vand.u32 %v2948, 4294901760
      %2950 = vmatmul.mubr.f32.gmra.mrb[0].mxu0 %v2949
      %v2951 = vpop.f32.mrb[0].mxu0
      %v2952 = vadd.f32 %v2657, %v2951
      %v2953 = vpop.f32.mrb[0].mxu0
      %2954 = vmatprep.mubr.f32.mxu0 0.0
      %v2955 = vand.u32 %v1814, 4294901760
      %v2956 = vsub.f32 %v1814, %v2955
      %v2957 = vand.u32 %v2956, 4294901760
      %2958 = vmatmul.mubr.f32.gmra.mrb[0].mxu0 %v2957
      %v2959 = vpop.f32.mrb[0].mxu0
      %v2960 = vadd.f32 %v2664, %v2959
      %v2961 = vpop.f32.mrb[0].mxu0
      %2962 = vmatprep.mubr.f32.mxu0 0.0
      %v2963 = vand.u32 %v1817, 4294901760
      %v2964 = vsub.f32 %v1817, %v2963
      %v2965 = vand.u32 %v2964, 4294901760
      %2966 = vmatmul.mubr.f32.gmra.mrb[0].mxu0 %v2965
      %v2967 = vpop.f32.mrb[0].mxu0
      %v2968 = vadd.f32 %v2671, %v2967
      %v2969 = vpop.f32.mrb[0].mxu0
      %2970 = vmatprep.mubr.f32.mxu0 0.0
      %v2971 = vand.u32 %v1820, 4294901760
      %v2972 = vsub.f32 %v1820, %v2971
      %v2973 = vand.u32 %v2972, 4294901760
      %2974 = vmatmul.mubr.f32.gmra.mrb[0].mxu0 %v2973
      %v2975 = vpop.f32.mrb[0].mxu0
      %v2976 = vadd.f32 %v2678, %v2975
      %v2977 = vpop.f32.mrb[0].mxu0
      %2978 = vmatprep.mubr.f32.mxu0 0.0
      %v2979 = vand.u32 %v1823, 4294901760
      %v2980 = vsub.f32 %v1823, %v2979
      %v2981 = vand.u32 %v2980, 4294901760
      %2982 = vmatmul.mubr.f32.gmra.mrb[0].mxu0 %v2981
      %v2983 = vpop.f32.mrb[0].mxu0
      %v2984 = vadd.f32 %v2685, %v2983
      %v2985 = vpop.f32.mrb[0].mxu0
      %2986 = vmatprep.mubr.f32.mxu0 0.0
      %v2987 = vand.u32 %v1826, 4294901760
      %v2988 = vsub.f32 %v1826, %v2987
      %v2989 = vand.u32 %v2988, 4294901760
      %2990 = vmatmul.mubr.f32.gmra.mrb[0].mxu0 %v2989
      %v2991 = vpop.f32.mrb[0].mxu0
      %v2992 = vadd.f32 %v2692, %v2991
      %v2993 = vpop.f32.mrb[0].mxu0
      %2994 = vmatprep.mubr.f32.mxu0 0.0
      %v2995 = vand.u32 %v1829, 4294901760
      %v2996 = vsub.f32 %v1829, %v2995
      %v2997 = vand.u32 %v2996, 4294901760
      %2998 = vmatmul.mubr.f32.gmra.mrb[0].mxu0 %v2997
      %v2999 = vpop.f32.mrb[0].mxu0
      %v3000 = vadd.f32 %v2699, %v2999
      %v3001 = vpop.f32.mrb[0].mxu0
      %3002 = vmatprep.mubr.f32.mxu0 0.0
      %v3003 = vand.u32 %v1832, 4294901760
      %v3004 = vsub.f32 %v1832, %v3003
      %v3005 = vand.u32 %v3004, 4294901760
      %3006 = vmatmul.mubr.f32.gmra.mrb[0].mxu0 %v3005
      %v3007 = vpop.f32.mrb[0].mxu0
      %v3008 = vadd.f32 %v2706, %v3007
      %v3009 = vpop.f32.mrb[0].mxu0
      %3010 = vmatprep.mubr.f32.mxu0 0.0
      %v3011 = vand.u32 %v1835, 4294901760
      %v3012 = vsub.f32 %v1835, %v3011
      %v3013 = vand.u32 %v3012, 4294901760
      %3014 = vmatmul.mubr.f32.gmra.mrb[0].mxu0 %v3013
      %v3015 = vpop.f32.mrb[0].mxu0
      %v3016 = vadd.f32 %v2713, %v3015
      %v3017 = vpop.f32.mrb[0].mxu0
      %3018 = vmatprep.mubr.f32.mxu0 0.0
      %v3019 = vand.u32 %v1838, 4294901760
      %v3020 = vsub.f32 %v1838, %v3019
      %v3021 = vand.u32 %v3020, 4294901760
      %3022 = vmatmul.mubr.f32.gmra.mrb[0].mxu0 %v3021
      %v3023 = vpop.f32.mrb[0].mxu0
      %v3024 = vadd.f32 %v2720, %v3023
      %v3025 = vpop.f32.mrb[0].mxu0
      %3026 = vmatprep.mubr.f32.mxu0 0.0
      %v3027 = vand.u32 %v1841, 4294901760
      %v3028 = vsub.f32 %v1841, %v3027
      %v3029 = vand.u32 %v3028, 4294901760
      %3030 = vmatmul.mubr.f32.gmra.mrb[0].mxu0 %v3029
      %v3031 = vpop.f32.mrb[0].mxu0
      %v3032 = vadd.f32 %v2727, %v3031
      %v3033 = vpop.f32.mrb[0].mxu0
      %3034 = vmatprep.mubr.f32.mxu0 0.0
      %v3035 = vand.u32 %v1844, 4294901760
      %v3036 = vsub.f32 %v1844, %v3035
      %v3037 = vand.u32 %v3036, 4294901760
      %3038 = vmatmul.mubr.f32.gmra.mrb[0].mxu0 %v3037
      %v3039 = vpop.f32.mrb[0].mxu0
      %v3040 = vadd.f32 %v2734, %v3039
      %v3041 = vpop.f32.mrb[0].mxu0
      %3042 = vmatprep.mubr.f32.mxu0 0.0
      %v3043 = vand.u32 %v1847, 4294901760
      %v3044 = vsub.f32 %v1847, %v3043
      %v3045 = vand.u32 %v3044, 4294901760
      %3046 = vmatmul.mubr.f32.gmra.mrb[0].mxu0 %v3045
      %v3047 = vpop.f32.mrb[0].mxu0
      %v3048 = vadd.f32 %v2741, %v3047
      %v3049 = vpop.f32.mrb[0].mxu0
      %3050 = vmatprep.mubr.f32.mxu0 0.0
      %v3051 = vand.u32 %v1850, 4294901760
      %v3052 = vsub.f32 %v1850, %v3051
      %v3053 = vand.u32 %v3052, 4294901760
      %3054 = vmatmul.mubr.f32.gmra.mrb[0].mxu0 %v3053
      %v3055 = vpop.f32.mrb[0].mxu0
      %v3056 = vadd.f32 %v2748, %v3055
      %v3057 = vpop.f32.mrb[0].mxu0
      %3058 = vmatprep.mubr.f32.mxu0 0.0
      %v3059 = vand.u32 %v1853, 4294901760
      %v3060 = vsub.f32 %v1853, %v3059
      %v3061 = vand.u32 %v3060, 4294901760
      %3062 = vmatmul.mubr.f32.gmra.mrb[0].mxu0 %v3061
      %v3063 = vpop.f32.mrb[0].mxu0
      %v3064 = vadd.f32 %v2755, %v3063
      %v3065 = vpop.f32.mrb[0].mxu0
      %3066 = vmatprep.mubr.f32.mxu0 0.0
      %v3067 = vand.u32 %v1856, 4294901760
      %v3068 = vsub.f32 %v1856, %v3067
      %v3069 = vand.u32 %v3068, 4294901760
      %3070 = vmatmul.mubr.f32.gmra.mrb[0].mxu0 %v3069
      %v3071 = vpop.f32.mrb[0].mxu0
      %v3072 = vadd.f32 %v2762, %v3071
      %v3073 = vpop.f32.mrb[0].mxu0
      %3074 = vmatprep.mubr.f32.mxu0 0.0
      %v3075 = vand.u32 %v1859, 4294901760
      %v3076 = vsub.f32 %v1859, %v3075
      %v3077 = vand.u32 %v3076, 4294901760
      %3078 = vmatmul.mubr.f32.gmra.mrb[0].mxu0 %v3077
      %v3079 = vpop.f32.mrb[0].mxu0
      %v3080 = vadd.f32 %v2769, %v3079
      %v3081 = vpop.f32.mrb[0].mxu0
      %3082 = vmatprep.mubr.f32.mxu0 0.0
      %v3083 = vand.u32 %v1862, 4294901760
      %v3084 = vsub.f32 %v1862, %v3083
      %v3085 = vand.u32 %v3084, 4294901760
      %3086 = vmatmul.mubr.f32.gmra.mrb[0].mxu0 %v3085
      %v3087 = vpop.f32.mrb[0].mxu0
      %v3088 = vadd.f32 %v2776, %v3087
      %v3089 = vpop.f32.mrb[0].mxu0
      %3090 = vmatprep.mubr.f32.mxu0 0.0
      %v3091 = vand.u32 %v1865, 4294901760
      %v3092 = vsub.f32 %v1865, %v3091
      %v3093 = vand.u32 %v3092, 4294901760
      %3094 = vmatmul.mubr.f32.gmra.mrb[0].mxu0 %v3093
      %v3095 = vpop.f32.mrb[0].mxu0
      %v3096 = vadd.f32 %v2783, %v3095
      %v3097 = vpop.f32.mrb[0].mxu0
      %3098 = vmatprep.mubr.f32.mxu0 0.0
      %v3099 = vand.u32 %v1868, 4294901760
      %v3100 = vsub.f32 %v1868, %v3099
      %v3101 = vand.u32 %v3100, 4294901760
      %3102 = vmatmul.mubr.f32.gmra.mrb[0].mxu0 %v3101
      %v3103 = vpop.f32.mrb[0].mxu0
      %v3104 = vadd.f32 %v2790, %v3103
      %v3105 = vpop.f32.mrb[0].mxu0
      %3106 = vmatprep.mubr.f32.mxu0 0.0
      %v3107 = vand.u32 %v1871, 4294901760
      %v3108 = vsub.f32 %v1871, %v3107
      %v3109 = vand.u32 %v3108, 4294901760
      %3110 = vmatmul.mubr.f32.gmra.mrb[0].mxu0 %v3109
      %v3111 = vpop.f32.mrb[0].mxu0
      %v3112 = vadd.f32 %v2797, %v3111
      %v3113 = vpop.f32.mrb[0].mxu0
      %3114 = vmatprep.mubr.f32.mxu0 0.0
      %v3115 = vand.u32 %v1874, 4294901760
      %v3116 = vsub.f32 %v1874, %v3115
      %v3117 = vand.u32 %v3116, 4294901760
      %3118 = vmatmul.mubr.f32.gmra.mrb[0].mxu0 %v3117
      %v3119 = vpop.f32.mrb[0].mxu0
      %v3120 = vadd.f32 %v2804, %v3119
      %v3121 = vpop.f32.mrb[0].mxu0
      %3122 = vmatprep.mubr.f32.mxu0 0.0
      %v3123 = vand.u32 %v1877, 4294901760
      %v3124 = vsub.f32 %v1877, %v3123
      %v3125 = vand.u32 %v3124, 4294901760
      %3126 = vmatmul.mubr.f32.gmra.mrb[0].mxu0 %v3125
      %v3127 = vpop.f32.mrb[0].mxu0
      %v3128 = vadd.f32 %v2811, %v3127
      %v3129 = vpop.f32.mrb[0].mxu0
      %3130 = vmatprep.mubr.f32.mxu0 0.0
      %v3131 = vand.u32 %v1880, 4294901760
      %v3132 = vsub.f32 %v1880, %v3131
      %v3133 = vand.u32 %v3132, 4294901760
      %3134 = vmatmul.mubr.f32.gmra.mrb[0].mxu0 %v3133
      %v3135 = vpop.f32.mrb[0].mxu0
      %v3136 = vadd.f32 %v2818, %v3135
      %v3137 = vpop.f32.mrb[0].mxu0
      %3138 = vmatprep.mubr.f32.mxu0 0.0
      %v3139 = vand.u32 %v1883, 4294901760
      %v3140 = vsub.f32 %v1883, %v3139
      %v3141 = vand.u32 %v3140, 4294901760
      %3142 = vmatmul.mubr.f32.gmra.mrb[0].mxu0 %v3141
      %v3143 = vpop.f32.mrb[0].mxu0
      %v3144 = vadd.f32 %v2825, %v3143
      %v3145 = vpop.f32.mrb[0].mxu0
      %3146 = vmatprep.mubr.f32.mxu0 0.0
      %v3147 = vand.u32 %v1886, 4294901760
      %v3148 = vsub.f32 %v1886, %v3147
      %v3149 = vand.u32 %v3148, 4294901760
      %3150 = vmatmul.mubr.f32.gmra.mrb[0].mxu0 %v3149
      %v3151 = vpop.f32.mrb[0].mxu0
      %v3152 = vadd.f32 %v2832, %v3151
      %v3153 = vpop.f32.mrb[0].mxu0
      %3154 = vmatprep.mubr.f32.mxu0 0.0
      %v3155 = vand.u32 %v1889, 4294901760
      %v3156 = vsub.f32 %v1889, %v3155
      %v3157 = vand.u32 %v3156, 4294901760
      %3158 = vmatmul.mubr.f32.gmra.mrb[0].mxu0 %v3157
      %v3159 = vpop.f32.mrb[0].mxu0
      %v3160 = vadd.f32 %v2839, %v3159
      %v3161 = vpop.f32.mrb[0].mxu0
      %3162 = vmatprep.mubr.f32.mxu0 0.0
      %v3163 = vand.u32 %v1892, 4294901760
      %v3164 = vsub.f32 %v1892, %v3163
      %v3165 = vand.u32 %v3164, 4294901760
      %3166 = vmatmul.mubr.f32.gmra.mrb[0].mxu0 %v3165
      %v3167 = vpop.f32.mrb[0].mxu0
      %v3168 = vadd.f32 %v2846, %v3167
      %v3169 = vpop.f32.mrb[0].mxu0
      %3170 = vmatprep.mubr.f32.mxu0 0.0
      %v3171 = vand.u32 %v1895, 4294901760
      %v3172 = vsub.f32 %v1895, %v3171
      %v3173 = vand.u32 %v3172, 4294901760
      %3174 = vmatmul.mubr.f32.gmra.mrb[0].mxu0 %v3173
      %v3175 = vpop.f32.mrb[0].mxu0
      %v3176 = vadd.f32 %v2853, %v3175
      %v3177 = vpop.f32.mrb[0].mxu0
      %3178 = vmatprep.mubr.f32.mxu0 0.0
      %v3179 = vand.u32 %v1898, 4294901760
      %v3180 = vsub.f32 %v1898, %v3179
      %v3181 = vand.u32 %v3180, 4294901760
      %3182 = vmatmul.mubr.f32.gmra.mrb[0].mxu0 %v3181
      %v3183 = vpop.f32.mrb[0].mxu0
      %v3184 = vadd.f32 %v2860, %v3183
      %v3185 = vpop.f32.mrb[0].mxu0
      %3186 = vmatprep.mubr.f32.mxu0 0.0
      %v3187 = vand.u32 %v1901, 4294901760
      %v3188 = vsub.f32 %v1901, %v3187
      %v3189 = vand.u32 %v3188, 4294901760
      %3190 = vmatmul.mubr.f32.gmra.mrb[0].mxu0 %v3189
      %v3191 = vpop.f32.mrb[0].mxu0
      %v3192 = vadd.f32 %v2867, %v3191
      %v3193 = vpop.f32.mrb[0].mxu0
      %3194 = vdwg.mxu0
      %3195 = vmatprep.subr.mxu0 0.0
      %v3196 = vand.u32 %v1795, 4294901760
      %v3197 = vsub.f32 %v1795, %v3196
      %v3198 = vand.u32 %v3197, 4294901760
      %3199 = vmatpush1.msra.mxu0 %v3198
      %3200 = vmatprep.subr.mxu0 0.0
      %v3201 = vand.u32 %v1796, 4294901760
      %v3202 = vsub.f32 %v1796, %v3201
      %v3203 = vand.u32 %v3202, 4294901760
      %3204 = vmatpush1.msra.mxu0 %v3203
      %3205 = vmatprep.subr.mxu0 0.0
      %v3206 = vand.u32 %v1797, 4294901760
      %v3207 = vsub.f32 %v1797, %v3206
      %v3208 = vand.u32 %v3207, 4294901760
      %3209 = vmatpush1.msra.mxu0 %v3208
      %3210 = vmatprep.subr.mxu0 0.0
      %v3211 = vand.u32 %v1905, 4294901760
      %v3212 = vsub.f32 %v1905, %v3211
      %v3213 = vand.u32 %v3212, 4294901760
      %3214 = vmatpush1.msra.mxu0 %v3213
      %3215 = vmatprep.subr.mxu0 0.0
      %3216 = vmatpush1.msra.mxu0 0.0
      %3217 = vmatprep.subr.mxu0 0.0
      %3218 = vmatpush1.msra.mxu0 0.0
      %3219 = vmatprep.subr.mxu0 0.0
      %3220 = vmatpush1.msra.mxu0 0.0
      %3221 = vmatprep.subr.mxu0 0.0
      %3222 = vmatpush1.msra.mxu0 0.0
      %3223 = vmatprep.subr.mxu0 0.0
      %3224 = vmatpush1.msra.mxu0 0.0
      %3225 = vmatprep.subr.mxu0 0.0
      %3226 = vmatpush1.msra.mxu0 0.0
      %3227 = vmatprep.subr.mxu0 0.0
      %3228 = vmatpush1.msra.mxu0 0.0
      %3229 = vmatprep.subr.mxu0 0.0
      %3230 = vmatpush1.msra.mxu0 0.0
      %3231 = vmatprep.subr.mxu0 0.0
      %3232 = vmatpush1.msra.mxu0 0.0
      %3233 = vmatprep.subr.mxu0 0.0
      %3234 = vmatpush1.msra.mxu0 0.0
      %3235 = vmatprep.subr.mxu0 0.0
      %3236 = vmatpush1.msra.mxu0 0.0
      %3237 = vmatprep.subr.mxu0 0.0
      %3238 = vmatpush1.msra.mxu0 0.0
      %3239 = vmatprep.subr.mxu0 0.0
      %3240 = vmatpush1.msra.mxu0 0.0
      %3241 = vmatprep.subr.mxu0 0.0
      %3242 = vmatpush1.msra.mxu0 0.0
      %3243 = vmatprep.subr.mxu0 0.0
      %3244 = vmatpush1.msra.mxu0 0.0
      %3245 = vmatprep.subr.mxu0 0.0
      %3246 = vmatpush1.msra.mxu0 0.0
      %3247 = vmatprep.subr.mxu0 0.0
      %3248 = vmatpush1.msra.mxu0 0.0
      %3249 = vmatprep.subr.mxu0 0.0
      %3250 = vmatpush1.msra.mxu0 0.0
      %3251 = vmatprep.subr.mxu0 0.0
      %3252 = vmatpush1.msra.mxu0 0.0
      %3253 = vmatprep.subr.mxu0 0.0
      %3254 = vmatpush1.msra.mxu0 0.0
      %3255 = vmatprep.subr.mxu0 0.0
      %3256 = vmatpush1.msra.mxu0 0.0
      %3257 = vmatprep.subr.mxu0 0.0
      %3258 = vmatpush1.msra.mxu0 0.0
      %3259 = vmatprep.subr.mxu0 0.0
      %3260 = vmatpush1.msra.mxu0 0.0
      %3261 = vmatprep.subr.mxu0 0.0
      %3262 = vmatpush1.msra.mxu0 0.0
      %3263 = vmatprep.subr.mxu0 0.0
      %3264 = vmatpush1.msra.mxu0 0.0
      %3265 = vmatprep.subr.mxu0 0.0
      %3266 = vmatpush1.msra.mxu0 0.0
      %3267 = vmatprep.subr.mxu0 0.0
      %3268 = vmatpush1.msra.mxu0 0.0
      %3269 = vmatprep.subr.mxu0 0.0
      %3270 = vmatpush1.msra.mxu0 0.0
      %3271 = vmatprep.mubr.f32.mxu0 0.0
      %v3272 = vand.u32 %v1808, 4294901760
      %3273 = vmatmul.mubr.f32.gmra.mrb[0].mxu0 %v3272
      %v3274 = vpop.f32.mrb[0].mxu0
      %v3275 = vadd.f32 %v2944, %v3274
      %v3276 = vpop.f32.mrb[0].mxu0
      %3277 = vmatprep.mubr.f32.mxu0 0.0
      %v3278 = vand.u32 %v1811, 4294901760
      %3279 = vmatmul.mubr.f32.gmra.mrb[0].mxu0 %v3278
      %v3280 = vpop.f32.mrb[0].mxu0
      %v3281 = vadd.f32 %v2952, %v3280
      %v3282 = vpop.f32.mrb[0].mxu0
      %3283 = vmatprep.mubr.f32.mxu0 0.0
      %v3284 = vand.u32 %v1814, 4294901760
      %3285 = vmatmul.mubr.f32.gmra.mrb[0].mxu0 %v3284
      %v3286 = vpop.f32.mrb[0].mxu0
      %v3287 = vadd.f32 %v2960, %v3286
      %v3288 = vpop.f32.mrb[0].mxu0
      %3289 = vmatprep.mubr.f32.mxu0 0.0
      %v3290 = vand.u32 %v1817, 4294901760
      %3291 = vmatmul.mubr.f32.gmra.mrb[0].mxu0 %v3290
      %v3292 = vpop.f32.mrb[0].mxu0
      %v3293 = vadd.f32 %v2968, %v3292
      %v3294 = vpop.f32.mrb[0].mxu0
      %3295 = vmatprep.mubr.f32.mxu0 0.0
      %v3296 = vand.u32 %v1820, 4294901760
      %3297 = vmatmul.mubr.f32.gmra.mrb[0].mxu0 %v3296
      %v3298 = vpop.f32.mrb[0].mxu0
      %v3299 = vadd.f32 %v2976, %v3298
      %v3300 = vpop.f32.mrb[0].mxu0
      %3301 = vmatprep.mubr.f32.mxu0 0.0
      %v3302 = vand.u32 %v1823, 4294901760
      %3303 = vmatmul.mubr.f32.gmra.mrb[0].mxu0 %v3302
      %v3304 = vpop.f32.mrb[0].mxu0
      %v3305 = vadd.f32 %v2984, %v3304
      %v3306 = vpop.f32.mrb[0].mxu0
      %3307 = vmatprep.mubr.f32.mxu0 0.0
      %v3308 = vand.u32 %v1826, 4294901760
      %3309 = vmatmul.mubr.f32.gmra.mrb[0].mxu0 %v3308
      %v3310 = vpop.f32.mrb[0].mxu0
      %v3311 = vadd.f32 %v2992, %v3310
      %v3312 = vpop.f32.mrb[0].mxu0
      %3313 = vmatprep.mubr.f32.mxu0 0.0
      %v3314 = vand.u32 %v1829, 4294901760
      %3315 = vmatmul.mubr.f32.gmra.mrb[0].mxu0 %v3314
      %v3316 = vpop.f32.mrb[0].mxu0
      %v3317 = vadd.f32 %v3000, %v3316
      %v3318 = vpop.f32.mrb[0].mxu0
      %3319 = vmatprep.mubr.f32.mxu0 0.0
      %v3320 = vand.u32 %v1832, 4294901760
      %3321 = vmatmul.mubr.f32.gmra.mrb[0].mxu0 %v3320
      %v3322 = vpop.f32.mrb[0].mxu0
      %v3323 = vadd.f32 %v3008, %v3322
      %v3324 = vpop.f32.mrb[0].mxu0
      %3325 = vmatprep.mubr.f32.mxu0 0.0
      %v3326 = vand.u32 %v1835, 4294901760
      %3327 = vmatmul.mubr.f32.gmra.mrb[0].mxu0 %v3326
      %v3328 = vpop.f32.mrb[0].mxu0
      %v3329 = vadd.f32 %v3016, %v3328
      %v3330 = vpop.f32.mrb[0].mxu0
      %3331 = vmatprep.mubr.f32.mxu0 0.0
      %v3332 = vand.u32 %v1838, 4294901760
      %3333 = vmatmul.mubr.f32.gmra.mrb[0].mxu0 %v3332
      %v3334 = vpop.f32.mrb[0].mxu0
      %v3335 = vadd.f32 %v3024, %v3334
      %v3336 = vpop.f32.mrb[0].mxu0
      %3337 = vmatprep.mubr.f32.mxu0 0.0
      %v3338 = vand.u32 %v1841, 4294901760
      %3339 = vmatmul.mubr.f32.gmra.mrb[0].mxu0 %v3338
      %v3340 = vpop.f32.mrb[0].mxu0
      %v3341 = vadd.f32 %v3032, %v3340
      %v3342 = vpop.f32.mrb[0].mxu0
      %3343 = vmatprep.mubr.f32.mxu0 0.0
      %v3344 = vand.u32 %v1844, 4294901760
      %3345 = vmatmul.mubr.f32.gmra.mrb[0].mxu0 %v3344
      %v3346 = vpop.f32.mrb[0].mxu0
      %v3347 = vadd.f32 %v3040, %v3346
      %v3348 = vpop.f32.mrb[0].mxu0
      %3349 = vmatprep.mubr.f32.mxu0 0.0
      %v3350 = vand.u32 %v1847, 4294901760
      %3351 = vmatmul.mubr.f32.gmra.mrb[0].mxu0 %v3350
      %v3352 = vpop.f32.mrb[0].mxu0
      %v3353 = vadd.f32 %v3048, %v3352
      %v3354 = vpop.f32.mrb[0].mxu0
      %3355 = vmatprep.mubr.f32.mxu0 0.0
      %v3356 = vand.u32 %v1850, 4294901760
      %3357 = vmatmul.mubr.f32.gmra.mrb[0].mxu0 %v3356
      %v3358 = vpop.f32.mrb[0].mxu0
      %v3359 = vadd.f32 %v3056, %v3358
      %v3360 = vpop.f32.mrb[0].mxu0
      %3361 = vmatprep.mubr.f32.mxu0 0.0
      %v3362 = vand.u32 %v1853, 4294901760
      %3363 = vmatmul.mubr.f32.gmra.mrb[0].mxu0 %v3362
      %v3364 = vpop.f32.mrb[0].mxu0
      %v3365 = vadd.f32 %v3064, %v3364
      %v3366 = vpop.f32.mrb[0].mxu0
      %3367 = vmatprep.mubr.f32.mxu0 0.0
      %v3368 = vand.u32 %v1856, 4294901760
      %3369 = vmatmul.mubr.f32.gmra.mrb[0].mxu0 %v3368
      %v3370 = vpop.f32.mrb[0].mxu0
      %v3371 = vadd.f32 %v3072, %v3370
      %v3372 = vpop.f32.mrb[0].mxu0
      %3373 = vmatprep.mubr.f32.mxu0 0.0
      %v3374 = vand.u32 %v1859, 4294901760
      %3375 = vmatmul.mubr.f32.gmra.mrb[0].mxu0 %v3374
      %v3376 = vpop.f32.mrb[0].mxu0
      %v3377 = vadd.f32 %v3080, %v3376
      %v3378 = vpop.f32.mrb[0].mxu0
      %3379 = vmatprep.mubr.f32.mxu0 0.0
      %v3380 = vand.u32 %v1862, 4294901760
      %3381 = vmatmul.mubr.f32.gmra.mrb[0].mxu0 %v3380
      %v3382 = vpop.f32.mrb[0].mxu0
      %v3383 = vadd.f32 %v3088, %v3382
      %v3384 = vpop.f32.mrb[0].mxu0
      %3385 = vmatprep.mubr.f32.mxu0 0.0
      %v3386 = vand.u32 %v1865, 4294901760
      %3387 = vmatmul.mubr.f32.gmra.mrb[0].mxu0 %v3386
      %v3388 = vpop.f32.mrb[0].mxu0
      %v3389 = vadd.f32 %v3096, %v3388
      %v3390 = vpop.f32.mrb[0].mxu0
      %3391 = vmatprep.mubr.f32.mxu0 0.0
      %v3392 = vand.u32 %v1868, 4294901760
      %3393 = vmatmul.mubr.f32.gmra.mrb[0].mxu0 %v3392
      %v3394 = vpop.f32.mrb[0].mxu0
      %v3395 = vadd.f32 %v3104, %v3394
      %v3396 = vpop.f32.mrb[0].mxu0
      %3397 = vmatprep.mubr.f32.mxu0 0.0
      %v3398 = vand.u32 %v1871, 4294901760
      %3399 = vmatmul.mubr.f32.gmra.mrb[0].mxu0 %v3398
      %v3400 = vpop.f32.mrb[0].mxu0
      %v3401 = vadd.f32 %v3112, %v3400
      %v3402 = vpop.f32.mrb[0].mxu0
      %3403 = vmatprep.mubr.f32.mxu0 0.0
      %v3404 = vand.u32 %v1874, 4294901760
      %3405 = vmatmul.mubr.f32.gmra.mrb[0].mxu0 %v3404
      %v3406 = vpop.f32.mrb[0].mxu0
      %v3407 = vadd.f32 %v3120, %v3406
      %v3408 = vpop.f32.mrb[0].mxu0
      %3409 = vmatprep.mubr.f32.mxu0 0.0
      %v3410 = vand.u32 %v1877, 4294901760
      %3411 = vmatmul.mubr.f32.gmra.mrb[0].mxu0 %v3410
      %v3412 = vpop.f32.mrb[0].mxu0
      %v3413 = vadd.f32 %v3128, %v3412
      %v3414 = vpop.f32.mrb[0].mxu0
      %3415 = vmatprep.mubr.f32.mxu0 0.0
      %v3416 = vand.u32 %v1880, 4294901760
      %3417 = vmatmul.mubr.f32.gmra.mrb[0].mxu0 %v3416
      %v3418 = vpop.f32.mrb[0].mxu0
      %v3419 = vadd.f32 %v3136, %v3418
      %v3420 = vpop.f32.mrb[0].mxu0
      %3421 = vmatprep.mubr.f32.mxu0 0.0
      %v3422 = vand.u32 %v1883, 4294901760
      %3423 = vmatmul.mubr.f32.gmra.mrb[0].mxu0 %v3422
      %v3424 = vpop.f32.mrb[0].mxu0
      %v3425 = vadd.f32 %v3144, %v3424
      %v3426 = vpop.f32.mrb[0].mxu0
      %3427 = vmatprep.mubr.f32.mxu0 0.0
      %v3428 = vand.u32 %v1886, 4294901760
      %3429 = vmatmul.mubr.f32.gmra.mrb[0].mxu0 %v3428
      %v3430 = vpop.f32.mrb[0].mxu0
      %v3431 = vadd.f32 %v3152, %v3430
      %v3432 = vpop.f32.mrb[0].mxu0
      %3433 = vmatprep.mubr.f32.mxu0 0.0
      %v3434 = vand.u32 %v1889, 4294901760
      %3435 = vmatmul.mubr.f32.gmra.mrb[0].mxu0 %v3434
      %v3436 = vpop.f32.mrb[0].mxu0
      %v3437 = vadd.f32 %v3160, %v3436
      %v3438 = vpop.f32.mrb[0].mxu0
      %3439 = vmatprep.mubr.f32.mxu0 0.0
      %v3440 = vand.u32 %v1892, 4294901760
      %3441 = vmatmul.mubr.f32.gmra.mrb[0].mxu0 %v3440
      %v3442 = vpop.f32.mrb[0].mxu0
      %v3443 = vadd.f32 %v3168, %v3442
      %v3444 = vpop.f32.mrb[0].mxu0
      %3445 = vmatprep.mubr.f32.mxu0 0.0
      %v3446 = vand.u32 %v1895, 4294901760
      %3447 = vmatmul.mubr.f32.gmra.mrb[0].mxu0 %v3446
      %v3448 = vpop.f32.mrb[0].mxu0
      %v3449 = vadd.f32 %v3176, %v3448
      %v3450 = vpop.f32.mrb[0].mxu0
      %3451 = vmatprep.mubr.f32.mxu0 0.0
      %v3452 = vand.u32 %v1898, 4294901760
      %3453 = vmatmul.mubr.f32.gmra.mrb[0].mxu0 %v3452
      %v3454 = vpop.f32.mrb[0].mxu0
      %v3455 = vadd.f32 %v3184, %v3454
      %v3456 = vpop.f32.mrb[0].mxu0
      %3457 = vmatprep.mubr.f32.mxu0 0.0
      %v3458 = vand.u32 %v1901, 4294901760
      %3459 = vmatmul.mubr.f32.gmra.mrb[0].mxu0 %v3458
      %v3460 = vpop.f32.mrb[0].mxu0
      %v3461 = vadd.f32 %v3192, %v3460
      %v3462 = vpop.f32.mrb[0].mxu0
      %3463 = vdwg.mxu0
      %3464 = vmatprep.subr.mxu0 0.0
      %v3465 = vand.u32 %v1795, 4294901760
      %3466 = vmatpush1.msra.mxu0 %v3465
      %3467 = vmatprep.subr.mxu0 0.0
      %v3468 = vand.u32 %v1796, 4294901760
      %3469 = vmatpush1.msra.mxu0 %v3468
      %3470 = vmatprep.subr.mxu0 0.0
      %v3471 = vand.u32 %v1797, 4294901760
      %3472 = vmatpush1.msra.mxu0 %v3471
      %3473 = vmatprep.subr.mxu0 0.0
      %v3474 = vand.u32 %v1905, 4294901760
      %3475 = vmatpush1.msra.mxu0 %v3474
      %3476 = vmatprep.subr.mxu0 0.0
      %3477 = vmatpush1.msra.mxu0 0.0
      %3478 = vmatprep.subr.mxu0 0.0
      %3479 = vmatpush1.msra.mxu0 0.0
      %3480 = vmatprep.subr.mxu0 0.0
      %3481 = vmatpush1.msra.mxu0 0.0
      %3482 = vmatprep.subr.mxu0 0.0
      %3483 = vmatpush1.msra.mxu0 0.0
      %3484 = vmatprep.subr.mxu0 0.0
      %3485 = vmatpush1.msra.mxu0 0.0
      %3486 = vmatprep.subr.mxu0 0.0
      %3487 = vmatpush1.msra.mxu0 0.0
      %3488 = vmatprep.subr.mxu0 0.0
      %3489 = vmatpush1.msra.mxu0 0.0
      %3490 = vmatprep.subr.mxu0 0.0
      %3491 = vmatpush1.msra.mxu0 0.0
      %3492 = vmatprep.subr.mxu0 0.0
      %3493 = vmatpush1.msra.mxu0 0.0
      %3494 = vmatprep.subr.mxu0 0.0
      %3495 = vmatpush1.msra.mxu0 0.0
      %3496 = vmatprep.subr.mxu0 0.0
      %3497 = vmatpush1.msra.mxu0 0.0
      %3498 = vmatprep.subr.mxu0 0.0
      %3499 = vmatpush1.msra.mxu0 0.0
      %3500 = vmatprep.subr.mxu0 0.0
      %3501 = vmatpush1.msra.mxu0 0.0
      %3502 = vmatprep.subr.mxu0 0.0
      %3503 = vmatpush1.msra.mxu0 0.0
      %3504 = vmatprep.subr.mxu0 0.0
      %3505 = vmatpush1.msra.mxu0 0.0
      %3506 = vmatprep.subr.mxu0 0.0
      %3507 = vmatpush1.msra.mxu0 0.0
      %3508 = vmatprep.subr.mxu0 0.0
      %3509 = vmatpush1.msra.mxu0 0.0
      %3510 = vmatprep.subr.mxu0 0.0
      %3511 = vmatpush1.msra.mxu0 0.0
      %3512 = vmatprep.subr.mxu0 0.0
      %3513 = vmatpush1.msra.mxu0 0.0
      %3514 = vmatprep.subr.mxu0 0.0
      %3515 = vmatpush1.msra.mxu0 0.0
      %3516 = vmatprep.subr.mxu0 0.0
      %3517 = vmatpush1.msra.mxu0 0.0
      %3518 = vmatprep.subr.mxu0 0.0
      %3519 = vmatpush1.msra.mxu0 0.0
      %3520 = vmatprep.subr.mxu0 0.0
      %3521 = vmatpush1.msra.mxu0 0.0
      %3522 = vmatprep.subr.mxu0 0.0
      %3523 = vmatpush1.msra.mxu0 0.0
      %3524 = vmatprep.subr.mxu0 0.0
      %3525 = vmatpush1.msra.mxu0 0.0
      %3526 = vmatprep.subr.mxu0 0.0
      %3527 = vmatpush1.msra.mxu0 0.0
      %3528 = vmatprep.subr.mxu0 0.0
      %3529 = vmatpush1.msra.mxu0 0.0
      %3530 = vmatprep.subr.mxu0 0.0
      %3531 = vmatpush1.msra.mxu0 0.0
      %3532 = vmatprep.mubr.f32.mxu0 0.0
      %v3533 = vand.u32 %v1808, 4294901760
      %3534 = vmatmul.mubr.f32.gmra.mrb[0].mxu0 %v3533
      %v3535 = vpop.f32.mrb[0].mxu0
      %v3536 = vadd.f32 %v3275, %v3535
      %v3537 = vpop.f32.mrb[0].mxu0
      %3538 = vmatprep.mubr.f32.mxu0 0.0
      %v3539 = vand.u32 %v1811, 4294901760
      %3540 = vmatmul.mubr.f32.gmra.mrb[0].mxu0 %v3539
      %v3541 = vpop.f32.mrb[0].mxu0
      %v3542 = vadd.f32 %v3281, %v3541
      %v3543 = vpop.f32.mrb[0].mxu0
      %3544 = vmatprep.mubr.f32.mxu0 0.0
      %v3545 = vand.u32 %v1814, 4294901760
      %3546 = vmatmul.mubr.f32.gmra.mrb[0].mxu0 %v3545
      %v3547 = vpop.f32.mrb[0].mxu0
      %v3548 = vadd.f32 %v3287, %v3547
      %v3549 = vpop.f32.mrb[0].mxu0
      %3550 = vmatprep.mubr.f32.mxu0 0.0
      %v3551 = vand.u32 %v1817, 4294901760
      %3552 = vmatmul.mubr.f32.gmra.mrb[0].mxu0 %v3551
      %v3553 = vpop.f32.mrb[0].mxu0
      %v3554 = vadd.f32 %v3293, %v3553
      %v3555 = vpop.f32.mrb[0].mxu0
      %3556 = vmatprep.mubr.f32.mxu0 0.0
      %v3557 = vand.u32 %v1820, 4294901760
      %3558 = vmatmul.mubr.f32.gmra.mrb[0].mxu0 %v3557
      %v3559 = vpop.f32.mrb[0].mxu0
      %v3560 = vadd.f32 %v3299, %v3559
      %v3561 = vpop.f32.mrb[0].mxu0
      %3562 = vmatprep.mubr.f32.mxu0 0.0
      %v3563 = vand.u32 %v1823, 4294901760
      %3564 = vmatmul.mubr.f32.gmra.mrb[0].mxu0 %v3563
      %v3565 = vpop.f32.mrb[0].mxu0
      %v3566 = vadd.f32 %v3305, %v3565
      %v3567 = vpop.f32.mrb[0].mxu0
      %3568 = vmatprep.mubr.f32.mxu0 0.0
      %v3569 = vand.u32 %v1826, 4294901760
      %3570 = vmatmul.mubr.f32.gmra.mrb[0].mxu0 %v3569
      %v3571 = vpop.f32.mrb[0].mxu0
      %v3572 = vadd.f32 %v3311, %v3571
      %v3573 = vpop.f32.mrb[0].mxu0
      %3574 = vmatprep.mubr.f32.mxu0 0.0
      %v3575 = vand.u32 %v1829, 4294901760
      %3576 = vmatmul.mubr.f32.gmra.mrb[0].mxu0 %v3575
      %v3577 = vpop.f32.mrb[0].mxu0
      %v3578 = vadd.f32 %v3317, %v3577
      %v3579 = vpop.f32.mrb[0].mxu0
      %3580 = vmatprep.mubr.f32.mxu0 0.0
      %v3581 = vand.u32 %v1832, 4294901760
      %3582 = vmatmul.mubr.f32.gmra.mrb[0].mxu0 %v3581
      %v3583 = vpop.f32.mrb[0].mxu0
      %v3584 = vadd.f32 %v3323, %v3583
      %v3585 = vpop.f32.mrb[0].mxu0
      %3586 = vmatprep.mubr.f32.mxu0 0.0
      %v3587 = vand.u32 %v1835, 4294901760
      %3588 = vmatmul.mubr.f32.gmra.mrb[0].mxu0 %v3587
      %v3589 = vpop.f32.mrb[0].mxu0
      %v3590 = vadd.f32 %v3329, %v3589
      %v3591 = vpop.f32.mrb[0].mxu0
      %3592 = vmatprep.mubr.f32.mxu0 0.0
      %v3593 = vand.u32 %v1838, 4294901760
      %3594 = vmatmul.mubr.f32.gmra.mrb[0].mxu0 %v3593
      %v3595 = vpop.f32.mrb[0].mxu0
      %v3596 = vadd.f32 %v3335, %v3595
      %v3597 = vpop.f32.mrb[0].mxu0
      %3598 = vmatprep.mubr.f32.mxu0 0.0
      %v3599 = vand.u32 %v1841, 4294901760
      %3600 = vmatmul.mubr.f32.gmra.mrb[0].mxu0 %v3599
      %v3601 = vpop.f32.mrb[0].mxu0
      %v3602 = vadd.f32 %v3341, %v3601
      %v3603 = vpop.f32.mrb[0].mxu0
      %3604 = vmatprep.mubr.f32.mxu0 0.0
      %v3605 = vand.u32 %v1844, 4294901760
      %3606 = vmatmul.mubr.f32.gmra.mrb[0].mxu0 %v3605
      %v3607 = vpop.f32.mrb[0].mxu0
      %v3608 = vadd.f32 %v3347, %v3607
      %v3609 = vpop.f32.mrb[0].mxu0
      %3610 = vmatprep.mubr.f32.mxu0 0.0
      %v3611 = vand.u32 %v1847, 4294901760
      %3612 = vmatmul.mubr.f32.gmra.mrb[0].mxu0 %v3611
      %v3613 = vpop.f32.mrb[0].mxu0
      %v3614 = vadd.f32 %v3353, %v3613
      %v3615 = vpop.f32.mrb[0].mxu0
      %3616 = vmatprep.mubr.f32.mxu0 0.0
      %v3617 = vand.u32 %v1850, 4294901760
      %3618 = vmatmul.mubr.f32.gmra.mrb[0].mxu0 %v3617
      %v3619 = vpop.f32.mrb[0].mxu0
      %v3620 = vadd.f32 %v3359, %v3619
      %v3621 = vpop.f32.mrb[0].mxu0
      %3622 = vmatprep.mubr.f32.mxu0 0.0
      %v3623 = vand.u32 %v1853, 4294901760
      %3624 = vmatmul.mubr.f32.gmra.mrb[0].mxu0 %v3623
      %v3625 = vpop.f32.mrb[0].mxu0
      %v3626 = vadd.f32 %v3365, %v3625
      %v3627 = vpop.f32.mrb[0].mxu0
      %3628 = vmatprep.mubr.f32.mxu0 0.0
      %v3629 = vand.u32 %v1856, 4294901760
      %3630 = vmatmul.mubr.f32.gmra.mrb[0].mxu0 %v3629
      %v3631 = vpop.f32.mrb[0].mxu0
      %v3632 = vadd.f32 %v3371, %v3631
      %v3633 = vpop.f32.mrb[0].mxu0
      %3634 = vmatprep.mubr.f32.mxu0 0.0
      %v3635 = vand.u32 %v1859, 4294901760
      %3636 = vmatmul.mubr.f32.gmra.mrb[0].mxu0 %v3635
      %v3637 = vpop.f32.mrb[0].mxu0
      %v3638 = vadd.f32 %v3377, %v3637
      %v3639 = vpop.f32.mrb[0].mxu0
      %3640 = vmatprep.mubr.f32.mxu0 0.0
      %v3641 = vand.u32 %v1862, 4294901760
      %3642 = vmatmul.mubr.f32.gmra.mrb[0].mxu0 %v3641
      %v3643 = vpop.f32.mrb[0].mxu0
      %v3644 = vadd.f32 %v3383, %v3643
      %v3645 = vpop.f32.mrb[0].mxu0
      %3646 = vmatprep.mubr.f32.mxu0 0.0
      %v3647 = vand.u32 %v1865, 4294901760
      %3648 = vmatmul.mubr.f32.gmra.mrb[0].mxu0 %v3647
      %v3649 = vpop.f32.mrb[0].mxu0
      %v3650 = vadd.f32 %v3389, %v3649
      %v3651 = vpop.f32.mrb[0].mxu0
      %3652 = vmatprep.mubr.f32.mxu0 0.0
      %v3653 = vand.u32 %v1868, 4294901760
      %3654 = vmatmul.mubr.f32.gmra.mrb[0].mxu0 %v3653
      %v3655 = vpop.f32.mrb[0].mxu0
      %v3656 = vadd.f32 %v3395, %v3655
      %v3657 = vpop.f32.mrb[0].mxu0
      %3658 = vmatprep.mubr.f32.mxu0 0.0
      %v3659 = vand.u32 %v1871, 4294901760
      %3660 = vmatmul.mubr.f32.gmra.mrb[0].mxu0 %v3659
      %v3661 = vpop.f32.mrb[0].mxu0
      %v3662 = vadd.f32 %v3401, %v3661
      %v3663 = vpop.f32.mrb[0].mxu0
      %3664 = vmatprep.mubr.f32.mxu0 0.0
      %v3665 = vand.u32 %v1874, 4294901760
      %3666 = vmatmul.mubr.f32.gmra.mrb[0].mxu0 %v3665
      %v3667 = vpop.f32.mrb[0].mxu0
      %v3668 = vadd.f32 %v3407, %v3667
      %v3669 = vpop.f32.mrb[0].mxu0
      %3670 = vmatprep.mubr.f32.mxu0 0.0
      %v3671 = vand.u32 %v1877, 4294901760
      %3672 = vmatmul.mubr.f32.gmra.mrb[0].mxu0 %v3671
      %v3673 = vpop.f32.mrb[0].mxu0
      %v3674 = vadd.f32 %v3413, %v3673
      %v3675 = vpop.f32.mrb[0].mxu0
      %3676 = vmatprep.mubr.f32.mxu0 0.0
      %v3677 = vand.u32 %v1880, 4294901760
      %3678 = vmatmul.mubr.f32.gmra.mrb[0].mxu0 %v3677
      %v3679 = vpop.f32.mrb[0].mxu0
      %v3680 = vadd.f32 %v3419, %v3679
      %v3681 = vpop.f32.mrb[0].mxu0
      %3682 = vmatprep.mubr.f32.mxu0 0.0
      %v3683 = vand.u32 %v1883, 4294901760
      %3684 = vmatmul.mubr.f32.gmra.mrb[0].mxu0 %v3683
      %v3685 = vpop.f32.mrb[0].mxu0
      %v3686 = vadd.f32 %v3425, %v3685
      %v3687 = vpop.f32.mrb[0].mxu0
      %3688 = vmatprep.mubr.f32.mxu0 0.0
      %v3689 = vand.u32 %v1886, 4294901760
      %3690 = vmatmul.mubr.f32.gmra.mrb[0].mxu0 %v3689
      %v3691 = vpop.f32.mrb[0].mxu0
      %v3692 = vadd.f32 %v3431, %v3691
      %v3693 = vpop.f32.mrb[0].mxu0
      %3694 = vmatprep.mubr.f32.mxu0 0.0
      %v3695 = vand.u32 %v1889, 4294901760
      %3696 = vmatmul.mubr.f32.gmra.mrb[0].mxu0 %v3695
      %v3697 = vpop.f32.mrb[0].mxu0
      %v3698 = vadd.f32 %v3437, %v3697
      %v3699 = vpop.f32.mrb[0].mxu0
      %3700 = vmatprep.mubr.f32.mxu0 0.0
      %v3701 = vand.u32 %v1892, 4294901760
      %3702 = vmatmul.mubr.f32.gmra.mrb[0].mxu0 %v3701
      %v3703 = vpop.f32.mrb[0].mxu0
      %v3704 = vadd.f32 %v3443, %v3703
      %v3705 = vpop.f32.mrb[0].mxu0
      %3706 = vmatprep.mubr.f32.mxu0 0.0
      %v3707 = vand.u32 %v1895, 4294901760
      %3708 = vmatmul.mubr.f32.gmra.mrb[0].mxu0 %v3707
      %v3709 = vpop.f32.mrb[0].mxu0
      %v3710 = vadd.f32 %v3449, %v3709
      %v3711 = vpop.f32.mrb[0].mxu0
      %3712 = vmatprep.mubr.f32.mxu0 0.0
      %v3713 = vand.u32 %v1898, 4294901760
      %3714 = vmatmul.mubr.f32.gmra.mrb[0].mxu0 %v3713
      %v3715 = vpop.f32.mrb[0].mxu0
      %v3716 = vadd.f32 %v3455, %v3715
      %v3717 = vpop.f32.mrb[0].mxu0
      %3718 = vmatprep.mubr.f32.mxu0 0.0
      %v3719 = vand.u32 %v1901, 4294901760
      %3720 = vmatmul.mubr.f32.gmra.mrb[0].mxu0 %v3719
      %v3721 = vpop.f32.mrb[0].mxu0
      %v3722 = vadd.f32 %v3461, %v3721
      %v3723 = vpop.f32.mrb[0].mxu0
      %3724 = vdwg.mxu0
      %v3725 = vmax.f32 %v3536, 0.0
      %v3726 = vmax.f32 %v3542, 0.0
      %v3727 = vmax.f32 %v3548, 0.0
      %v3728 = vmax.f32 %v3554, 0.0
      %v3729 = vmax.f32 %v3560, 0.0
      %v3730 = vmax.f32 %v3566, 0.0
      %v3731 = vmax.f32 %v3572, 0.0
      %v3732 = vmax.f32 %v3578, 0.0
      %v3733 = vmax.f32 %v3584, 0.0
      %v3734 = vmax.f32 %v3590, 0.0
      %v3735 = vmax.f32 %v3596, 0.0
      %v3736 = vmax.f32 %v3602, 0.0
      %v3737 = vmax.f32 %v3608, 0.0
      %v3738 = vmax.f32 %v3614, 0.0
      %v3739 = vmax.f32 %v3620, 0.0
      %v3740 = vmax.f32 %v3626, 0.0
      %v3741 = vmax.f32 %v3632, 0.0
      %v3742 = vmax.f32 %v3638, 0.0
      %v3743 = vmax.f32 %v3644, 0.0
      %v3744 = vmax.f32 %v3650, 0.0
      %v3745 = vmax.f32 %v3656, 0.0
      %v3746 = vmax.f32 %v3662, 0.0
      %v3747 = vmax.f32 %v3668, 0.0
      %v3748 = vmax.f32 %v3674, 0.0
      %v3749 = vmax.f32 %v3680, 0.0
      %v3750 = vmax.f32 %v3686, 0.0
      %v3751 = vmax.f32 %v3692, 0.0
      %v3752 = vmax.f32 %v3698, 0.0
      %v3753 = vmax.f32 %v3704, 0.0
      %v3754 = vmax.f32 %v3710, 0.0
      %v3755 = vmax.f32 %v3716, 0.0
      %v3756 = vmax.f32 %v3722, 0.0
      %v3757 = vld [vmem:[%s5] sm:$0x7]
      %v3758 = vld [vmem:[%s6] sm:$0x1]
      %v3760 = vlaneseq
      %v3761 = vshrl.u32 %v3760, 7
      %v3762 = vsub.s32 0, %v3761
      %v3763 = vrot.slane %v3758, %v3762
      %v3765 = vsel %vm1531, %v446, 0
      %v3767 = vsel %vm1531, %v447, 0
      %v3769 = vsel %vm1531, %v448, 0
      %v3771 = vsel %vm1531, %v449, 0
      %v3773 = vsel %vm1531, %v450, 0
      %v3775 = vsel %vm1531, %v451, 0
      %v3777 = vsel %vm1531, %v452, 0
      %v3779 = vsel %vm1531, %v453, 0
      %v3781 = vsel %vm1531, %v454, 0
      %v3783 = vsel %vm1531, %v455, 0
      %v3785 = vsel %vm1531, %v456, 0
      %v3787 = vsel %vm1531, %v457, 0
      %v3789 = vsel %vm1531, %v458, 0
      %v3791 = vsel %vm1531, %v459, 0
      %v3793 = vsel %vm1531, %v460, 0
      %v3795 = vsel %vm1531, %v461, 0
      %v3797 = vsel %vm1531, %v462, 0
      %v3799 = vsel %vm1531, %v463, 0
      %v3801 = vsel %vm1531, %v464, 0
      %v3803 = vsel %vm1531, %v465, 0
      %v3805 = vsel %vm1531, %v466, 0
      %v3807 = vsel %vm1531, %v467, 0
      %v3809 = vsel %vm1531, %v468, 0
      %v3811 = vsel %vm1531, %v469, 0
      %v3813 = vsel %vm1531, %v470, 0
      %v3815 = vsel %vm1531, %v471, 0
      %v3817 = vsel %vm1531, %v472, 0
      %v3819 = vsel %vm1531, %v473, 0
      %v3821 = vsel %vm1531, %v474, 0
      %v3823 = vsel %vm1531, %v475, 0
      %v3825 = vsel %vm1531, %v476, 0
      %v3827 = vsel %vm1531, %v477, 0
      %v3830 = vsel %vm1903, %v3757, 0
      %3832 = vmatprep.subr.mxu0 0.0
      %v3833 = vand.u32 %v3830, 4294901760
      %3834 = vmatpush1.msra.mxu0 %v3833
      %3835 = vmatprep.subr.mxu0 0.0
      %3836 = vmatpush1.msra.mxu0 0.0
      %3837 = vmatprep.subr.mxu0 0.0
      %3838 = vmatpush1.msra.mxu0 0.0
      %3839 = vmatprep.subr.mxu0 0.0
      %3840 = vmatpush1.msra.mxu0 0.0
      %3841 = vmatprep.subr.mxu0 0.0
      %3842 = vmatpush1.msra.mxu0 0.0
      %3843 = vmatprep.subr.mxu0 0.0
      %3844 = vmatpush1.msra.mxu0 0.0
      %3845 = vmatprep.subr.mxu0 0.0
      %3846 = vmatpush1.msra.mxu0 0.0
      %3847 = vmatprep.subr.mxu0 0.0
      %3848 = vmatpush1.msra.mxu0 0.0
      %3849 = vmatprep.subr.mxu0 0.0
      %3850 = vmatpush1.msra.mxu0 0.0
      %3851 = vmatprep.subr.mxu0 0.0
      %3852 = vmatpush1.msra.mxu0 0.0
      %3853 = vmatprep.subr.mxu0 0.0
      %3854 = vmatpush1.msra.mxu0 0.0
      %3855 = vmatprep.subr.mxu0 0.0
      %3856 = vmatpush1.msra.mxu0 0.0
      %3857 = vmatprep.subr.mxu0 0.0
      %3858 = vmatpush1.msra.mxu0 0.0
      %3859 = vmatprep.subr.mxu0 0.0
      %3860 = vmatpush1.msra.mxu0 0.0
      %3861 = vmatprep.subr.mxu0 0.0
      %3862 = vmatpush1.msra.mxu0 0.0
      %3863 = vmatprep.subr.mxu0 0.0
      %3864 = vmatpush1.msra.mxu0 0.0
      %3865 = vmatprep.subr.mxu0 0.0
      %3866 = vmatpush1.msra.mxu0 0.0
      %3867 = vmatprep.subr.mxu0 0.0
      %3868 = vmatpush1.msra.mxu0 0.0
      %3869 = vmatprep.subr.mxu0 0.0
      %3870 = vmatpush1.msra.mxu0 0.0
      %3871 = vmatprep.subr.mxu0 0.0
      %3872 = vmatpush1.msra.mxu0 0.0
      %3873 = vmatprep.subr.mxu0 0.0
      %3874 = vmatpush1.msra.mxu0 0.0
      %3875 = vmatprep.subr.mxu0 0.0
      %3876 = vmatpush1.msra.mxu0 0.0
      %3877 = vmatprep.subr.mxu0 0.0
      %3878 = vmatpush1.msra.mxu0 0.0
      %3879 = vmatprep.subr.mxu0 0.0
      %3880 = vmatpush1.msra.mxu0 0.0
      %3881 = vmatprep.subr.mxu0 0.0
      %3882 = vmatpush1.msra.mxu0 0.0
      %3883 = vmatprep.subr.mxu0 0.0
      %3884 = vmatpush1.msra.mxu0 0.0
      %3885 = vmatprep.subr.mxu0 0.0
      %3886 = vmatpush1.msra.mxu0 0.0
      %3887 = vmatprep.subr.mxu0 0.0
      %3888 = vmatpush1.msra.mxu0 0.0
      %3889 = vmatprep.subr.mxu0 0.0
      %3890 = vmatpush1.msra.mxu0 0.0
      %3891 = vmatprep.subr.mxu0 0.0
      %3892 = vmatpush1.msra.mxu0 0.0
      %3893 = vmatprep.subr.mxu0 0.0
      %3894 = vmatpush1.msra.mxu0 0.0
      %3895 = vmatprep.subr.mxu0 0.0
      %3896 = vmatpush1.msra.mxu0 0.0
      %3897 = vmatprep.mubr.f32.mxu0 0.0
      %v3898 = vand.u32 %v3765, 4294901760
      %v3899 = vsub.f32 %v3765, %v3898
      %v3900 = vand.u32 %v3899, 4294901760
      %v3901 = vsub.f32 %v3899, %v3900
      %v3902 = vand.u32 %v3901, 4294901760
      %3903 = vmatmul.mubr.f32.gmra.mrb[0].mxu0 %v3902
      %v3904 = vpop.f32.mrb[0].mxu0
      %v3905 = vadd.f32 %v3763, %v3904
      %v3906 = vpop.f32.mrb[0].mxu0
      %3907 = vmatprep.mubr.f32.mxu0 0.0
      %v3908 = vand.u32 %v3767, 4294901760
      %v3909 = vsub.f32 %v3767, %v3908
      %v3910 = vand.u32 %v3909, 4294901760
      %v3911 = vsub.f32 %v3909, %v3910
      %v3912 = vand.u32 %v3911, 4294901760
      %3913 = vmatmul.mubr.f32.gmra.mrb[0].mxu0 %v3912
      %v3914 = vpop.f32.mrb[0].mxu0
      %v3915 = vadd.f32 %v3763, %v3914
      %v3916 = vpop.f32.mrb[0].mxu0
      %3917 = vmatprep.mubr.f32.mxu0 0.0
      %v3918 = vand.u32 %v3769, 4294901760
      %v3919 = vsub.f32 %v3769, %v3918
      %v3920 = vand.u32 %v3919, 4294901760
      %v3921 = vsub.f32 %v3919, %v3920
      %v3922 = vand.u32 %v3921, 4294901760
      %3923 = vmatmul.mubr.f32.gmra.mrb[0].mxu0 %v3922
      %v3924 = vpop.f32.mrb[0].mxu0
      %v3925 = vadd.f32 %v3763, %v3924
      %v3926 = vpop.f32.mrb[0].mxu0
      %3927 = vmatprep.mubr.f32.mxu0 0.0
      %v3928 = vand.u32 %v3771, 4294901760
      %v3929 = vsub.f32 %v3771, %v3928
      %v3930 = vand.u32 %v3929, 4294901760
      %v3931 = vsub.f32 %v3929, %v3930
      %v3932 = vand.u32 %v3931, 4294901760
      %3933 = vmatmul.mubr.f32.gmra.mrb[0].mxu0 %v3932
      %v3934 = vpop.f32.mrb[0].mxu0
      %v3935 = vadd.f32 %v3763, %v3934
      %v3936 = vpop.f32.mrb[0].mxu0
      %3937 = vmatprep.mubr.f32.mxu0 0.0
      %v3938 = vand.u32 %v3773, 4294901760
      %v3939 = vsub.f32 %v3773, %v3938
      %v3940 = vand.u32 %v3939, 4294901760
      %v3941 = vsub.f32 %v3939, %v3940
      %v3942 = vand.u32 %v3941, 4294901760
      %3943 = vmatmul.mubr.f32.gmra.mrb[0].mxu0 %v3942
      %v3944 = vpop.f32.mrb[0].mxu0
      %v3945 = vadd.f32 %v3763, %v3944
      %v3946 = vpop.f32.mrb[0].mxu0
      %3947 = vmatprep.mubr.f32.mxu0 0.0
      %v3948 = vand.u32 %v3775, 4294901760
      %v3949 = vsub.f32 %v3775, %v3948
      %v3950 = vand.u32 %v3949, 4294901760
      %v3951 = vsub.f32 %v3949, %v3950
      %v3952 = vand.u32 %v3951, 4294901760
      %3953 = vmatmul.mubr.f32.gmra.mrb[0].mxu0 %v3952
      %v3954 = vpop.f32.mrb[0].mxu0
      %v3955 = vadd.f32 %v3763, %v3954
      %v3956 = vpop.f32.mrb[0].mxu0
      %3957 = vmatprep.mubr.f32.mxu0 0.0
      %v3958 = vand.u32 %v3777, 4294901760
      %v3959 = vsub.f32 %v3777, %v3958
      %v3960 = vand.u32 %v3959, 4294901760
      %v3961 = vsub.f32 %v3959, %v3960
      %v3962 = vand.u32 %v3961, 4294901760
      %3963 = vmatmul.mubr.f32.gmra.mrb[0].mxu0 %v3962
      %v3964 = vpop.f32.mrb[0].mxu0
      %v3965 = vadd.f32 %v3763, %v3964
      %v3966 = vpop.f32.mrb[0].mxu0
      %3967 = vmatprep.mubr.f32.mxu0 0.0
      %v3968 = vand.u32 %v3779, 4294901760
      %v3969 = vsub.f32 %v3779, %v3968
      %v3970 = vand.u32 %v3969, 4294901760
      %v3971 = vsub.f32 %v3969, %v3970
      %v3972 = vand.u32 %v3971, 4294901760
      %3973 = vmatmul.mubr.f32.gmra.mrb[0].mxu0 %v3972
      %v3974 = vpop.f32.mrb[0].mxu0
      %v3975 = vadd.f32 %v3763, %v3974
      %v3976 = vpop.f32.mrb[0].mxu0
      %3977 = vmatprep.mubr.f32.mxu0 0.0
      %v3978 = vand.u32 %v3781, 4294901760
      %v3979 = vsub.f32 %v3781, %v3978
      %v3980 = vand.u32 %v3979, 4294901760
      %v3981 = vsub.f32 %v3979, %v3980
      %v3982 = vand.u32 %v3981, 4294901760
      %3983 = vmatmul.mubr.f32.gmra.mrb[0].mxu0 %v3982
      %v3984 = vpop.f32.mrb[0].mxu0
      %v3985 = vadd.f32 %v3763, %v3984
      %v3986 = vpop.f32.mrb[0].mxu0
      %3987 = vmatprep.mubr.f32.mxu0 0.0
      %v3988 = vand.u32 %v3783, 4294901760
      %v3989 = vsub.f32 %v3783, %v3988
      %v3990 = vand.u32 %v3989, 4294901760
      %v3991 = vsub.f32 %v3989, %v3990
      %v3992 = vand.u32 %v3991, 4294901760
      %3993 = vmatmul.mubr.f32.gmra.mrb[0].mxu0 %v3992
      %v3994 = vpop.f32.mrb[0].mxu0
      %v3995 = vadd.f32 %v3763, %v3994
      %v3996 = vpop.f32.mrb[0].mxu0
      %3997 = vmatprep.mubr.f32.mxu0 0.0
      %v3998 = vand.u32 %v3785, 4294901760
      %v3999 = vsub.f32 %v3785, %v3998
      %v4000 = vand.u32 %v3999, 4294901760
      %v4001 = vsub.f32 %v3999, %v4000
      %v4002 = vand.u32 %v4001, 4294901760
      %4003 = vmatmul.mubr.f32.gmra.mrb[0].mxu0 %v4002
      %v4004 = vpop.f32.mrb[0].mxu0
      %v4005 = vadd.f32 %v3763, %v4004
      %v4006 = vpop.f32.mrb[0].mxu0
      %4007 = vmatprep.mubr.f32.mxu0 0.0
      %v4008 = vand.u32 %v3787, 4294901760
      %v4009 = vsub.f32 %v3787, %v4008
      %v4010 = vand.u32 %v4009, 4294901760
      %v4011 = vsub.f32 %v4009, %v4010
      %v4012 = vand.u32 %v4011, 4294901760
      %4013 = vmatmul.mubr.f32.gmra.mrb[0].mxu0 %v4012
      %v4014 = vpop.f32.mrb[0].mxu0
      %v4015 = vadd.f32 %v3763, %v4014
      %v4016 = vpop.f32.mrb[0].mxu0
      %4017 = vmatprep.mubr.f32.mxu0 0.0
      %v4018 = vand.u32 %v3789, 4294901760
      %v4019 = vsub.f32 %v3789, %v4018
      %v4020 = vand.u32 %v4019, 4294901760
      %v4021 = vsub.f32 %v4019, %v4020
      %v4022 = vand.u32 %v4021, 4294901760
      %4023 = vmatmul.mubr.f32.gmra.mrb[0].mxu0 %v4022
      %v4024 = vpop.f32.mrb[0].mxu0
      %v4025 = vadd.f32 %v3763, %v4024
      %v4026 = vpop.f32.mrb[0].mxu0
      %4027 = vmatprep.mubr.f32.mxu0 0.0
      %v4028 = vand.u32 %v3791, 4294901760
      %v4029 = vsub.f32 %v3791, %v4028
      %v4030 = vand.u32 %v4029, 4294901760
      %v4031 = vsub.f32 %v4029, %v4030
      %v4032 = vand.u32 %v4031, 4294901760
      %4033 = vmatmul.mubr.f32.gmra.mrb[0].mxu0 %v4032
      %v4034 = vpop.f32.mrb[0].mxu0
      %v4035 = vadd.f32 %v3763, %v4034
      %v4036 = vpop.f32.mrb[0].mxu0
      %4037 = vmatprep.mubr.f32.mxu0 0.0
      %v4038 = vand.u32 %v3793, 4294901760
      %v4039 = vsub.f32 %v3793, %v4038
      %v4040 = vand.u32 %v4039, 4294901760
      %v4041 = vsub.f32 %v4039, %v4040
      %v4042 = vand.u32 %v4041, 4294901760
      %4043 = vmatmul.mubr.f32.gmra.mrb[0].mxu0 %v4042
      %v4044 = vpop.f32.mrb[0].mxu0
      %v4045 = vadd.f32 %v3763, %v4044
      %v4046 = vpop.f32.mrb[0].mxu0
      %4047 = vmatprep.mubr.f32.mxu0 0.0
      %v4048 = vand.u32 %v3795, 4294901760
      %v4049 = vsub.f32 %v3795, %v4048
      %v4050 = vand.u32 %v4049, 4294901760
      %v4051 = vsub.f32 %v4049, %v4050
      %v4052 = vand.u32 %v4051, 4294901760
      %4053 = vmatmul.mubr.f32.gmra.mrb[0].mxu0 %v4052
      %v4054 = vpop.f32.mrb[0].mxu0
      %v4055 = vadd.f32 %v3763, %v4054
      %v4056 = vpop.f32.mrb[0].mxu0
      %4057 = vmatprep.mubr.f32.mxu0 0.0
      %v4058 = vand.u32 %v3797, 4294901760
      %v4059 = vsub.f32 %v3797, %v4058
      %v4060 = vand.u32 %v4059, 4294901760
      %v4061 = vsub.f32 %v4059, %v4060
      %v4062 = vand.u32 %v4061, 4294901760
      %4063 = vmatmul.mubr.f32.gmra.mrb[0].mxu0 %v4062
      %v4064 = vpop.f32.mrb[0].mxu0
      %v4065 = vadd.f32 %v3763, %v4064
      %v4066 = vpop.f32.mrb[0].mxu0
      %4067 = vmatprep.mubr.f32.mxu0 0.0
      %v4068 = vand.u32 %v3799, 4294901760
      %v4069 = vsub.f32 %v3799, %v4068
      %v4070 = vand.u32 %v4069, 4294901760
      %v4071 = vsub.f32 %v4069, %v4070
      %v4072 = vand.u32 %v4071, 4294901760
      %4073 = vmatmul.mubr.f32.gmra.mrb[0].mxu0 %v4072
      %v4074 = vpop.f32.mrb[0].mxu0
      %v4075 = vadd.f32 %v3763, %v4074
      %v4076 = vpop.f32.mrb[0].mxu0
      %4077 = vmatprep.mubr.f32.mxu0 0.0
      %v4078 = vand.u32 %v3801, 4294901760
      %v4079 = vsub.f32 %v3801, %v4078
      %v4080 = vand.u32 %v4079, 4294901760
      %v4081 = vsub.f32 %v4079, %v4080
      %v4082 = vand.u32 %v4081, 4294901760
      %4083 = vmatmul.mubr.f32.gmra.mrb[0].mxu0 %v4082
      %v4084 = vpop.f32.mrb[0].mxu0
      %v4085 = vadd.f32 %v3763, %v4084
      %v4086 = vpop.f32.mrb[0].mxu0
      %4087 = vmatprep.mubr.f32.mxu0 0.0
      %v4088 = vand.u32 %v3803, 4294901760
      %v4089 = vsub.f32 %v3803, %v4088
      %v4090 = vand.u32 %v4089, 4294901760
      %v4091 = vsub.f32 %v4089, %v4090
      %v4092 = vand.u32 %v4091, 4294901760
      %4093 = vmatmul.mubr.f32.gmra.mrb[0].mxu0 %v4092
      %v4094 = vpop.f32.mrb[0].mxu0
      %v4095 = vadd.f32 %v3763, %v4094
      %v4096 = vpop.f32.mrb[0].mxu0
      %4097 = vmatprep.mubr.f32.mxu0 0.0
      %v4098 = vand.u32 %v3805, 4294901760
      %v4099 = vsub.f32 %v3805, %v4098
      %v4100 = vand.u32 %v4099, 4294901760
      %v4101 = vsub.f32 %v4099, %v4100
      %v4102 = vand.u32 %v4101, 4294901760
      %4103 = vmatmul.mubr.f32.gmra.mrb[0].mxu0 %v4102
      %v4104 = vpop.f32.mrb[0].mxu0
      %v4105 = vadd.f32 %v3763, %v4104
      %v4106 = vpop.f32.mrb[0].mxu0
      %4107 = vmatprep.mubr.f32.mxu0 0.0
      %v4108 = vand.u32 %v3807, 4294901760
      %v4109 = vsub.f32 %v3807, %v4108
      %v4110 = vand.u32 %v4109, 4294901760
      %v4111 = vsub.f32 %v4109, %v4110
      %v4112 = vand.u32 %v4111, 4294901760
      %4113 = vmatmul.mubr.f32.gmra.mrb[0].mxu0 %v4112
      %v4114 = vpop.f32.mrb[0].mxu0
      %v4115 = vadd.f32 %v3763, %v4114
      %v4116 = vpop.f32.mrb[0].mxu0
      %4117 = vmatprep.mubr.f32.mxu0 0.0
      %v4118 = vand.u32 %v3809, 4294901760
      %v4119 = vsub.f32 %v3809, %v4118
      %v4120 = vand.u32 %v4119, 4294901760
      %v4121 = vsub.f32 %v4119, %v4120
      %v4122 = vand.u32 %v4121, 4294901760
      %4123 = vmatmul.mubr.f32.gmra.mrb[0].mxu0 %v4122
      %v4124 = vpop.f32.mrb[0].mxu0
      %v4125 = vadd.f32 %v3763, %v4124
      %v4126 = vpop.f32.mrb[0].mxu0
      %4127 = vmatprep.mubr.f32.mxu0 0.0
      %v4128 = vand.u32 %v3811, 4294901760
      %v4129 = vsub.f32 %v3811, %v4128
      %v4130 = vand.u32 %v4129, 4294901760
      %v4131 = vsub.f32 %v4129, %v4130
      %v4132 = vand.u32 %v4131, 4294901760
      %4133 = vmatmul.mubr.f32.gmra.mrb[0].mxu0 %v4132
      %v4134 = vpop.f32.mrb[0].mxu0
      %v4135 = vadd.f32 %v3763, %v4134
      %v4136 = vpop.f32.mrb[0].mxu0
      %4137 = vmatprep.mubr.f32.mxu0 0.0
      %v4138 = vand.u32 %v3813, 4294901760
      %v4139 = vsub.f32 %v3813, %v4138
      %v4140 = vand.u32 %v4139, 4294901760
      %v4141 = vsub.f32 %v4139, %v4140
      %v4142 = vand.u32 %v4141, 4294901760
      %4143 = vmatmul.mubr.f32.gmra.mrb[0].mxu0 %v4142
      %v4144 = vpop.f32.mrb[0].mxu0
      %v4145 = vadd.f32 %v3763, %v4144
      %v4146 = vpop.f32.mrb[0].mxu0
      %4147 = vmatprep.mubr.f32.mxu0 0.0
      %v4148 = vand.u32 %v3815, 4294901760
      %v4149 = vsub.f32 %v3815, %v4148
      %v4150 = vand.u32 %v4149, 4294901760
      %v4151 = vsub.f32 %v4149, %v4150
      %v4152 = vand.u32 %v4151, 4294901760
      %4153 = vmatmul.mubr.f32.gmra.mrb[0].mxu0 %v4152
      %v4154 = vpop.f32.mrb[0].mxu0
      %v4155 = vadd.f32 %v3763, %v4154
      %v4156 = vpop.f32.mrb[0].mxu0
      %4157 = vmatprep.mubr.f32.mxu0 0.0
      %v4158 = vand.u32 %v3817, 4294901760
      %v4159 = vsub.f32 %v3817, %v4158
      %v4160 = vand.u32 %v4159, 4294901760
      %v4161 = vsub.f32 %v4159, %v4160
      %v4162 = vand.u32 %v4161, 4294901760
      %4163 = vmatmul.mubr.f32.gmra.mrb[0].mxu0 %v4162
      %v4164 = vpop.f32.mrb[0].mxu0
      %v4165 = vadd.f32 %v3763, %v4164
      %v4166 = vpop.f32.mrb[0].mxu0
      %4167 = vmatprep.mubr.f32.mxu0 0.0
      %v4168 = vand.u32 %v3819, 4294901760
      %v4169 = vsub.f32 %v3819, %v4168
      %v4170 = vand.u32 %v4169, 4294901760
      %v4171 = vsub.f32 %v4169, %v4170
      %v4172 = vand.u32 %v4171, 4294901760
      %4173 = vmatmul.mubr.f32.gmra.mrb[0].mxu0 %v4172
      %v4174 = vpop.f32.mrb[0].mxu0
      %v4175 = vadd.f32 %v3763, %v4174
      %v4176 = vpop.f32.mrb[0].mxu0
      %4177 = vmatprep.mubr.f32.mxu0 0.0
      %v4178 = vand.u32 %v3821, 4294901760
      %v4179 = vsub.f32 %v3821, %v4178
      %v4180 = vand.u32 %v4179, 4294901760
      %v4181 = vsub.f32 %v4179, %v4180
      %v4182 = vand.u32 %v4181, 4294901760
      %4183 = vmatmul.mubr.f32.gmra.mrb[0].mxu0 %v4182
      %v4184 = vpop.f32.mrb[0].mxu0
      %v4185 = vadd.f32 %v3763, %v4184
      %v4186 = vpop.f32.mrb[0].mxu0
      %4187 = vmatprep.mubr.f32.mxu0 0.0
      %v4188 = vand.u32 %v3823, 4294901760
      %v4189 = vsub.f32 %v3823, %v4188
      %v4190 = vand.u32 %v4189, 4294901760
      %v4191 = vsub.f32 %v4189, %v4190
      %v4192 = vand.u32 %v4191, 4294901760
      %4193 = vmatmul.mubr.f32.gmra.mrb[0].mxu0 %v4192
      %v4194 = vpop.f32.mrb[0].mxu0
      %v4195 = vadd.f32 %v3763, %v4194
      %v4196 = vpop.f32.mrb[0].mxu0
      %4197 = vmatprep.mubr.f32.mxu0 0.0
      %v4198 = vand.u32 %v3825, 4294901760
      %v4199 = vsub.f32 %v3825, %v4198
      %v4200 = vand.u32 %v4199, 4294901760
      %v4201 = vsub.f32 %v4199, %v4200
      %v4202 = vand.u32 %v4201, 4294901760
      %4203 = vmatmul.mubr.f32.gmra.mrb[0].mxu0 %v4202
      %v4204 = vpop.f32.mrb[0].mxu0
      %v4205 = vadd.f32 %v3763, %v4204
      %v4206 = vpop.f32.mrb[0].mxu0
      %4207 = vmatprep.mubr.f32.mxu0 0.0
      %v4208 = vand.u32 %v3827, 4294901760
      %v4209 = vsub.f32 %v3827, %v4208
      %v4210 = vand.u32 %v4209, 4294901760
      %v4211 = vsub.f32 %v4209, %v4210
      %v4212 = vand.u32 %v4211, 4294901760
      %4213 = vmatmul.mubr.f32.gmra.mrb[0].mxu0 %v4212
      %v4214 = vpop.f32.mrb[0].mxu0
      %v4215 = vadd.f32 %v3763, %v4214
      %v4216 = vpop.f32.mrb[0].mxu0
      %4217 = vdwg.mxu0
      %4218 = vmatprep.subr.mxu0 0.0
      %v4219 = vand.u32 %v3830, 4294901760
      %v4220 = vsub.f32 %v3830, %v4219
      %v4221 = vand.u32 %v4220, 4294901760
      %v4222 = vsub.f32 %v4220, %v4221
      %v4223 = vand.u32 %v4222, 4294901760
      %4224 = vmatpush1.msra.mxu0 %v4223
      %4225 = vmatprep.subr.mxu0 0.0
      %4226 = vmatpush1.msra.mxu0 0.0
      %4227 = vmatprep.subr.mxu0 0.0
      %4228 = vmatpush1.msra.mxu0 0.0
      %4229 = vmatprep.subr.mxu0 0.0
      %4230 = vmatpush1.msra.mxu0 0.0
      %4231 = vmatprep.subr.mxu0 0.0
      %4232 = vmatpush1.msra.mxu0 0.0
      %4233 = vmatprep.subr.mxu0 0.0
      %4234 = vmatpush1.msra.mxu0 0.0
      %4235 = vmatprep.subr.mxu0 0.0
      %4236 = vmatpush1.msra.mxu0 0.0
      %4237 = vmatprep.subr.mxu0 0.0
      %4238 = vmatpush1.msra.mxu0 0.0
      %4239 = vmatprep.subr.mxu0 0.0
      %4240 = vmatpush1.msra.mxu0 0.0
      %4241 = vmatprep.subr.mxu0 0.0
      %4242 = vmatpush1.msra.mxu0 0.0
      %4243 = vmatprep.subr.mxu0 0.0
      %4244 = vmatpush1.msra.mxu0 0.0
      %4245 = vmatprep.subr.mxu0 0.0
      %4246 = vmatpush1.msra.mxu0 0.0
      %4247 = vmatprep.subr.mxu0 0.0
      %4248 = vmatpush1.msra.mxu0 0.0
      %4249 = vmatprep.subr.mxu0 0.0
      %4250 = vmatpush1.msra.mxu0 0.0
      %4251 = vmatprep.subr.mxu0 0.0
      %4252 = vmatpush1.msra.mxu0 0.0
      %4253 = vmatprep.subr.mxu0 0.0
      %4254 = vmatpush1.msra.mxu0 0.0
      %4255 = vmatprep.subr.mxu0 0.0
      %4256 = vmatpush1.msra.mxu0 0.0
      %4257 = vmatprep.subr.mxu0 0.0
      %4258 = vmatpush1.msra.mxu0 0.0
      %4259 = vmatprep.subr.mxu0 0.0
      %4260 = vmatpush1.msra.mxu0 0.0
      %4261 = vmatprep.subr.mxu0 0.0
      %4262 = vmatpush1.msra.mxu0 0.0
      %4263 = vmatprep.subr.mxu0 0.0
      %4264 = vmatpush1.msra.mxu0 0.0
      %4265 = vmatprep.subr.mxu0 0.0
      %4266 = vmatpush1.msra.mxu0 0.0
      %4267 = vmatprep.subr.mxu0 0.0
      %4268 = vmatpush1.msra.mxu0 0.0
      %4269 = vmatprep.subr.mxu0 0.0
      %4270 = vmatpush1.msra.mxu0 0.0
      %4271 = vmatprep.subr.mxu0 0.0
      %4272 = vmatpush1.msra.mxu0 0.0
      %4273 = vmatprep.subr.mxu0 0.0
      %4274 = vmatpush1.msra.mxu0 0.0
      %4275 = vmatprep.subr.mxu0 0.0
      %4276 = vmatpush1.msra.mxu0 0.0
      %4277 = vmatprep.subr.mxu0 0.0
      %4278 = vmatpush1.msra.mxu0 0.0
      %4279 = vmatprep.subr.mxu0 0.0
      %4280 = vmatpush1.msra.mxu0 0.0
      %4281 = vmatprep.subr.mxu0 0.0
      %4282 = vmatpush1.msra.mxu0 0.0
      %4283 = vmatprep.subr.mxu0 0.0
      %4284 = vmatpush1.msra.mxu0 0.0
      %4285 = vmatprep.subr.mxu0 0.0
      %4286 = vmatpush1.msra.mxu0 0.0
      %4287 = vmatprep.mubr.f32.mxu0 0.0
      %v4288 = vand.u32 %v3765, 4294901760
      %4289 = vmatmul.mubr.f32.gmra.mrb[0].mxu0 %v4288
      %v4290 = vpop.f32.mrb[0].mxu0
      %v4291 = vadd.f32 %v3905, %v4290
      %v4292 = vpop.f32.mrb[0].mxu0
      %4293 = vmatprep.mubr.f32.mxu0 0.0
      %v4294 = vand.u32 %v3767, 4294901760
      %4295 = vmatmul.mubr.f32.gmra.mrb[0].mxu0 %v4294
      %v4296 = vpop.f32.mrb[0].mxu0
      %v4297 = vadd.f32 %v3915, %v4296
      %v4298 = vpop.f32.mrb[0].mxu0
      %4299 = vmatprep.mubr.f32.mxu0 0.0
      %v4300 = vand.u32 %v3769, 4294901760
      %4301 = vmatmul.mubr.f32.gmra.mrb[0].mxu0 %v4300
      %v4302 = vpop.f32.mrb[0].mxu0
      %v4303 = vadd.f32 %v3925, %v4302
      %v4304 = vpop.f32.mrb[0].mxu0
      %4305 = vmatprep.mubr.f32.mxu0 0.0
      %v4306 = vand.u32 %v3771, 4294901760
      %4307 = vmatmul.mubr.f32.gmra.mrb[0].mxu0 %v4306
      %v4308 = vpop.f32.mrb[0].mxu0
      %v4309 = vadd.f32 %v3935, %v4308
      %v4310 = vpop.f32.mrb[0].mxu0
      %4311 = vmatprep.mubr.f32.mxu0 0.0
      %v4312 = vand.u32 %v3773, 4294901760
      %4313 = vmatmul.mubr.f32.gmra.mrb[0].mxu0 %v4312
      %v4314 = vpop.f32.mrb[0].mxu0
      %v4315 = vadd.f32 %v3945, %v4314
      %v4316 = vpop.f32.mrb[0].mxu0
      %4317 = vmatprep.mubr.f32.mxu0 0.0
      %v4318 = vand.u32 %v3775, 4294901760
      %4319 = vmatmul.mubr.f32.gmra.mrb[0].mxu0 %v4318
      %v4320 = vpop.f32.mrb[0].mxu0
      %v4321 = vadd.f32 %v3955, %v4320
      %v4322 = vpop.f32.mrb[0].mxu0
      %4323 = vmatprep.mubr.f32.mxu0 0.0
      %v4324 = vand.u32 %v3777, 4294901760
      %4325 = vmatmul.mubr.f32.gmra.mrb[0].mxu0 %v4324
      %v4326 = vpop.f32.mrb[0].mxu0
      %v4327 = vadd.f32 %v3965, %v4326
      %v4328 = vpop.f32.mrb[0].mxu0
      %4329 = vmatprep.mubr.f32.mxu0 0.0
      %v4330 = vand.u32 %v3779, 4294901760
      %4331 = vmatmul.mubr.f32.gmra.mrb[0].mxu0 %v4330
      %v4332 = vpop.f32.mrb[0].mxu0
      %v4333 = vadd.f32 %v3975, %v4332
      %v4334 = vpop.f32.mrb[0].mxu0
      %4335 = vmatprep.mubr.f32.mxu0 0.0
      %v4336 = vand.u32 %v3781, 4294901760
      %4337 = vmatmul.mubr.f32.gmra.mrb[0].mxu0 %v4336
      %v4338 = vpop.f32.mrb[0].mxu0
      %v4339 = vadd.f32 %v3985, %v4338
      %v4340 = vpop.f32.mrb[0].mxu0
      %4341 = vmatprep.mubr.f32.mxu0 0.0
      %v4342 = vand.u32 %v3783, 4294901760
      %4343 = vmatmul.mubr.f32.gmra.mrb[0].mxu0 %v4342
      %v4344 = vpop.f32.mrb[0].mxu0
      %v4345 = vadd.f32 %v3995, %v4344
      %v4346 = vpop.f32.mrb[0].mxu0
      %4347 = vmatprep.mubr.f32.mxu0 0.0
      %v4348 = vand.u32 %v3785, 4294901760
      %4349 = vmatmul.mubr.f32.gmra.mrb[0].mxu0 %v4348
      %v4350 = vpop.f32.mrb[0].mxu0
      %v4351 = vadd.f32 %v4005, %v4350
      %v4352 = vpop.f32.mrb[0].mxu0
      %4353 = vmatprep.mubr.f32.mxu0 0.0
      %v4354 = vand.u32 %v3787, 4294901760
      %4355 = vmatmul.mubr.f32.gmra.mrb[0].mxu0 %v4354
      %v4356 = vpop.f32.mrb[0].mxu0
      %v4357 = vadd.f32 %v4015, %v4356
      %v4358 = vpop.f32.mrb[0].mxu0
      %4359 = vmatprep.mubr.f32.mxu0 0.0
      %v4360 = vand.u32 %v3789, 4294901760
      %4361 = vmatmul.mubr.f32.gmra.mrb[0].mxu0 %v4360
      %v4362 = vpop.f32.mrb[0].mxu0
      %v4363 = vadd.f32 %v4025, %v4362
      %v4364 = vpop.f32.mrb[0].mxu0
      %4365 = vmatprep.mubr.f32.mxu0 0.0
      %v4366 = vand.u32 %v3791, 4294901760
      %4367 = vmatmul.mubr.f32.gmra.mrb[0].mxu0 %v4366
      %v4368 = vpop.f32.mrb[0].mxu0
      %v4369 = vadd.f32 %v4035, %v4368
      %v4370 = vpop.f32.mrb[0].mxu0
      %4371 = vmatprep.mubr.f32.mxu0 0.0
      %v4372 = vand.u32 %v3793, 4294901760
      %4373 = vmatmul.mubr.f32.gmra.mrb[0].mxu0 %v4372
      %v4374 = vpop.f32.mrb[0].mxu0
      %v4375 = vadd.f32 %v4045, %v4374
      %v4376 = vpop.f32.mrb[0].mxu0
      %4377 = vmatprep.mubr.f32.mxu0 0.0
      %v4378 = vand.u32 %v3795, 4294901760
      %4379 = vmatmul.mubr.f32.gmra.mrb[0].mxu0 %v4378
      %v4380 = vpop.f32.mrb[0].mxu0
      %v4381 = vadd.f32 %v4055, %v4380
      %v4382 = vpop.f32.mrb[0].mxu0
      %4383 = vmatprep.mubr.f32.mxu0 0.0
      %v4384 = vand.u32 %v3797, 4294901760
      %4385 = vmatmul.mubr.f32.gmra.mrb[0].mxu0 %v4384
      %v4386 = vpop.f32.mrb[0].mxu0
      %v4387 = vadd.f32 %v4065, %v4386
      %v4388 = vpop.f32.mrb[0].mxu0
      %4389 = vmatprep.mubr.f32.mxu0 0.0
      %v4390 = vand.u32 %v3799, 4294901760
      %4391 = vmatmul.mubr.f32.gmra.mrb[0].mxu0 %v4390
      %v4392 = vpop.f32.mrb[0].mxu0
      %v4393 = vadd.f32 %v4075, %v4392
      %v4394 = vpop.f32.mrb[0].mxu0
      %4395 = vmatprep.mubr.f32.mxu0 0.0
      %v4396 = vand.u32 %v3801, 4294901760
      %4397 = vmatmul.mubr.f32.gmra.mrb[0].mxu0 %v4396
      %v4398 = vpop.f32.mrb[0].mxu0
      %v4399 = vadd.f32 %v4085, %v4398
      %v4400 = vpop.f32.mrb[0].mxu0
      %4401 = vmatprep.mubr.f32.mxu0 0.0
      %v4402 = vand.u32 %v3803, 4294901760
      %4403 = vmatmul.mubr.f32.gmra.mrb[0].mxu0 %v4402
      %v4404 = vpop.f32.mrb[0].mxu0
      %v4405 = vadd.f32 %v4095, %v4404
      %v4406 = vpop.f32.mrb[0].mxu0
      %4407 = vmatprep.mubr.f32.mxu0 0.0
      %v4408 = vand.u32 %v3805, 4294901760
      %4409 = vmatmul.mubr.f32.gmra.mrb[0].mxu0 %v4408
      %v4410 = vpop.f32.mrb[0].mxu0
      %v4411 = vadd.f32 %v4105, %v4410
      %v4412 = vpop.f32.mrb[0].mxu0
      %4413 = vmatprep.mubr.f32.mxu0 0.0
      %v4414 = vand.u32 %v3807, 4294901760
      %4415 = vmatmul.mubr.f32.gmra.mrb[0].mxu0 %v4414
      %v4416 = vpop.f32.mrb[0].mxu0
      %v4417 = vadd.f32 %v4115, %v4416
      %v4418 = vpop.f32.mrb[0].mxu0
      %4419 = vmatprep.mubr.f32.mxu0 0.0
      %v4420 = vand.u32 %v3809, 4294901760
      %4421 = vmatmul.mubr.f32.gmra.mrb[0].mxu0 %v4420
      %v4422 = vpop.f32.mrb[0].mxu0
      %v4423 = vadd.f32 %v4125, %v4422
      %v4424 = vpop.f32.mrb[0].mxu0
      %4425 = vmatprep.mubr.f32.mxu0 0.0
      %v4426 = vand.u32 %v3811, 4294901760
      %4427 = vmatmul.mubr.f32.gmra.mrb[0].mxu0 %v4426
      %v4428 = vpop.f32.mrb[0].mxu0
      %v4429 = vadd.f32 %v4135, %v4428
      %v4430 = vpop.f32.mrb[0].mxu0
      %4431 = vmatprep.mubr.f32.mxu0 0.0
      %v4432 = vand.u32 %v3813, 4294901760
      %4433 = vmatmul.mubr.f32.gmra.mrb[0].mxu0 %v4432
      %v4434 = vpop.f32.mrb[0].mxu0
      %v4435 = vadd.f32 %v4145, %v4434
      %v4436 = vpop.f32.mrb[0].mxu0
      %4437 = vmatprep.mubr.f32.mxu0 0.0
      %v4438 = vand.u32 %v3815, 4294901760
      %4439 = vmatmul.mubr.f32.gmra.mrb[0].mxu0 %v4438
      %v4440 = vpop.f32.mrb[0].mxu0
      %v4441 = vadd.f32 %v4155, %v4440
      %v4442 = vpop.f32.mrb[0].mxu0
      %4443 = vmatprep.mubr.f32.mxu0 0.0
      %v4444 = vand.u32 %v3817, 4294901760
      %4445 = vmatmul.mubr.f32.gmra.mrb[0].mxu0 %v4444
      %v4446 = vpop.f32.mrb[0].mxu0
      %v4447 = vadd.f32 %v4165, %v4446
      %v4448 = vpop.f32.mrb[0].mxu0
      %4449 = vmatprep.mubr.f32.mxu0 0.0
      %v4450 = vand.u32 %v3819, 4294901760
      %4451 = vmatmul.mubr.f32.gmra.mrb[0].mxu0 %v4450
      %v4452 = vpop.f32.mrb[0].mxu0
      %v4453 = vadd.f32 %v4175, %v4452
      %v4454 = vpop.f32.mrb[0].mxu0
      %4455 = vmatprep.mubr.f32.mxu0 0.0
      %v4456 = vand.u32 %v3821, 4294901760
      %4457 = vmatmul.mubr.f32.gmra.mrb[0].mxu0 %v4456
      %v4458 = vpop.f32.mrb[0].mxu0
      %v4459 = vadd.f32 %v4185, %v4458
      %v4460 = vpop.f32.mrb[0].mxu0
      %4461 = vmatprep.mubr.f32.mxu0 0.0
      %v4462 = vand.u32 %v3823, 4294901760
      %4463 = vmatmul.mubr.f32.gmra.mrb[0].mxu0 %v4462
      %v4464 = vpop.f32.mrb[0].mxu0
      %v4465 = vadd.f32 %v4195, %v4464
      %v4466 = vpop.f32.mrb[0].mxu0
      %4467 = vmatprep.mubr.f32.mxu0 0.0
      %v4468 = vand.u32 %v3825, 4294901760
      %4469 = vmatmul.mubr.f32.gmra.mrb[0].mxu0 %v4468
      %v4470 = vpop.f32.mrb[0].mxu0
      %v4471 = vadd.f32 %v4205, %v4470
      %v4472 = vpop.f32.mrb[0].mxu0
      %4473 = vmatprep.mubr.f32.mxu0 0.0
      %v4474 = vand.u32 %v3827, 4294901760
      %4475 = vmatmul.mubr.f32.gmra.mrb[0].mxu0 %v4474
      %v4476 = vpop.f32.mrb[0].mxu0
      %v4477 = vadd.f32 %v4215, %v4476
      %v4478 = vpop.f32.mrb[0].mxu0
      %4479 = vdwg.mxu0
      %4480 = vmatprep.subr.mxu0 0.0
      %v4481 = vand.u32 %v3830, 4294901760
      %v4482 = vsub.f32 %v3830, %v4481
      %4483 = vmatpush1.msra.mxu0 %v4482
      %4484 = vmatprep.subr.mxu0 0.0
      %4485 = vmatpush1.msra.mxu0 0.0
      %4486 = vmatprep.subr.mxu0 0.0
      %4487 = vmatpush1.msra.mxu0 0.0
      %4488 = vmatprep.subr.mxu0 0.0
      %4489 = vmatpush1.msra.mxu0 0.0
      %4490 = vmatprep.subr.mxu0 0.0
      %4491 = vmatpush1.msra.mxu0 0.0
      %4492 = vmatprep.subr.mxu0 0.0
      %4493 = vmatpush1.msra.mxu0 0.0
      %4494 = vmatprep.subr.mxu0 0.0
      %4495 = vmatpush1.msra.mxu0 0.0
      %4496 = vmatprep.subr.mxu0 0.0
      %4497 = vmatpush1.msra.mxu0 0.0
      %4498 = vmatprep.subr.mxu0 0.0
      %4499 = vmatpush1.msra.mxu0 0.0
      %4500 = vmatprep.subr.mxu0 0.0
      %4501 = vmatpush1.msra.mxu0 0.0
      %4502 = vmatprep.subr.mxu0 0.0
      %4503 = vmatpush1.msra.mxu0 0.0
      %4504 = vmatprep.subr.mxu0 0.0
      %4505 = vmatpush1.msra.mxu0 0.0
      %4506 = vmatprep.subr.mxu0 0.0
      %4507 = vmatpush1.msra.mxu0 0.0
      %4508 = vmatprep.subr.mxu0 0.0
      %4509 = vmatpush1.msra.mxu0 0.0
      %4510 = vmatprep.subr.mxu0 0.0
      %4511 = vmatpush1.msra.mxu0 0.0
      %4512 = vmatprep.subr.mxu0 0.0
      %4513 = vmatpush1.msra.mxu0 0.0
      %4514 = vmatprep.subr.mxu0 0.0
      %4515 = vmatpush1.msra.mxu0 0.0
      %4516 = vmatprep.subr.mxu0 0.0
      %4517 = vmatpush1.msra.mxu0 0.0
      %4518 = vmatprep.subr.mxu0 0.0
      %4519 = vmatpush1.msra.mxu0 0.0
      %4520 = vmatprep.subr.mxu0 0.0
      %4521 = vmatpush1.msra.mxu0 0.0
      %4522 = vmatprep.subr.mxu0 0.0
      %4523 = vmatpush1.msra.mxu0 0.0
      %4524 = vmatprep.subr.mxu0 0.0
      %4525 = vmatpush1.msra.mxu0 0.0
      %4526 = vmatprep.subr.mxu0 0.0
      %4527 = vmatpush1.msra.mxu0 0.0
      %4528 = vmatprep.subr.mxu0 0.0
      %4529 = vmatpush1.msra.mxu0 0.0
      %4530 = vmatprep.subr.mxu0 0.0
      %4531 = vmatpush1.msra.mxu0 0.0
      %4532 = vmatprep.subr.mxu0 0.0
      %4533 = vmatpush1.msra.mxu0 0.0
      %4534 = vmatprep.subr.mxu0 0.0
      %4535 = vmatpush1.msra.mxu0 0.0
      %4536 = vmatprep.subr.mxu0 0.0
      %4537 = vmatpush1.msra.mxu0 0.0
      %4538 = vmatprep.subr.mxu0 0.0
      %4539 = vmatpush1.msra.mxu0 0.0
      %4540 = vmatprep.subr.mxu0 0.0
      %4541 = vmatpush1.msra.mxu0 0.0
      %4542 = vmatprep.subr.mxu0 0.0
      %4543 = vmatpush1.msra.mxu0 0.0
      %4544 = vmatprep.subr.mxu0 0.0
      %4545 = vmatpush1.msra.mxu0 0.0
      %4546 = vmatprep.mubr.f32.mxu0 0.0
      %v4547 = vand.u32 %v3765, 4294901760
      %v4548 = vsub.f32 %v3765, %v4547
      %4549 = vmatmul.mubr.f32.gmra.mrb[0].mxu0 %v4548
      %v4550 = vpop.f32.mrb[0].mxu0
      %v4551 = vadd.f32 %v4291, %v4550
      %v4552 = vpop.f32.mrb[0].mxu0
      %4553 = vmatprep.mubr.f32.mxu0 0.0
      %v4554 = vand.u32 %v3767, 4294901760
      %v4555 = vsub.f32 %v3767, %v4554
      %4556 = vmatmul.mubr.f32.gmra.mrb[0].mxu0 %v4555
      %v4557 = vpop.f32.mrb[0].mxu0
      %v4558 = vadd.f32 %v4297, %v4557
      %v4559 = vpop.f32.mrb[0].mxu0
      %4560 = vmatprep.mubr.f32.mxu0 0.0
      %v4561 = vand.u32 %v3769, 4294901760
      %v4562 = vsub.f32 %v3769, %v4561
      %4563 = vmatmul.mubr.f32.gmra.mrb[0].mxu0 %v4562
      %v4564 = vpop.f32.mrb[0].mxu0
      %v4565 = vadd.f32 %v4303, %v4564
      %v4566 = vpop.f32.mrb[0].mxu0
      %4567 = vmatprep.mubr.f32.mxu0 0.0
      %v4568 = vand.u32 %v3771, 4294901760
      %v4569 = vsub.f32 %v3771, %v4568
      %4570 = vmatmul.mubr.f32.gmra.mrb[0].mxu0 %v4569
      %v4571 = vpop.f32.mrb[0].mxu0
      %v4572 = vadd.f32 %v4309, %v4571
      %v4573 = vpop.f32.mrb[0].mxu0
      %4574 = vmatprep.mubr.f32.mxu0 0.0
      %v4575 = vand.u32 %v3773, 4294901760
      %v4576 = vsub.f32 %v3773, %v4575
      %4577 = vmatmul.mubr.f32.gmra.mrb[0].mxu0 %v4576
      %v4578 = vpop.f32.mrb[0].mxu0
      %v4579 = vadd.f32 %v4315, %v4578
      %v4580 = vpop.f32.mrb[0].mxu0
      %4581 = vmatprep.mubr.f32.mxu0 0.0
      %v4582 = vand.u32 %v3775, 4294901760
      %v4583 = vsub.f32 %v3775, %v4582
      %4584 = vmatmul.mubr.f32.gmra.mrb[0].mxu0 %v4583
      %v4585 = vpop.f32.mrb[0].mxu0
      %v4586 = vadd.f32 %v4321, %v4585
      %v4587 = vpop.f32.mrb[0].mxu0
      %4588 = vmatprep.mubr.f32.mxu0 0.0
      %v4589 = vand.u32 %v3777, 4294901760
      %v4590 = vsub.f32 %v3777, %v4589
      %4591 = vmatmul.mubr.f32.gmra.mrb[0].mxu0 %v4590
      %v4592 = vpop.f32.mrb[0].mxu0
      %v4593 = vadd.f32 %v4327, %v4592
      %v4594 = vpop.f32.mrb[0].mxu0
      %4595 = vmatprep.mubr.f32.mxu0 0.0
      %v4596 = vand.u32 %v3779, 4294901760
      %v4597 = vsub.f32 %v3779, %v4596
      %4598 = vmatmul.mubr.f32.gmra.mrb[0].mxu0 %v4597
      %v4599 = vpop.f32.mrb[0].mxu0
      %v4600 = vadd.f32 %v4333, %v4599
      %v4601 = vpop.f32.mrb[0].mxu0
      %4602 = vmatprep.mubr.f32.mxu0 0.0
      %v4603 = vand.u32 %v3781, 4294901760
      %v4604 = vsub.f32 %v3781, %v4603
      %4605 = vmatmul.mubr.f32.gmra.mrb[0].mxu0 %v4604
      %v4606 = vpop.f32.mrb[0].mxu0
      %v4607 = vadd.f32 %v4339, %v4606
      %v4608 = vpop.f32.mrb[0].mxu0
      %4609 = vmatprep.mubr.f32.mxu0 0.0
      %v4610 = vand.u32 %v3783, 4294901760
      %v4611 = vsub.f32 %v3783, %v4610
      %4612 = vmatmul.mubr.f32.gmra.mrb[0].mxu0 %v4611
      %v4613 = vpop.f32.mrb[0].mxu0
      %v4614 = vadd.f32 %v4345, %v4613
      %v4615 = vpop.f32.mrb[0].mxu0
      %4616 = vmatprep.mubr.f32.mxu0 0.0
      %v4617 = vand.u32 %v3785, 4294901760
      %v4618 = vsub.f32 %v3785, %v4617
      %4619 = vmatmul.mubr.f32.gmra.mrb[0].mxu0 %v4618
      %v4620 = vpop.f32.mrb[0].mxu0
      %v4621 = vadd.f32 %v4351, %v4620
      %v4622 = vpop.f32.mrb[0].mxu0
      %4623 = vmatprep.mubr.f32.mxu0 0.0
      %v4624 = vand.u32 %v3787, 4294901760
      %v4625 = vsub.f32 %v3787, %v4624
      %4626 = vmatmul.mubr.f32.gmra.mrb[0].mxu0 %v4625
      %v4627 = vpop.f32.mrb[0].mxu0
      %v4628 = vadd.f32 %v4357, %v4627
      %v4629 = vpop.f32.mrb[0].mxu0
      %4630 = vmatprep.mubr.f32.mxu0 0.0
      %v4631 = vand.u32 %v3789, 4294901760
      %v4632 = vsub.f32 %v3789, %v4631
      %4633 = vmatmul.mubr.f32.gmra.mrb[0].mxu0 %v4632
      %v4634 = vpop.f32.mrb[0].mxu0
      %v4635 = vadd.f32 %v4363, %v4634
      %v4636 = vpop.f32.mrb[0].mxu0
      %4637 = vmatprep.mubr.f32.mxu0 0.0
      %v4638 = vand.u32 %v3791, 4294901760
      %v4639 = vsub.f32 %v3791, %v4638
      %4640 = vmatmul.mubr.f32.gmra.mrb[0].mxu0 %v4639
      %v4641 = vpop.f32.mrb[0].mxu0
      %v4642 = vadd.f32 %v4369, %v4641
      %v4643 = vpop.f32.mrb[0].mxu0
      %4644 = vmatprep.mubr.f32.mxu0 0.0
      %v4645 = vand.u32 %v3793, 4294901760
      %v4646 = vsub.f32 %v3793, %v4645
      %4647 = vmatmul.mubr.f32.gmra.mrb[0].mxu0 %v4646
      %v4648 = vpop.f32.mrb[0].mxu0
      %v4649 = vadd.f32 %v4375, %v4648
      %v4650 = vpop.f32.mrb[0].mxu0
      %4651 = vmatprep.mubr.f32.mxu0 0.0
      %v4652 = vand.u32 %v3795, 4294901760
      %v4653 = vsub.f32 %v3795, %v4652
      %4654 = vmatmul.mubr.f32.gmra.mrb[0].mxu0 %v4653
      %v4655 = vpop.f32.mrb[0].mxu0
      %v4656 = vadd.f32 %v4381, %v4655
      %v4657 = vpop.f32.mrb[0].mxu0
      %4658 = vmatprep.mubr.f32.mxu0 0.0
      %v4659 = vand.u32 %v3797, 4294901760
      %v4660 = vsub.f32 %v3797, %v4659
      %4661 = vmatmul.mubr.f32.gmra.mrb[0].mxu0 %v4660
      %v4662 = vpop.f32.mrb[0].mxu0
      %v4663 = vadd.f32 %v4387, %v4662
      %v4664 = vpop.f32.mrb[0].mxu0
      %4665 = vmatprep.mubr.f32.mxu0 0.0
      %v4666 = vand.u32 %v3799, 4294901760
      %v4667 = vsub.f32 %v3799, %v4666
      %4668 = vmatmul.mubr.f32.gmra.mrb[0].mxu0 %v4667
      %v4669 = vpop.f32.mrb[0].mxu0
      %v4670 = vadd.f32 %v4393, %v4669
      %v4671 = vpop.f32.mrb[0].mxu0
      %4672 = vmatprep.mubr.f32.mxu0 0.0
      %v4673 = vand.u32 %v3801, 4294901760
      %v4674 = vsub.f32 %v3801, %v4673
      %4675 = vmatmul.mubr.f32.gmra.mrb[0].mxu0 %v4674
      %v4676 = vpop.f32.mrb[0].mxu0
      %v4677 = vadd.f32 %v4399, %v4676
      %v4678 = vpop.f32.mrb[0].mxu0
      %4679 = vmatprep.mubr.f32.mxu0 0.0
      %v4680 = vand.u32 %v3803, 4294901760
      %v4681 = vsub.f32 %v3803, %v4680
      %4682 = vmatmul.mubr.f32.gmra.mrb[0].mxu0 %v4681
      %v4683 = vpop.f32.mrb[0].mxu0
      %v4684 = vadd.f32 %v4405, %v4683
      %v4685 = vpop.f32.mrb[0].mxu0
      %4686 = vmatprep.mubr.f32.mxu0 0.0
      %v4687 = vand.u32 %v3805, 4294901760
      %v4688 = vsub.f32 %v3805, %v4687
      %4689 = vmatmul.mubr.f32.gmra.mrb[0].mxu0 %v4688
      %v4690 = vpop.f32.mrb[0].mxu0
      %v4691 = vadd.f32 %v4411, %v4690
      %v4692 = vpop.f32.mrb[0].mxu0
      %4693 = vmatprep.mubr.f32.mxu0 0.0
      %v4694 = vand.u32 %v3807, 4294901760
      %v4695 = vsub.f32 %v3807, %v4694
      %4696 = vmatmul.mubr.f32.gmra.mrb[0].mxu0 %v4695
      %v4697 = vpop.f32.mrb[0].mxu0
      %v4698 = vadd.f32 %v4417, %v4697
      %v4699 = vpop.f32.mrb[0].mxu0
      %4700 = vmatprep.mubr.f32.mxu0 0.0
      %v4701 = vand.u32 %v3809, 4294901760
      %v4702 = vsub.f32 %v3809, %v4701
      %4703 = vmatmul.mubr.f32.gmra.mrb[0].mxu0 %v4702
      %v4704 = vpop.f32.mrb[0].mxu0
      %v4705 = vadd.f32 %v4423, %v4704
      %v4706 = vpop.f32.mrb[0].mxu0
      %4707 = vmatprep.mubr.f32.mxu0 0.0
      %v4708 = vand.u32 %v3811, 4294901760
      %v4709 = vsub.f32 %v3811, %v4708
      %4710 = vmatmul.mubr.f32.gmra.mrb[0].mxu0 %v4709
      %v4711 = vpop.f32.mrb[0].mxu0
      %v4712 = vadd.f32 %v4429, %v4711
      %v4713 = vpop.f32.mrb[0].mxu0
      %4714 = vmatprep.mubr.f32.mxu0 0.0
      %v4715 = vand.u32 %v3813, 4294901760
      %v4716 = vsub.f32 %v3813, %v4715
      %4717 = vmatmul.mubr.f32.gmra.mrb[0].mxu0 %v4716
      %v4718 = vpop.f32.mrb[0].mxu0
      %v4719 = vadd.f32 %v4435, %v4718
      %v4720 = vpop.f32.mrb[0].mxu0
      %4721 = vmatprep.mubr.f32.mxu0 0.0
      %v4722 = vand.u32 %v3815, 4294901760
      %v4723 = vsub.f32 %v3815, %v4722
      %4724 = vmatmul.mubr.f32.gmra.mrb[0].mxu0 %v4723
      %v4725 = vpop.f32.mrb[0].mxu0
      %v4726 = vadd.f32 %v4441, %v4725
      %v4727 = vpop.f32.mrb[0].mxu0
      %4728 = vmatprep.mubr.f32.mxu0 0.0
      %v4729 = vand.u32 %v3817, 4294901760
      %v4730 = vsub.f32 %v3817, %v4729
      %4731 = vmatmul.mubr.f32.gmra.mrb[0].mxu0 %v4730
      %v4732 = vpop.f32.mrb[0].mxu0
      %v4733 = vadd.f32 %v4447, %v4732
      %v4734 = vpop.f32.mrb[0].mxu0
      %4735 = vmatprep.mubr.f32.mxu0 0.0
      %v4736 = vand.u32 %v3819, 4294901760
      %v4737 = vsub.f32 %v3819, %v4736
      %4738 = vmatmul.mubr.f32.gmra.mrb[0].mxu0 %v4737
      %v4739 = vpop.f32.mrb[0].mxu0
      %v4740 = vadd.f32 %v4453, %v4739
      %v4741 = vpop.f32.mrb[0].mxu0
      %4742 = vmatprep.mubr.f32.mxu0 0.0
      %v4743 = vand.u32 %v3821, 4294901760
      %v4744 = vsub.f32 %v3821, %v4743
      %4745 = vmatmul.mubr.f32.gmra.mrb[0].mxu0 %v4744
      %v4746 = vpop.f32.mrb[0].mxu0
      %v4747 = vadd.f32 %v4459, %v4746
      %v4748 = vpop.f32.mrb[0].mxu0
      %4749 = vmatprep.mubr.f32.mxu0 0.0
      %v4750 = vand.u32 %v3823, 4294901760
      %v4751 = vsub.f32 %v3823, %v4750
      %4752 = vmatmul.mubr.f32.gmra.mrb[0].mxu0 %v4751
      %v4753 = vpop.f32.mrb[0].mxu0
      %v4754 = vadd.f32 %v4465, %v4753
      %v4755 = vpop.f32.mrb[0].mxu0
      %4756 = vmatprep.mubr.f32.mxu0 0.0
      %v4757 = vand.u32 %v3825, 4294901760
      %v4758 = vsub.f32 %v3825, %v4757
      %4759 = vmatmul.mubr.f32.gmra.mrb[0].mxu0 %v4758
      %v4760 = vpop.f32.mrb[0].mxu0
      %v4761 = vadd.f32 %v4471, %v4760
      %v4762 = vpop.f32.mrb[0].mxu0
      %4763 = vmatprep.mubr.f32.mxu0 0.0
      %v4764 = vand.u32 %v3827, 4294901760
      %v4765 = vsub.f32 %v3827, %v4764
      %4766 = vmatmul.mubr.f32.gmra.mrb[0].mxu0 %v4765
      %v4767 = vpop.f32.mrb[0].mxu0
      %v4768 = vadd.f32 %v4477, %v4767
      %v4769 = vpop.f32.mrb[0].mxu0
      %4770 = vdwg.mxu0
      %4771 = vmatprep.subr.mxu0 0.0
      %v4772 = vand.u32 %v3830, 4294901760
      %4773 = vmatpush1.msra.mxu0 %v4772
      %4774 = vmatprep.subr.mxu0 0.0
      %4775 = vmatpush1.msra.mxu0 0.0
      %4776 = vmatprep.subr.mxu0 0.0
      %4777 = vmatpush1.msra.mxu0 0.0
      %4778 = vmatprep.subr.mxu0 0.0
      %4779 = vmatpush1.msra.mxu0 0.0
      %4780 = vmatprep.subr.mxu0 0.0
      %4781 = vmatpush1.msra.mxu0 0.0
      %4782 = vmatprep.subr.mxu0 0.0
      %4783 = vmatpush1.msra.mxu0 0.0
      %4784 = vmatprep.subr.mxu0 0.0
      %4785 = vmatpush1.msra.mxu0 0.0
      %4786 = vmatprep.subr.mxu0 0.0
      %4787 = vmatpush1.msra.mxu0 0.0
      %4788 = vmatprep.subr.mxu0 0.0
      %4789 = vmatpush1.msra.mxu0 0.0
      %4790 = vmatprep.subr.mxu0 0.0
      %4791 = vmatpush1.msra.mxu0 0.0
      %4792 = vmatprep.subr.mxu0 0.0
      %4793 = vmatpush1.msra.mxu0 0.0
      %4794 = vmatprep.subr.mxu0 0.0
      %4795 = vmatpush1.msra.mxu0 0.0
      %4796 = vmatprep.subr.mxu0 0.0
      %4797 = vmatpush1.msra.mxu0 0.0
      %4798 = vmatprep.subr.mxu0 0.0
      %4799 = vmatpush1.msra.mxu0 0.0
      %4800 = vmatprep.subr.mxu0 0.0
      %4801 = vmatpush1.msra.mxu0 0.0
      %4802 = vmatprep.subr.mxu0 0.0
      %4803 = vmatpush1.msra.mxu0 0.0
      %4804 = vmatprep.subr.mxu0 0.0
      %4805 = vmatpush1.msra.mxu0 0.0
      %4806 = vmatprep.subr.mxu0 0.0
      %4807 = vmatpush1.msra.mxu0 0.0
      %4808 = vmatprep.subr.mxu0 0.0
      %4809 = vmatpush1.msra.mxu0 0.0
      %4810 = vmatprep.subr.mxu0 0.0
      %4811 = vmatpush1.msra.mxu0 0.0
      %4812 = vmatprep.subr.mxu0 0.0
      %4813 = vmatpush1.msra.mxu0 0.0
      %4814 = vmatprep.subr.mxu0 0.0
      %4815 = vmatpush1.msra.mxu0 0.0
      %4816 = vmatprep.subr.mxu0 0.0
      %4817 = vmatpush1.msra.mxu0 0.0
      %4818 = vmatprep.subr.mxu0 0.0
      %4819 = vmatpush1.msra.mxu0 0.0
      %4820 = vmatprep.subr.mxu0 0.0
      %4821 = vmatpush1.msra.mxu0 0.0
      %4822 = vmatprep.subr.mxu0 0.0
      %4823 = vmatpush1.msra.mxu0 0.0
      %4824 = vmatprep.subr.mxu0 0.0
      %4825 = vmatpush1.msra.mxu0 0.0
      %4826 = vmatprep.subr.mxu0 0.0
      %4827 = vmatpush1.msra.mxu0 0.0
      %4828 = vmatprep.subr.mxu0 0.0
      %4829 = vmatpush1.msra.mxu0 0.0
      %4830 = vmatprep.subr.mxu0 0.0
      %4831 = vmatpush1.msra.mxu0 0.0
      %4832 = vmatprep.subr.mxu0 0.0
      %4833 = vmatpush1.msra.mxu0 0.0
      %4834 = vmatprep.subr.mxu0 0.0
      %4835 = vmatpush1.msra.mxu0 0.0
      %4836 = vmatprep.mubr.f32.mxu0 0.0
      %v4837 = vand.u32 %v3765, 4294901760
      %v4838 = vsub.f32 %v3765, %v4837
      %v4839 = vand.u32 %v4838, 4294901760
      %4840 = vmatmul.mubr.f32.gmra.mrb[0].mxu0 %v4839
      %v4841 = vpop.f32.mrb[0].mxu0
      %v4842 = vadd.f32 %v4551, %v4841
      %v4843 = vpop.f32.mrb[0].mxu0
      %4844 = vmatprep.mubr.f32.mxu0 0.0
      %v4845 = vand.u32 %v3767, 4294901760
      %v4846 = vsub.f32 %v3767, %v4845
      %v4847 = vand.u32 %v4846, 4294901760
      %4848 = vmatmul.mubr.f32.gmra.mrb[0].mxu0 %v4847
      %v4849 = vpop.f32.mrb[0].mxu0
      %v4850 = vadd.f32 %v4558, %v4849
      %v4851 = vpop.f32.mrb[0].mxu0
      %4852 = vmatprep.mubr.f32.mxu0 0.0
      %v4853 = vand.u32 %v3769, 4294901760
      %v4854 = vsub.f32 %v3769, %v4853
      %v4855 = vand.u32 %v4854, 4294901760
      %4856 = vmatmul.mubr.f32.gmra.mrb[0].mxu0 %v4855
      %v4857 = vpop.f32.mrb[0].mxu0
      %v4858 = vadd.f32 %v4565, %v4857
      %v4859 = vpop.f32.mrb[0].mxu0
      %4860 = vmatprep.mubr.f32.mxu0 0.0
      %v4861 = vand.u32 %v3771, 4294901760
      %v4862 = vsub.f32 %v3771, %v4861
      %v4863 = vand.u32 %v4862, 4294901760
      %4864 = vmatmul.mubr.f32.gmra.mrb[0].mxu0 %v4863
      %v4865 = vpop.f32.mrb[0].mxu0
      %v4866 = vadd.f32 %v4572, %v4865
      %v4867 = vpop.f32.mrb[0].mxu0
      %4868 = vmatprep.mubr.f32.mxu0 0.0
      %v4869 = vand.u32 %v3773, 4294901760
      %v4870 = vsub.f32 %v3773, %v4869
      %v4871 = vand.u32 %v4870, 4294901760
      %4872 = vmatmul.mubr.f32.gmra.mrb[0].mxu0 %v4871
      %v4873 = vpop.f32.mrb[0].mxu0
      %v4874 = vadd.f32 %v4579, %v4873
      %v4875 = vpop.f32.mrb[0].mxu0
      %4876 = vmatprep.mubr.f32.mxu0 0.0
      %v4877 = vand.u32 %v3775, 4294901760
      %v4878 = vsub.f32 %v3775, %v4877
      %v4879 = vand.u32 %v4878, 4294901760
      %4880 = vmatmul.mubr.f32.gmra.mrb[0].mxu0 %v4879
      %v4881 = vpop.f32.mrb[0].mxu0
      %v4882 = vadd.f32 %v4586, %v4881
      %v4883 = vpop.f32.mrb[0].mxu0
      %4884 = vmatprep.mubr.f32.mxu0 0.0
      %v4885 = vand.u32 %v3777, 4294901760
      %v4886 = vsub.f32 %v3777, %v4885
      %v4887 = vand.u32 %v4886, 4294901760
      %4888 = vmatmul.mubr.f32.gmra.mrb[0].mxu0 %v4887
      %v4889 = vpop.f32.mrb[0].mxu0
      %v4890 = vadd.f32 %v4593, %v4889
      %v4891 = vpop.f32.mrb[0].mxu0
      %4892 = vmatprep.mubr.f32.mxu0 0.0
      %v4893 = vand.u32 %v3779, 4294901760
      %v4894 = vsub.f32 %v3779, %v4893
      %v4895 = vand.u32 %v4894, 4294901760
      %4896 = vmatmul.mubr.f32.gmra.mrb[0].mxu0 %v4895
      %v4897 = vpop.f32.mrb[0].mxu0
      %v4898 = vadd.f32 %v4600, %v4897
      %v4899 = vpop.f32.mrb[0].mxu0
      %4900 = vmatprep.mubr.f32.mxu0 0.0
      %v4901 = vand.u32 %v3781, 4294901760
      %v4902 = vsub.f32 %v3781, %v4901
      %v4903 = vand.u32 %v4902, 4294901760
      %4904 = vmatmul.mubr.f32.gmra.mrb[0].mxu0 %v4903
      %v4905 = vpop.f32.mrb[0].mxu0
      %v4906 = vadd.f32 %v4607, %v4905
      %v4907 = vpop.f32.mrb[0].mxu0
      %4908 = vmatprep.mubr.f32.mxu0 0.0
      %v4909 = vand.u32 %v3783, 4294901760
      %v4910 = vsub.f32 %v3783, %v4909
      %v4911 = vand.u32 %v4910, 4294901760
      %4912 = vmatmul.mubr.f32.gmra.mrb[0].mxu0 %v4911
      %v4913 = vpop.f32.mrb[0].mxu0
      %v4914 = vadd.f32 %v4614, %v4913
      %v4915 = vpop.f32.mrb[0].mxu0
      %4916 = vmatprep.mubr.f32.mxu0 0.0
      %v4917 = vand.u32 %v3785, 4294901760
      %v4918 = vsub.f32 %v3785, %v4917
      %v4919 = vand.u32 %v4918, 4294901760
      %4920 = vmatmul.mubr.f32.gmra.mrb[0].mxu0 %v4919
      %v4921 = vpop.f32.mrb[0].mxu0
      %v4922 = vadd.f32 %v4621, %v4921
      %v4923 = vpop.f32.mrb[0].mxu0
      %4924 = vmatprep.mubr.f32.mxu0 0.0
      %v4925 = vand.u32 %v3787, 4294901760
      %v4926 = vsub.f32 %v3787, %v4925
      %v4927 = vand.u32 %v4926, 4294901760
      %4928 = vmatmul.mubr.f32.gmra.mrb[0].mxu0 %v4927
      %v4929 = vpop.f32.mrb[0].mxu0
      %v4930 = vadd.f32 %v4628, %v4929
      %v4931 = vpop.f32.mrb[0].mxu0
      %4932 = vmatprep.mubr.f32.mxu0 0.0
      %v4933 = vand.u32 %v3789, 4294901760
      %v4934 = vsub.f32 %v3789, %v4933
      %v4935 = vand.u32 %v4934, 4294901760
      %4936 = vmatmul.mubr.f32.gmra.mrb[0].mxu0 %v4935
      %v4937 = vpop.f32.mrb[0].mxu0
      %v4938 = vadd.f32 %v4635, %v4937
      %v4939 = vpop.f32.mrb[0].mxu0
      %4940 = vmatprep.mubr.f32.mxu0 0.0
      %v4941 = vand.u32 %v3791, 4294901760
      %v4942 = vsub.f32 %v3791, %v4941
      %v4943 = vand.u32 %v4942, 4294901760
      %4944 = vmatmul.mubr.f32.gmra.mrb[0].mxu0 %v4943
      %v4945 = vpop.f32.mrb[0].mxu0
      %v4946 = vadd.f32 %v4642, %v4945
      %v4947 = vpop.f32.mrb[0].mxu0
      %4948 = vmatprep.mubr.f32.mxu0 0.0
      %v4949 = vand.u32 %v3793, 4294901760
      %v4950 = vsub.f32 %v3793, %v4949
      %v4951 = vand.u32 %v4950, 4294901760
      %4952 = vmatmul.mubr.f32.gmra.mrb[0].mxu0 %v4951
      %v4953 = vpop.f32.mrb[0].mxu0
      %v4954 = vadd.f32 %v4649, %v4953
      %v4955 = vpop.f32.mrb[0].mxu0
      %4956 = vmatprep.mubr.f32.mxu0 0.0
      %v4957 = vand.u32 %v3795, 4294901760
      %v4958 = vsub.f32 %v3795, %v4957
      %v4959 = vand.u32 %v4958, 4294901760
      %4960 = vmatmul.mubr.f32.gmra.mrb[0].mxu0 %v4959
      %v4961 = vpop.f32.mrb[0].mxu0
      %v4962 = vadd.f32 %v4656, %v4961
      %v4963 = vpop.f32.mrb[0].mxu0
      %4964 = vmatprep.mubr.f32.mxu0 0.0
      %v4965 = vand.u32 %v3797, 4294901760
      %v4966 = vsub.f32 %v3797, %v4965
      %v4967 = vand.u32 %v4966, 4294901760
      %4968 = vmatmul.mubr.f32.gmra.mrb[0].mxu0 %v4967
      %v4969 = vpop.f32.mrb[0].mxu0
      %v4970 = vadd.f32 %v4663, %v4969
      %v4971 = vpop.f32.mrb[0].mxu0
      %4972 = vmatprep.mubr.f32.mxu0 0.0
      %v4973 = vand.u32 %v3799, 4294901760
      %v4974 = vsub.f32 %v3799, %v4973
      %v4975 = vand.u32 %v4974, 4294901760
      %4976 = vmatmul.mubr.f32.gmra.mrb[0].mxu0 %v4975
      %v4977 = vpop.f32.mrb[0].mxu0
      %v4978 = vadd.f32 %v4670, %v4977
      %v4979 = vpop.f32.mrb[0].mxu0
      %4980 = vmatprep.mubr.f32.mxu0 0.0
      %v4981 = vand.u32 %v3801, 4294901760
      %v4982 = vsub.f32 %v3801, %v4981
      %v4983 = vand.u32 %v4982, 4294901760
      %4984 = vmatmul.mubr.f32.gmra.mrb[0].mxu0 %v4983
      %v4985 = vpop.f32.mrb[0].mxu0
      %v4986 = vadd.f32 %v4677, %v4985
      %v4987 = vpop.f32.mrb[0].mxu0
      %4988 = vmatprep.mubr.f32.mxu0 0.0
      %v4989 = vand.u32 %v3803, 4294901760
      %v4990 = vsub.f32 %v3803, %v4989
      %v4991 = vand.u32 %v4990, 4294901760
      %4992 = vmatmul.mubr.f32.gmra.mrb[0].mxu0 %v4991
      %v4993 = vpop.f32.mrb[0].mxu0
      %v4994 = vadd.f32 %v4684, %v4993
      %v4995 = vpop.f32.mrb[0].mxu0
      %4996 = vmatprep.mubr.f32.mxu0 0.0
      %v4997 = vand.u32 %v3805, 4294901760
      %v4998 = vsub.f32 %v3805, %v4997
      %v4999 = vand.u32 %v4998, 4294901760
      %5000 = vmatmul.mubr.f32.gmra.mrb[0].mxu0 %v4999
      %v5001 = vpop.f32.mrb[0].mxu0
      %v5002 = vadd.f32 %v4691, %v5001
      %v5003 = vpop.f32.mrb[0].mxu0
      %5004 = vmatprep.mubr.f32.mxu0 0.0
      %v5005 = vand.u32 %v3807, 4294901760
      %v5006 = vsub.f32 %v3807, %v5005
      %v5007 = vand.u32 %v5006, 4294901760
      %5008 = vmatmul.mubr.f32.gmra.mrb[0].mxu0 %v5007
      %v5009 = vpop.f32.mrb[0].mxu0
      %v5010 = vadd.f32 %v4698, %v5009
      %v5011 = vpop.f32.mrb[0].mxu0
      %5012 = vmatprep.mubr.f32.mxu0 0.0
      %v5013 = vand.u32 %v3809, 4294901760
      %v5014 = vsub.f32 %v3809, %v5013
      %v5015 = vand.u32 %v5014, 4294901760
      %5016 = vmatmul.mubr.f32.gmra.mrb[0].mxu0 %v5015
      %v5017 = vpop.f32.mrb[0].mxu0
      %v5018 = vadd.f32 %v4705, %v5017
      %v5019 = vpop.f32.mrb[0].mxu0
      %5020 = vmatprep.mubr.f32.mxu0 0.0
      %v5021 = vand.u32 %v3811, 4294901760
      %v5022 = vsub.f32 %v3811, %v5021
      %v5023 = vand.u32 %v5022, 4294901760
      %5024 = vmatmul.mubr.f32.gmra.mrb[0].mxu0 %v5023
      %v5025 = vpop.f32.mrb[0].mxu0
      %v5026 = vadd.f32 %v4712, %v5025
      %v5027 = vpop.f32.mrb[0].mxu0
      %5028 = vmatprep.mubr.f32.mxu0 0.0
      %v5029 = vand.u32 %v3813, 4294901760
      %v5030 = vsub.f32 %v3813, %v5029
      %v5031 = vand.u32 %v5030, 4294901760
      %5032 = vmatmul.mubr.f32.gmra.mrb[0].mxu0 %v5031
      %v5033 = vpop.f32.mrb[0].mxu0
      %v5034 = vadd.f32 %v4719, %v5033
      %v5035 = vpop.f32.mrb[0].mxu0
      %5036 = vmatprep.mubr.f32.mxu0 0.0
      %v5037 = vand.u32 %v3815, 4294901760
      %v5038 = vsub.f32 %v3815, %v5037
      %v5039 = vand.u32 %v5038, 4294901760
      %5040 = vmatmul.mubr.f32.gmra.mrb[0].mxu0 %v5039
      %v5041 = vpop.f32.mrb[0].mxu0
      %v5042 = vadd.f32 %v4726, %v5041
      %v5043 = vpop.f32.mrb[0].mxu0
      %5044 = vmatprep.mubr.f32.mxu0 0.0
      %v5045 = vand.u32 %v3817, 4294901760
      %v5046 = vsub.f32 %v3817, %v5045
      %v5047 = vand.u32 %v5046, 4294901760
      %5048 = vmatmul.mubr.f32.gmra.mrb[0].mxu0 %v5047
      %v5049 = vpop.f32.mrb[0].mxu0
      %v5050 = vadd.f32 %v4733, %v5049
      %v5051 = vpop.f32.mrb[0].mxu0
      %5052 = vmatprep.mubr.f32.mxu0 0.0
      %v5053 = vand.u32 %v3819, 4294901760
      %v5054 = vsub.f32 %v3819, %v5053
      %v5055 = vand.u32 %v5054, 4294901760
      %5056 = vmatmul.mubr.f32.gmra.mrb[0].mxu0 %v5055
      %v5057 = vpop.f32.mrb[0].mxu0
      %v5058 = vadd.f32 %v4740, %v5057
      %v5059 = vpop.f32.mrb[0].mxu0
      %5060 = vmatprep.mubr.f32.mxu0 0.0
      %v5061 = vand.u32 %v3821, 4294901760
      %v5062 = vsub.f32 %v3821, %v5061
      %v5063 = vand.u32 %v5062, 4294901760
      %5064 = vmatmul.mubr.f32.gmra.mrb[0].mxu0 %v5063
      %v5065 = vpop.f32.mrb[0].mxu0
      %v5066 = vadd.f32 %v4747, %v5065
      %v5067 = vpop.f32.mrb[0].mxu0
      %5068 = vmatprep.mubr.f32.mxu0 0.0
      %v5069 = vand.u32 %v3823, 4294901760
      %v5070 = vsub.f32 %v3823, %v5069
      %v5071 = vand.u32 %v5070, 4294901760
      %5072 = vmatmul.mubr.f32.gmra.mrb[0].mxu0 %v5071
      %v5073 = vpop.f32.mrb[0].mxu0
      %v5074 = vadd.f32 %v4754, %v5073
      %v5075 = vpop.f32.mrb[0].mxu0
      %5076 = vmatprep.mubr.f32.mxu0 0.0
      %v5077 = vand.u32 %v3825, 4294901760
      %v5078 = vsub.f32 %v3825, %v5077
      %v5079 = vand.u32 %v5078, 4294901760
      %5080 = vmatmul.mubr.f32.gmra.mrb[0].mxu0 %v5079
      %v5081 = vpop.f32.mrb[0].mxu0
      %v5082 = vadd.f32 %v4761, %v5081
      %v5083 = vpop.f32.mrb[0].mxu0
      %5084 = vmatprep.mubr.f32.mxu0 0.0
      %v5085 = vand.u32 %v3827, 4294901760
      %v5086 = vsub.f32 %v3827, %v5085
      %v5087 = vand.u32 %v5086, 4294901760
      %5088 = vmatmul.mubr.f32.gmra.mrb[0].mxu0 %v5087
      %v5089 = vpop.f32.mrb[0].mxu0
      %v5090 = vadd.f32 %v4768, %v5089
      %v5091 = vpop.f32.mrb[0].mxu0
      %5092 = vdwg.mxu0
      %5093 = vmatprep.subr.mxu0 0.0
      %v5094 = vand.u32 %v3830, 4294901760
      %v5095 = vsub.f32 %v3830, %v5094
      %v5096 = vand.u32 %v5095, 4294901760
      %5097 = vmatpush1.msra.mxu0 %v5096
      %5098 = vmatprep.subr.mxu0 0.0
      %5099 = vmatpush1.msra.mxu0 0.0
      %5100 = vmatprep.subr.mxu0 0.0
      %5101 = vmatpush1.msra.mxu0 0.0
      %5102 = vmatprep.subr.mxu0 0.0
      %5103 = vmatpush1.msra.mxu0 0.0
      %5104 = vmatprep.subr.mxu0 0.0
      %5105 = vmatpush1.msra.mxu0 0.0
      %5106 = vmatprep.subr.mxu0 0.0
      %5107 = vmatpush1.msra.mxu0 0.0
      %5108 = vmatprep.subr.mxu0 0.0
      %5109 = vmatpush1.msra.mxu0 0.0
      %5110 = vmatprep.subr.mxu0 0.0
      %5111 = vmatpush1.msra.mxu0 0.0
      %5112 = vmatprep.subr.mxu0 0.0
      %5113 = vmatpush1.msra.mxu0 0.0
      %5114 = vmatprep.subr.mxu0 0.0
      %5115 = vmatpush1.msra.mxu0 0.0
      %5116 = vmatprep.subr.mxu0 0.0
      %5117 = vmatpush1.msra.mxu0 0.0
      %5118 = vmatprep.subr.mxu0 0.0
      %5119 = vmatpush1.msra.mxu0 0.0
      %5120 = vmatprep.subr.mxu0 0.0
      %5121 = vmatpush1.msra.mxu0 0.0
      %5122 = vmatprep.subr.mxu0 0.0
      %5123 = vmatpush1.msra.mxu0 0.0
      %5124 = vmatprep.subr.mxu0 0.0
      %5125 = vmatpush1.msra.mxu0 0.0
      %5126 = vmatprep.subr.mxu0 0.0
      %5127 = vmatpush1.msra.mxu0 0.0
      %5128 = vmatprep.subr.mxu0 0.0
      %5129 = vmatpush1.msra.mxu0 0.0
      %5130 = vmatprep.subr.mxu0 0.0
      %5131 = vmatpush1.msra.mxu0 0.0
      %5132 = vmatprep.subr.mxu0 0.0
      %5133 = vmatpush1.msra.mxu0 0.0
      %5134 = vmatprep.subr.mxu0 0.0
      %5135 = vmatpush1.msra.mxu0 0.0
      %5136 = vmatprep.subr.mxu0 0.0
      %5137 = vmatpush1.msra.mxu0 0.0
      %5138 = vmatprep.subr.mxu0 0.0
      %5139 = vmatpush1.msra.mxu0 0.0
      %5140 = vmatprep.subr.mxu0 0.0
      %5141 = vmatpush1.msra.mxu0 0.0
      %5142 = vmatprep.subr.mxu0 0.0
      %5143 = vmatpush1.msra.mxu0 0.0
      %5144 = vmatprep.subr.mxu0 0.0
      %5145 = vmatpush1.msra.mxu0 0.0
      %5146 = vmatprep.subr.mxu0 0.0
      %5147 = vmatpush1.msra.mxu0 0.0
      %5148 = vmatprep.subr.mxu0 0.0
      %5149 = vmatpush1.msra.mxu0 0.0
      %5150 = vmatprep.subr.mxu0 0.0
      %5151 = vmatpush1.msra.mxu0 0.0
      %5152 = vmatprep.subr.mxu0 0.0
      %5153 = vmatpush1.msra.mxu0 0.0
      %5154 = vmatprep.subr.mxu0 0.0
      %5155 = vmatpush1.msra.mxu0 0.0
      %5156 = vmatprep.subr.mxu0 0.0
      %5157 = vmatpush1.msra.mxu0 0.0
      %5158 = vmatprep.subr.mxu0 0.0
      %5159 = vmatpush1.msra.mxu0 0.0
      %5160 = vmatprep.mubr.f32.mxu0 0.0
      %v5161 = vand.u32 %v3765, 4294901760
      %5162 = vmatmul.mubr.f32.gmra.mrb[0].mxu0 %v5161
      %v5163 = vpop.f32.mrb[0].mxu0
      %v5164 = vadd.f32 %v4842, %v5163
      %v5165 = vpop.f32.mrb[0].mxu0
      %5166 = vmatprep.mubr.f32.mxu0 0.0
      %v5167 = vand.u32 %v3767, 4294901760
      %5168 = vmatmul.mubr.f32.gmra.mrb[0].mxu0 %v5167
      %v5169 = vpop.f32.mrb[0].mxu0
      %v5170 = vadd.f32 %v4850, %v5169
      %v5171 = vpop.f32.mrb[0].mxu0
      %5172 = vmatprep.mubr.f32.mxu0 0.0
      %v5173 = vand.u32 %v3769, 4294901760
      %5174 = vmatmul.mubr.f32.gmra.mrb[0].mxu0 %v5173
      %v5175 = vpop.f32.mrb[0].mxu0
      %v5176 = vadd.f32 %v4858, %v5175
      %v5177 = vpop.f32.mrb[0].mxu0
      %5178 = vmatprep.mubr.f32.mxu0 0.0
      %v5179 = vand.u32 %v3771, 4294901760
      %5180 = vmatmul.mubr.f32.gmra.mrb[0].mxu0 %v5179
      %v5181 = vpop.f32.mrb[0].mxu0
      %v5182 = vadd.f32 %v4866, %v5181
      %v5183 = vpop.f32.mrb[0].mxu0
      %5184 = vmatprep.mubr.f32.mxu0 0.0
      %v5185 = vand.u32 %v3773, 4294901760
      %5186 = vmatmul.mubr.f32.gmra.mrb[0].mxu0 %v5185
      %v5187 = vpop.f32.mrb[0].mxu0
      %v5188 = vadd.f32 %v4874, %v5187
      %v5189 = vpop.f32.mrb[0].mxu0
      %5190 = vmatprep.mubr.f32.mxu0 0.0
      %v5191 = vand.u32 %v3775, 4294901760
      %5192 = vmatmul.mubr.f32.gmra.mrb[0].mxu0 %v5191
      %v5193 = vpop.f32.mrb[0].mxu0
      %v5194 = vadd.f32 %v4882, %v5193
      %v5195 = vpop.f32.mrb[0].mxu0
      %5196 = vmatprep.mubr.f32.mxu0 0.0
      %v5197 = vand.u32 %v3777, 4294901760
      %5198 = vmatmul.mubr.f32.gmra.mrb[0].mxu0 %v5197
      %v5199 = vpop.f32.mrb[0].mxu0
      %v5200 = vadd.f32 %v4890, %v5199
      %v5201 = vpop.f32.mrb[0].mxu0
      %5202 = vmatprep.mubr.f32.mxu0 0.0
      %v5203 = vand.u32 %v3779, 4294901760
      %5204 = vmatmul.mubr.f32.gmra.mrb[0].mxu0 %v5203
      %v5205 = vpop.f32.mrb[0].mxu0
      %v5206 = vadd.f32 %v4898, %v5205
      %v5207 = vpop.f32.mrb[0].mxu0
      %5208 = vmatprep.mubr.f32.mxu0 0.0
      %v5209 = vand.u32 %v3781, 4294901760
      %5210 = vmatmul.mubr.f32.gmra.mrb[0].mxu0 %v5209
      %v5211 = vpop.f32.mrb[0].mxu0
      %v5212 = vadd.f32 %v4906, %v5211
      %v5213 = vpop.f32.mrb[0].mxu0
      %5214 = vmatprep.mubr.f32.mxu0 0.0
      %v5215 = vand.u32 %v3783, 4294901760
      %5216 = vmatmul.mubr.f32.gmra.mrb[0].mxu0 %v5215
      %v5217 = vpop.f32.mrb[0].mxu0
      %v5218 = vadd.f32 %v4914, %v5217
      %v5219 = vpop.f32.mrb[0].mxu0
      %5220 = vmatprep.mubr.f32.mxu0 0.0
      %v5221 = vand.u32 %v3785, 4294901760
      %5222 = vmatmul.mubr.f32.gmra.mrb[0].mxu0 %v5221
      %v5223 = vpop.f32.mrb[0].mxu0
      %v5224 = vadd.f32 %v4922, %v5223
      %v5225 = vpop.f32.mrb[0].mxu0
      %5226 = vmatprep.mubr.f32.mxu0 0.0
      %v5227 = vand.u32 %v3787, 4294901760
      %5228 = vmatmul.mubr.f32.gmra.mrb[0].mxu0 %v5227
      %v5229 = vpop.f32.mrb[0].mxu0
      %v5230 = vadd.f32 %v4930, %v5229
      %v5231 = vpop.f32.mrb[0].mxu0
      %5232 = vmatprep.mubr.f32.mxu0 0.0
      %v5233 = vand.u32 %v3789, 4294901760
      %5234 = vmatmul.mubr.f32.gmra.mrb[0].mxu0 %v5233
      %v5235 = vpop.f32.mrb[0].mxu0
      %v5236 = vadd.f32 %v4938, %v5235
      %v5237 = vpop.f32.mrb[0].mxu0
      %5238 = vmatprep.mubr.f32.mxu0 0.0
      %v5239 = vand.u32 %v3791, 4294901760
      %5240 = vmatmul.mubr.f32.gmra.mrb[0].mxu0 %v5239
      %v5241 = vpop.f32.mrb[0].mxu0
      %v5242 = vadd.f32 %v4946, %v5241
      %v5243 = vpop.f32.mrb[0].mxu0
      %5244 = vmatprep.mubr.f32.mxu0 0.0
      %v5245 = vand.u32 %v3793, 4294901760
      %5246 = vmatmul.mubr.f32.gmra.mrb[0].mxu0 %v5245
      %v5247 = vpop.f32.mrb[0].mxu0
      %v5248 = vadd.f32 %v4954, %v5247
      %v5249 = vpop.f32.mrb[0].mxu0
      %5250 = vmatprep.mubr.f32.mxu0 0.0
      %v5251 = vand.u32 %v3795, 4294901760
      %5252 = vmatmul.mubr.f32.gmra.mrb[0].mxu0 %v5251
      %v5253 = vpop.f32.mrb[0].mxu0
      %v5254 = vadd.f32 %v4962, %v5253
      %v5255 = vpop.f32.mrb[0].mxu0
      %5256 = vmatprep.mubr.f32.mxu0 0.0
      %v5257 = vand.u32 %v3797, 4294901760
      %5258 = vmatmul.mubr.f32.gmra.mrb[0].mxu0 %v5257
      %v5259 = vpop.f32.mrb[0].mxu0
      %v5260 = vadd.f32 %v4970, %v5259
      %v5261 = vpop.f32.mrb[0].mxu0
      %5262 = vmatprep.mubr.f32.mxu0 0.0
      %v5263 = vand.u32 %v3799, 4294901760
      %5264 = vmatmul.mubr.f32.gmra.mrb[0].mxu0 %v5263
      %v5265 = vpop.f32.mrb[0].mxu0
      %v5266 = vadd.f32 %v4978, %v5265
      %v5267 = vpop.f32.mrb[0].mxu0
      %5268 = vmatprep.mubr.f32.mxu0 0.0
      %v5269 = vand.u32 %v3801, 4294901760
      %5270 = vmatmul.mubr.f32.gmra.mrb[0].mxu0 %v5269
      %v5271 = vpop.f32.mrb[0].mxu0
      %v5272 = vadd.f32 %v4986, %v5271
      %v5273 = vpop.f32.mrb[0].mxu0
      %5274 = vmatprep.mubr.f32.mxu0 0.0
      %v5275 = vand.u32 %v3803, 4294901760
      %5276 = vmatmul.mubr.f32.gmra.mrb[0].mxu0 %v5275
      %v5277 = vpop.f32.mrb[0].mxu0
      %v5278 = vadd.f32 %v4994, %v5277
      %v5279 = vpop.f32.mrb[0].mxu0
      %5280 = vmatprep.mubr.f32.mxu0 0.0
      %v5281 = vand.u32 %v3805, 4294901760
      %5282 = vmatmul.mubr.f32.gmra.mrb[0].mxu0 %v5281
      %v5283 = vpop.f32.mrb[0].mxu0
      %v5284 = vadd.f32 %v5002, %v5283
      %v5285 = vpop.f32.mrb[0].mxu0
      %5286 = vmatprep.mubr.f32.mxu0 0.0
      %v5287 = vand.u32 %v3807, 4294901760
      %5288 = vmatmul.mubr.f32.gmra.mrb[0].mxu0 %v5287
      %v5289 = vpop.f32.mrb[0].mxu0
      %v5290 = vadd.f32 %v5010, %v5289
      %v5291 = vpop.f32.mrb[0].mxu0
      %5292 = vmatprep.mubr.f32.mxu0 0.0
      %v5293 = vand.u32 %v3809, 4294901760
      %5294 = vmatmul.mubr.f32.gmra.mrb[0].mxu0 %v5293
      %v5295 = vpop.f32.mrb[0].mxu0
      %v5296 = vadd.f32 %v5018, %v5295
      %v5297 = vpop.f32.mrb[0].mxu0
      %5298 = vmatprep.mubr.f32.mxu0 0.0
      %v5299 = vand.u32 %v3811, 4294901760
      %5300 = vmatmul.mubr.f32.gmra.mrb[0].mxu0 %v5299
      %v5301 = vpop.f32.mrb[0].mxu0
      %v5302 = vadd.f32 %v5026, %v5301
      %v5303 = vpop.f32.mrb[0].mxu0
      %5304 = vmatprep.mubr.f32.mxu0 0.0
      %v5305 = vand.u32 %v3813, 4294901760
      %5306 = vmatmul.mubr.f32.gmra.mrb[0].mxu0 %v5305
      %v5307 = vpop.f32.mrb[0].mxu0
      %v5308 = vadd.f32 %v5034, %v5307
      %v5309 = vpop.f32.mrb[0].mxu0
      %5310 = vmatprep.mubr.f32.mxu0 0.0
      %v5311 = vand.u32 %v3815, 4294901760
      %5312 = vmatmul.mubr.f32.gmra.mrb[0].mxu0 %v5311
      %v5313 = vpop.f32.mrb[0].mxu0
      %v5314 = vadd.f32 %v5042, %v5313
      %v5315 = vpop.f32.mrb[0].mxu0
      %5316 = vmatprep.mubr.f32.mxu0 0.0
      %v5317 = vand.u32 %v3817, 4294901760
      %5318 = vmatmul.mubr.f32.gmra.mrb[0].mxu0 %v5317
      %v5319 = vpop.f32.mrb[0].mxu0
      %v5320 = vadd.f32 %v5050, %v5319
      %v5321 = vpop.f32.mrb[0].mxu0
      %5322 = vmatprep.mubr.f32.mxu0 0.0
      %v5323 = vand.u32 %v3819, 4294901760
      %5324 = vmatmul.mubr.f32.gmra.mrb[0].mxu0 %v5323
      %v5325 = vpop.f32.mrb[0].mxu0
      %v5326 = vadd.f32 %v5058, %v5325
      %v5327 = vpop.f32.mrb[0].mxu0
      %5328 = vmatprep.mubr.f32.mxu0 0.0
      %v5329 = vand.u32 %v3821, 4294901760
      %5330 = vmatmul.mubr.f32.gmra.mrb[0].mxu0 %v5329
      %v5331 = vpop.f32.mrb[0].mxu0
      %v5332 = vadd.f32 %v5066, %v5331
      %v5333 = vpop.f32.mrb[0].mxu0
      %5334 = vmatprep.mubr.f32.mxu0 0.0
      %v5335 = vand.u32 %v3823, 4294901760
      %5336 = vmatmul.mubr.f32.gmra.mrb[0].mxu0 %v5335
      %v5337 = vpop.f32.mrb[0].mxu0
      %v5338 = vadd.f32 %v5074, %v5337
      %v5339 = vpop.f32.mrb[0].mxu0
      %5340 = vmatprep.mubr.f32.mxu0 0.0
      %v5341 = vand.u32 %v3825, 4294901760
      %5342 = vmatmul.mubr.f32.gmra.mrb[0].mxu0 %v5341
      %v5343 = vpop.f32.mrb[0].mxu0
      %v5344 = vadd.f32 %v5082, %v5343
      %v5345 = vpop.f32.mrb[0].mxu0
      %5346 = vmatprep.mubr.f32.mxu0 0.0
      %v5347 = vand.u32 %v3827, 4294901760
      %5348 = vmatmul.mubr.f32.gmra.mrb[0].mxu0 %v5347
      %v5349 = vpop.f32.mrb[0].mxu0
      %v5350 = vadd.f32 %v5090, %v5349
      %v5351 = vpop.f32.mrb[0].mxu0
      %5352 = vdwg.mxu0
      %5353 = vmatprep.subr.mxu0 0.0
      %v5354 = vand.u32 %v3830, 4294901760
      %5355 = vmatpush1.msra.mxu0 %v5354
      %5356 = vmatprep.subr.mxu0 0.0
      %5357 = vmatpush1.msra.mxu0 0.0
      %5358 = vmatprep.subr.mxu0 0.0
      %5359 = vmatpush1.msra.mxu0 0.0
      %5360 = vmatprep.subr.mxu0 0.0
      %5361 = vmatpush1.msra.mxu0 0.0
      %5362 = vmatprep.subr.mxu0 0.0
      %5363 = vmatpush1.msra.mxu0 0.0
      %5364 = vmatprep.subr.mxu0 0.0
      %5365 = vmatpush1.msra.mxu0 0.0
      %5366 = vmatprep.subr.mxu0 0.0
      %5367 = vmatpush1.msra.mxu0 0.0
      %5368 = vmatprep.subr.mxu0 0.0
      %5369 = vmatpush1.msra.mxu0 0.0
      %5370 = vmatprep.subr.mxu0 0.0
      %5371 = vmatpush1.msra.mxu0 0.0
      %5372 = vmatprep.subr.mxu0 0.0
      %5373 = vmatpush1.msra.mxu0 0.0
      %5374 = vmatprep.subr.mxu0 0.0
      %5375 = vmatpush1.msra.mxu0 0.0
      %5376 = vmatprep.subr.mxu0 0.0
      %5377 = vmatpush1.msra.mxu0 0.0
      %5378 = vmatprep.subr.mxu0 0.0
      %5379 = vmatpush1.msra.mxu0 0.0
      %5380 = vmatprep.subr.mxu0 0.0
      %5381 = vmatpush1.msra.mxu0 0.0
      %5382 = vmatprep.subr.mxu0 0.0
      %5383 = vmatpush1.msra.mxu0 0.0
      %5384 = vmatprep.subr.mxu0 0.0
      %5385 = vmatpush1.msra.mxu0 0.0
      %5386 = vmatprep.subr.mxu0 0.0
      %5387 = vmatpush1.msra.mxu0 0.0
      %5388 = vmatprep.subr.mxu0 0.0
      %5389 = vmatpush1.msra.mxu0 0.0
      %5390 = vmatprep.subr.mxu0 0.0
      %5391 = vmatpush1.msra.mxu0 0.0
      %5392 = vmatprep.subr.mxu0 0.0
      %5393 = vmatpush1.msra.mxu0 0.0
      %5394 = vmatprep.subr.mxu0 0.0
      %5395 = vmatpush1.msra.mxu0 0.0
      %5396 = vmatprep.subr.mxu0 0.0
      %5397 = vmatpush1.msra.mxu0 0.0
      %5398 = vmatprep.subr.mxu0 0.0
      %5399 = vmatpush1.msra.mxu0 0.0
      %5400 = vmatprep.subr.mxu0 0.0
      %5401 = vmatpush1.msra.mxu0 0.0
      %5402 = vmatprep.subr.mxu0 0.0
      %5403 = vmatpush1.msra.mxu0 0.0
      %5404 = vmatprep.subr.mxu0 0.0
      %5405 = vmatpush1.msra.mxu0 0.0
      %5406 = vmatprep.subr.mxu0 0.0
      %5407 = vmatpush1.msra.mxu0 0.0
      %5408 = vmatprep.subr.mxu0 0.0
      %5409 = vmatpush1.msra.mxu0 0.0
      %5410 = vmatprep.subr.mxu0 0.0
      %5411 = vmatpush1.msra.mxu0 0.0
      %5412 = vmatprep.subr.mxu0 0.0
      %5413 = vmatpush1.msra.mxu0 0.0
      %5414 = vmatprep.subr.mxu0 0.0
      %5415 = vmatpush1.msra.mxu0 0.0
      %5416 = vmatprep.subr.mxu0 0.0
      %5417 = vmatpush1.msra.mxu0 0.0
      %5418 = vmatprep.mubr.f32.mxu0 0.0
      %v5419 = vand.u32 %v3765, 4294901760
      %5420 = vmatmul.mubr.f32.gmra.mrb[0].mxu0 %v5419
      %v5421 = vpop.f32.mrb[0].mxu0
      %v5422 = vadd.f32 %v5164, %v5421
      %v5423 = vpop.f32.mrb[0].mxu0
      %5424 = vmatprep.mubr.f32.mxu0 0.0
      %v5425 = vand.u32 %v3767, 4294901760
      %5426 = vmatmul.mubr.f32.gmra.mrb[0].mxu0 %v5425
      %v5427 = vpop.f32.mrb[0].mxu0
      %v5428 = vadd.f32 %v5170, %v5427
      %v5429 = vpop.f32.mrb[0].mxu0
      %5430 = vmatprep.mubr.f32.mxu0 0.0
      %v5431 = vand.u32 %v3769, 4294901760
      %5432 = vmatmul.mubr.f32.gmra.mrb[0].mxu0 %v5431
      %v5433 = vpop.f32.mrb[0].mxu0
      %v5434 = vadd.f32 %v5176, %v5433
      %v5435 = vpop.f32.mrb[0].mxu0
      %5436 = vmatprep.mubr.f32.mxu0 0.0
      %v5437 = vand.u32 %v3771, 4294901760
      %5438 = vmatmul.mubr.f32.gmra.mrb[0].mxu0 %v5437
      %v5439 = vpop.f32.mrb[0].mxu0
      %v5440 = vadd.f32 %v5182, %v5439
      %v5441 = vpop.f32.mrb[0].mxu0
      %5442 = vmatprep.mubr.f32.mxu0 0.0
      %v5443 = vand.u32 %v3773, 4294901760
      %5444 = vmatmul.mubr.f32.gmra.mrb[0].mxu0 %v5443
      %v5445 = vpop.f32.mrb[0].mxu0
      %v5446 = vadd.f32 %v5188, %v5445
      %v5447 = vpop.f32.mrb[0].mxu0
      %5448 = vmatprep.mubr.f32.mxu0 0.0
      %v5449 = vand.u32 %v3775, 4294901760
      %5450 = vmatmul.mubr.f32.gmra.mrb[0].mxu0 %v5449
      %v5451 = vpop.f32.mrb[0].mxu0
      %v5452 = vadd.f32 %v5194, %v5451
      %v5453 = vpop.f32.mrb[0].mxu0
      %5454 = vmatprep.mubr.f32.mxu0 0.0
      %v5455 = vand.u32 %v3777, 4294901760
      %5456 = vmatmul.mubr.f32.gmra.mrb[0].mxu0 %v5455
      %v5457 = vpop.f32.mrb[0].mxu0
      %v5458 = vadd.f32 %v5200, %v5457
      %v5459 = vpop.f32.mrb[0].mxu0
      %5460 = vmatprep.mubr.f32.mxu0 0.0
      %v5461 = vand.u32 %v3779, 4294901760
      %5462 = vmatmul.mubr.f32.gmra.mrb[0].mxu0 %v5461
      %v5463 = vpop.f32.mrb[0].mxu0
      %v5464 = vadd.f32 %v5206, %v5463
      %v5465 = vpop.f32.mrb[0].mxu0
      %5466 = vmatprep.mubr.f32.mxu0 0.0
      %v5467 = vand.u32 %v3781, 4294901760
      %5468 = vmatmul.mubr.f32.gmra.mrb[0].mxu0 %v5467
      %v5469 = vpop.f32.mrb[0].mxu0
      %v5470 = vadd.f32 %v5212, %v5469
      %v5471 = vpop.f32.mrb[0].mxu0
      %5472 = vmatprep.mubr.f32.mxu0 0.0
      %v5473 = vand.u32 %v3783, 4294901760
      %5474 = vmatmul.mubr.f32.gmra.mrb[0].mxu0 %v5473
      %v5475 = vpop.f32.mrb[0].mxu0
      %v5476 = vadd.f32 %v5218, %v5475
      %v5477 = vpop.f32.mrb[0].mxu0
      %5478 = vmatprep.mubr.f32.mxu0 0.0
      %v5479 = vand.u32 %v3785, 4294901760
      %5480 = vmatmul.mubr.f32.gmra.mrb[0].mxu0 %v5479
      %v5481 = vpop.f32.mrb[0].mxu0
      %v5482 = vadd.f32 %v5224, %v5481
      %v5483 = vpop.f32.mrb[0].mxu0
      %5484 = vmatprep.mubr.f32.mxu0 0.0
      %v5485 = vand.u32 %v3787, 4294901760
      %5486 = vmatmul.mubr.f32.gmra.mrb[0].mxu0 %v5485
      %v5487 = vpop.f32.mrb[0].mxu0
      %v5488 = vadd.f32 %v5230, %v5487
      %v5489 = vpop.f32.mrb[0].mxu0
      %5490 = vmatprep.mubr.f32.mxu0 0.0
      %v5491 = vand.u32 %v3789, 4294901760
      %5492 = vmatmul.mubr.f32.gmra.mrb[0].mxu0 %v5491
      %v5493 = vpop.f32.mrb[0].mxu0
      %v5494 = vadd.f32 %v5236, %v5493
      %v5495 = vpop.f32.mrb[0].mxu0
      %5496 = vmatprep.mubr.f32.mxu0 0.0
      %v5497 = vand.u32 %v3791, 4294901760
      %5498 = vmatmul.mubr.f32.gmra.mrb[0].mxu0 %v5497
      %v5499 = vpop.f32.mrb[0].mxu0
      %v5500 = vadd.f32 %v5242, %v5499
      %v5501 = vpop.f32.mrb[0].mxu0
      %5502 = vmatprep.mubr.f32.mxu0 0.0
      %v5503 = vand.u32 %v3793, 4294901760
      %5504 = vmatmul.mubr.f32.gmra.mrb[0].mxu0 %v5503
      %v5505 = vpop.f32.mrb[0].mxu0
      %v5506 = vadd.f32 %v5248, %v5505
      %v5507 = vpop.f32.mrb[0].mxu0
      %5508 = vmatprep.mubr.f32.mxu0 0.0
      %v5509 = vand.u32 %v3795, 4294901760
      %5510 = vmatmul.mubr.f32.gmra.mrb[0].mxu0 %v5509
      %v5511 = vpop.f32.mrb[0].mxu0
      %v5512 = vadd.f32 %v5254, %v5511
      %v5513 = vpop.f32.mrb[0].mxu0
      %5514 = vmatprep.mubr.f32.mxu0 0.0
      %v5515 = vand.u32 %v3797, 4294901760
      %5516 = vmatmul.mubr.f32.gmra.mrb[0].mxu0 %v5515
      %v5517 = vpop.f32.mrb[0].mxu0
      %v5518 = vadd.f32 %v5260, %v5517
      %v5519 = vpop.f32.mrb[0].mxu0
      %5520 = vmatprep.mubr.f32.mxu0 0.0
      %v5521 = vand.u32 %v3799, 4294901760
      %5522 = vmatmul.mubr.f32.gmra.mrb[0].mxu0 %v5521
      %v5523 = vpop.f32.mrb[0].mxu0
      %v5524 = vadd.f32 %v5266, %v5523
      %v5525 = vpop.f32.mrb[0].mxu0
      %5526 = vmatprep.mubr.f32.mxu0 0.0
      %v5527 = vand.u32 %v3801, 4294901760
      %5528 = vmatmul.mubr.f32.gmra.mrb[0].mxu0 %v5527
      %v5529 = vpop.f32.mrb[0].mxu0
      %v5530 = vadd.f32 %v5272, %v5529
      %v5531 = vpop.f32.mrb[0].mxu0
      %5532 = vmatprep.mubr.f32.mxu0 0.0
      %v5533 = vand.u32 %v3803, 4294901760
      %5534 = vmatmul.mubr.f32.gmra.mrb[0].mxu0 %v5533
      %v5535 = vpop.f32.mrb[0].mxu0
      %v5536 = vadd.f32 %v5278, %v5535
      %v5537 = vpop.f32.mrb[0].mxu0
      %5538 = vmatprep.mubr.f32.mxu0 0.0
      %v5539 = vand.u32 %v3805, 4294901760
      %5540 = vmatmul.mubr.f32.gmra.mrb[0].mxu0 %v5539
      %v5541 = vpop.f32.mrb[0].mxu0
      %v5542 = vadd.f32 %v5284, %v5541
      %v5543 = vpop.f32.mrb[0].mxu0
      %5544 = vmatprep.mubr.f32.mxu0 0.0
      %v5545 = vand.u32 %v3807, 4294901760
      %5546 = vmatmul.mubr.f32.gmra.mrb[0].mxu0 %v5545
      %v5547 = vpop.f32.mrb[0].mxu0
      %v5548 = vadd.f32 %v5290, %v5547
      %v5549 = vpop.f32.mrb[0].mxu0
      %5550 = vmatprep.mubr.f32.mxu0 0.0
      %v5551 = vand.u32 %v3809, 4294901760
      %5552 = vmatmul.mubr.f32.gmra.mrb[0].mxu0 %v5551
      %v5553 = vpop.f32.mrb[0].mxu0
      %v5554 = vadd.f32 %v5296, %v5553
      %v5555 = vpop.f32.mrb[0].mxu0
      %5556 = vmatprep.mubr.f32.mxu0 0.0
      %v5557 = vand.u32 %v3811, 4294901760
      %5558 = vmatmul.mubr.f32.gmra.mrb[0].mxu0 %v5557
      %v5559 = vpop.f32.mrb[0].mxu0
      %v5560 = vadd.f32 %v5302, %v5559
      %v5561 = vpop.f32.mrb[0].mxu0
      %5562 = vmatprep.mubr.f32.mxu0 0.0
      %v5563 = vand.u32 %v3813, 4294901760
      %5564 = vmatmul.mubr.f32.gmra.mrb[0].mxu0 %v5563
      %v5565 = vpop.f32.mrb[0].mxu0
      %v5566 = vadd.f32 %v5308, %v5565
      %v5567 = vpop.f32.mrb[0].mxu0
      %5568 = vmatprep.mubr.f32.mxu0 0.0
      %v5569 = vand.u32 %v3815, 4294901760
      %5570 = vmatmul.mubr.f32.gmra.mrb[0].mxu0 %v5569
      %v5571 = vpop.f32.mrb[0].mxu0
      %v5572 = vadd.f32 %v5314, %v5571
      %v5573 = vpop.f32.mrb[0].mxu0
      %5574 = vmatprep.mubr.f32.mxu0 0.0
      %v5575 = vand.u32 %v3817, 4294901760
      %5576 = vmatmul.mubr.f32.gmra.mrb[0].mxu0 %v5575
      %v5577 = vpop.f32.mrb[0].mxu0
      %v5578 = vadd.f32 %v5320, %v5577
      %v5579 = vpop.f32.mrb[0].mxu0
      %5580 = vmatprep.mubr.f32.mxu0 0.0
      %v5581 = vand.u32 %v3819, 4294901760
      %5582 = vmatmul.mubr.f32.gmra.mrb[0].mxu0 %v5581
      %v5583 = vpop.f32.mrb[0].mxu0
      %v5584 = vadd.f32 %v5326, %v5583
      %v5585 = vpop.f32.mrb[0].mxu0
      %5586 = vmatprep.mubr.f32.mxu0 0.0
      %v5587 = vand.u32 %v3821, 4294901760
      %5588 = vmatmul.mubr.f32.gmra.mrb[0].mxu0 %v5587
      %v5589 = vpop.f32.mrb[0].mxu0
      %v5590 = vadd.f32 %v5332, %v5589
      %v5591 = vpop.f32.mrb[0].mxu0
      %5592 = vmatprep.mubr.f32.mxu0 0.0
      %v5593 = vand.u32 %v3823, 4294901760
      %5594 = vmatmul.mubr.f32.gmra.mrb[0].mxu0 %v5593
      %v5595 = vpop.f32.mrb[0].mxu0
      %v5596 = vadd.f32 %v5338, %v5595
      %v5597 = vpop.f32.mrb[0].mxu0
      %5598 = vmatprep.mubr.f32.mxu0 0.0
      %v5599 = vand.u32 %v3825, 4294901760
      %5600 = vmatmul.mubr.f32.gmra.mrb[0].mxu0 %v5599
      %v5601 = vpop.f32.mrb[0].mxu0
      %v5602 = vadd.f32 %v5344, %v5601
      %v5603 = vpop.f32.mrb[0].mxu0
      %5604 = vmatprep.mubr.f32.mxu0 0.0
      %v5605 = vand.u32 %v3827, 4294901760
      %5606 = vmatmul.mubr.f32.gmra.mrb[0].mxu0 %v5605
      %v5607 = vpop.f32.mrb[0].mxu0
      %v5608 = vadd.f32 %v5350, %v5607
      %v5609 = vpop.f32.mrb[0].mxu0
      %5610 = vdwg.mxu0
      %v5611 = vmax.f32 %v5422, 0.0
      %v5612 = vmax.f32 %v5428, 0.0
      %v5613 = vmax.f32 %v5434, 0.0
      %v5614 = vmax.f32 %v5440, 0.0
      %v5615 = vmax.f32 %v5446, 0.0
      %v5616 = vmax.f32 %v5452, 0.0
      %v5617 = vmax.f32 %v5458, 0.0
      %v5618 = vmax.f32 %v5464, 0.0
      %v5619 = vmax.f32 %v5470, 0.0
      %v5620 = vmax.f32 %v5476, 0.0
      %v5621 = vmax.f32 %v5482, 0.0
      %v5622 = vmax.f32 %v5488, 0.0
      %v5623 = vmax.f32 %v5494, 0.0
      %v5624 = vmax.f32 %v5500, 0.0
      %v5625 = vmax.f32 %v5506, 0.0
      %v5626 = vmax.f32 %v5512, 0.0
      %v5627 = vmax.f32 %v5518, 0.0
      %v5628 = vmax.f32 %v5524, 0.0
      %v5629 = vmax.f32 %v5530, 0.0
      %v5630 = vmax.f32 %v5536, 0.0
      %v5631 = vmax.f32 %v5542, 0.0
      %v5632 = vmax.f32 %v5548, 0.0
      %v5633 = vmax.f32 %v5554, 0.0
      %v5634 = vmax.f32 %v5560, 0.0
      %v5635 = vmax.f32 %v5566, 0.0
      %v5636 = vmax.f32 %v5572, 0.0
      %v5637 = vmax.f32 %v5578, 0.0
      %v5638 = vmax.f32 %v5584, 0.0
      %v5639 = vmax.f32 %v5590, 0.0
      %v5640 = vmax.f32 %v5596, 0.0
      %v5641 = vmax.f32 %v5602, 0.0
      %v5642 = vmax.f32 %v5608, 0.0
      %5675 = vrot.lane.b32.xlu0 %v5611, 16
      %v5676 = vpop.permute.xlu0 %5675
      %5677 = vrot.lane.b32.xlu0 %v5612, 16
      %v5678 = vpop.permute.xlu0 %5677
      %5679 = vrot.lane.b32.xlu0 %v5613, 16
      %v5680 = vpop.permute.xlu0 %5679
      %5681 = vrot.lane.b32.xlu0 %v5614, 16
      %v5682 = vpop.permute.xlu0 %5681
      %5683 = vrot.lane.b32.xlu0 %v5615, 16
      %v5684 = vpop.permute.xlu0 %5683
      %5685 = vrot.lane.b32.xlu0 %v5616, 16
      %v5686 = vpop.permute.xlu0 %5685
      %5687 = vrot.lane.b32.xlu0 %v5617, 16
      %v5688 = vpop.permute.xlu0 %5687
      %5689 = vrot.lane.b32.xlu0 %v5618, 16
      %v5690 = vpop.permute.xlu0 %5689
      %5691 = vrot.lane.b32.xlu0 %v5619, 16
      %v5692 = vpop.permute.xlu0 %5691
      %5693 = vrot.lane.b32.xlu0 %v5620, 16
      %v5694 = vpop.permute.xlu0 %5693
      %5695 = vrot.lane.b32.xlu0 %v5621, 16
      %v5696 = vpop.permute.xlu0 %5695
      %5697 = vrot.lane.b32.xlu0 %v5622, 16
      %v5698 = vpop.permute.xlu0 %5697
      %5699 = vrot.lane.b32.xlu0 %v5623, 16
      %v5700 = vpop.permute.xlu0 %5699
      %5701 = vrot.lane.b32.xlu0 %v5624, 16
      %v5702 = vpop.permute.xlu0 %5701
      %5703 = vrot.lane.b32.xlu0 %v5625, 16
      %v5704 = vpop.permute.xlu0 %5703
      %5705 = vrot.lane.b32.xlu0 %v5626, 16
      %v5706 = vpop.permute.xlu0 %5705
      %5707 = vrot.lane.b32.xlu0 %v5627, 16
      %v5708 = vpop.permute.xlu0 %5707
      %5709 = vrot.lane.b32.xlu0 %v5628, 16
      %v5710 = vpop.permute.xlu0 %5709
      %5711 = vrot.lane.b32.xlu0 %v5629, 16
      %v5712 = vpop.permute.xlu0 %5711
      %5713 = vrot.lane.b32.xlu0 %v5630, 16
      %v5714 = vpop.permute.xlu0 %5713
      %5715 = vrot.lane.b32.xlu0 %v5631, 16
      %v5716 = vpop.permute.xlu0 %5715
      %5717 = vrot.lane.b32.xlu0 %v5632, 16
      %v5718 = vpop.permute.xlu0 %5717
      %5719 = vrot.lane.b32.xlu0 %v5633, 16
      %v5720 = vpop.permute.xlu0 %5719
      %5721 = vrot.lane.b32.xlu0 %v5634, 16
      %v5722 = vpop.permute.xlu0 %5721
      %5723 = vrot.lane.b32.xlu0 %v5635, 16
      %v5724 = vpop.permute.xlu0 %5723
      %5725 = vrot.lane.b32.xlu0 %v5636, 16
      %v5726 = vpop.permute.xlu0 %5725
      %5727 = vrot.lane.b32.xlu0 %v5637, 16
      %v5728 = vpop.permute.xlu0 %5727
      %5729 = vrot.lane.b32.xlu0 %v5638, 16
      %v5730 = vpop.permute.xlu0 %5729
      %5731 = vrot.lane.b32.xlu0 %v5639, 16
      %v5732 = vpop.permute.xlu0 %5731
      %5733 = vrot.lane.b32.xlu0 %v5640, 16
      %v5734 = vpop.permute.xlu0 %5733
      %5735 = vrot.lane.b32.xlu0 %v5641, 16
      %v5736 = vpop.permute.xlu0 %5735
      %5737 = vrot.lane.b32.xlu0 %v5642, 16
      %v5738 = vpop.permute.xlu0 %5737
      %vm5771 = vcmask 130048
      %v5772 = vsel %vm5771, %v3725, %v5676
      %v5773 = vsel %vm5771, %v3726, %v5678
      %v5774 = vsel %vm5771, %v3727, %v5680
      %v5775 = vsel %vm5771, %v3728, %v5682
      %v5776 = vsel %vm5771, %v3729, %v5684
      %v5777 = vsel %vm5771, %v3730, %v5686
      %v5778 = vsel %vm5771, %v3731, %v5688
      %v5779 = vsel %vm5771, %v3732, %v5690
      %v5780 = vsel %vm5771, %v3733, %v5692
      %v5781 = vsel %vm5771, %v3734, %v5694
      %v5782 = vsel %vm5771, %v3735, %v5696
      %v5783 = vsel %vm5771, %v3736, %v5698
      %v5784 = vsel %vm5771, %v3737, %v5700
      %v5785 = vsel %vm5771, %v3738, %v5702
      %v5786 = vsel %vm5771, %v3739, %v5704
      %v5787 = vsel %vm5771, %v3740, %v5706
      %v5788 = vsel %vm5771, %v3741, %v5708
      %v5789 = vsel %vm5771, %v3742, %v5710
      %v5790 = vsel %vm5771, %v3743, %v5712
      %v5791 = vsel %vm5771, %v3744, %v5714
      %v5792 = vsel %vm5771, %v3745, %v5716
      %v5793 = vsel %vm5771, %v3746, %v5718
      %v5794 = vsel %vm5771, %v3747, %v5720
      %v5795 = vsel %vm5771, %v3748, %v5722
      %v5796 = vsel %vm5771, %v3749, %v5724
      %v5797 = vsel %vm5771, %v3750, %v5726
      %v5798 = vsel %vm5771, %v3751, %v5728
      %v5799 = vsel %vm5771, %v3752, %v5730
      %v5800 = vsel %vm5771, %v3753, %v5732
      %v5801 = vsel %vm5771, %v3754, %v5734
      %v5802 = vsel %vm5771, %v3755, %v5736
      %v5803 = vsel %vm5771, %v3756, %v5738
      %vm5804 = vcmask 261120
      %5805 = vst.msk [vmem:[%s444] sm:$0xff] %vm5804, %v5772
      %5806 = vst.msk [vmem:[%s444 + $0x8] sm:$0xff] %vm5804, %v5773
      %5807 = vst.msk [vmem:[%s444 + $0x10] sm:$0xff] %vm5804, %v5774
      %5808 = vst.msk [vmem:[%s444 + $0x18] sm:$0xff] %vm5804, %v5775
      %5809 = vst.msk [vmem:[%s444 + $0x20] sm:$0xff] %vm5804, %v5776
      %5810 = vst.msk [vmem:[%s444 + $0x28] sm:$0xff] %vm5804, %v5777
      %5811 = vst.msk [vmem:[%s444 + $0x30] sm:$0xff] %vm5804, %v5778
      %5812 = vst.msk [vmem:[%s444 + $0x38] sm:$0xff] %vm5804, %v5779
      %5813 = vst.msk [vmem:[%s444 + $0x40] sm:$0xff] %vm5804, %v5780
      %5814 = vst.msk [vmem:[%s444 + $0x48] sm:$0xff] %vm5804, %v5781
      %5815 = vst.msk [vmem:[%s444 + $0x50] sm:$0xff] %vm5804, %v5782
      %5816 = vst.msk [vmem:[%s444 + $0x58] sm:$0xff] %vm5804, %v5783
      %5817 = vst.msk [vmem:[%s444 + $0x60] sm:$0xff] %vm5804, %v5784
      %5818 = vst.msk [vmem:[%s444 + $0x68] sm:$0xff] %vm5804, %v5785
      %5819 = vst.msk [vmem:[%s444 + $0x70] sm:$0xff] %vm5804, %v5786
      %5820 = vst.msk [vmem:[%s444 + $0x78] sm:$0xff] %vm5804, %v5787
      %5821 = vst.msk [vmem:[%s444 + $0x80] sm:$0xff] %vm5804, %v5788
      %5822 = vst.msk [vmem:[%s444 + $0x88] sm:$0xff] %vm5804, %v5789
      %5823 = vst.msk [vmem:[%s444 + $0x90] sm:$0xff] %vm5804, %v5790
      %5824 = vst.msk [vmem:[%s444 + $0x98] sm:$0xff] %vm5804, %v5791
      %5825 = vst.msk [vmem:[%s444 + $0xa0] sm:$0xff] %vm5804, %v5792
      %5826 = vst.msk [vmem:[%s444 + $0xa8] sm:$0xff] %vm5804, %v5793
      %5827 = vst.msk [vmem:[%s444 + $0xb0] sm:$0xff] %vm5804, %v5794
      %5828 = vst.msk [vmem:[%s444 + $0xb8] sm:$0xff] %vm5804, %v5795
      %5829 = vst.msk [vmem:[%s444 + $0xc0] sm:$0xff] %vm5804, %v5796
      %5830 = vst.msk [vmem:[%s444 + $0xc8] sm:$0xff] %vm5804, %v5797
      %5831 = vst.msk [vmem:[%s444 + $0xd0] sm:$0xff] %vm5804, %v5798
      %5832 = vst.msk [vmem:[%s444 + $0xd8] sm:$0xff] %vm5804, %v5799
      %5833 = vst.msk [vmem:[%s444 + $0xe0] sm:$0xff] %vm5804, %v5800
      %5834 = vst.msk [vmem:[%s444 + $0xe8] sm:$0xff] %vm5804, %v5801
      %5835 = vst.msk [vmem:[%s444 + $0xf0] sm:$0xff] %vm5804, %v5802
      %5836 = vst.msk [vmem:[%s444 + $0xf8] sm:$0xff] %vm5804, %v5803
      %s5837 = smul.u32 32, %s23
      %p5838 = scmp.lt.s32.totalorder %s22, 1
      %s5839 = scalar_select %p5838, %s22, 1
      %p5840 = scmp.lt.s32.totalorder %s5837, 31
      %s5841 = scalar_select %p5840, %s5837, 31
      %s5842 = smul.addr %s5839, 32
      %s5843 = sadd.s32 %s5841, %s5842
      %s5844 = smul.addr %s5843, 8
      %s5845 = scalar_lea.vmem %s7, %s5844
      // Predicated region
      $region49: #{tpu_custom_call.1} parent=47 // pred_check
        %p5846 = pneg %p234
      $region50: #{tpu_custom_call.1} parent=47 // pred_check_branch
        %5848 = sbr.rel (%p5846) target = $region52
      $region51: #{tpu_custom_call.1} parent=47 // pred_region
        %s5849 = smul.u32 32, %s23
      $region52: #{tpu_custom_call.1} parent=47 // pred_fallthru
        _
    $region48: #{tpu_custom_call.1} parent=5 // pred_fallthru
      _
    %p5850 = scmp.le.s32.totalorder 2, %s13
    // Predicated region
    $region53: #{tpu_custom_call.1} parent=5 // pred_check
      %p5851 = pneg %p5850
    $region54: #{tpu_custom_call.1} parent=5 // pred_check_branch
      %5853 = sbr.rel (%p5851) target = $region56
    $region55: #{tpu_custom_call.1} parent=5 // pred_region
      %s5854 = ssub.s32 %s13, 2
      // Predicated region
      $region57: #{tpu_custom_call.1} parent=55 // pred_check
        %p5855 = pneg %p240
      $region58: #{tpu_custom_call.1} parent=55 // pred_check_branch
        %5857 = sbr.rel (%p5855) target = $region60
      $region59: #{tpu_custom_call.1} parent=55 // pred_region
        %s5858 = smul.u32 32, %s25
        %p5859 = scmp.lt.s32.totalorder %s24, 1
        %s5860 = scalar_select %p5859, %s24, 1
        %p5861 = scmp.lt.s32.totalorder %s5858, 31
        %s5862 = scalar_select %p5861, %s5858, 31
        %s5863 = smul.addr %s5860, 32
        %s5864 = sadd.s32 %s5862, %s5863
        %s5865 = smul.addr %s5864, 8
        %s5866 = scalar_lea.vmem %s7, %s5865
      $region60: #{tpu_custom_call.1} parent=55 // pred_fallthru
        _
    $region56: #{tpu_custom_call.1} parent=5 // pred_fallthru
      _
  $region6: #{tpu_custom_call.1} parent=0 // loop_footer
    %s17 = sadd.s32 1, %s13
  $region7: #{tpu_custom_call.1} parent=0 // loop_footer_branch
    %12 = sbr.rel target = $region3
  $region8: #{tpu_custom_call.1} parent=0 // loop_exit
    _

</llo_original>
